<compile_context>
chip_gen: v7x
topology: tpu7x:2x2x1
jax: 0.10.0
libtpu: 0.0.40
codegen_flags: <defaults>
</compile_context>

<pallas_src>
import functools

import jax
import jax.numpy as jnp
import numpy as np
from jax.experimental import pallas as pl
from jax.experimental.pallas import tpu as pltpu

_NEG_BIG = -3.0e38  # plain Python float; only used host-side to build the mask


def _round_up(v: int, m: int) -> int:
    return (v + m - 1) // m * m


def _make_fused_kernel(k_max: int, lane_offsets: tuple):
    """Fused conv (all filter sizes) + masked max-over-time + bias + ReLU.

    lane_offsets[i] is the first output-filter lane whose filter size uses
    conv tap i (groups are stacked in ascending-k order, so groups with
    k <= i occupy lanes [0, lane_offsets[i]) and never see tap i)."""

    def kernel(x_ref, w_ref, b_ref, mask_ref, o_ref, acc_ref):
        # x_ref:    (Bt, Lp, E)     bf16  (time zero-padded to Lp)
        # w_ref:    (k_max, E, F3)  bf16  (per-size weights stacked on lanes)
        # b_ref:    (1, F3)         f32
        # mask_ref: (Lp, F3)        f32   additive {0, -BIG} validity mask
        # o_ref:    (Bt, F3)        f32
        # acc_ref:  (Bt*Lp, F3)     f32   VMEM scratch accumulator
        bt, lp, e = x_ref.shape
        f3 = w_ref.shape[2]
        m = bt * lp

        # (Bt, Lp, E) -> (Bt*Lp, E): Lp is a multiple of 16 -> tile-aligned.
        x_flat = x_ref[...].reshape(m, e)

        # Tap 0 is used by every filter size -> initializes (and resets) the
        # whole accumulator each grid step.
        acc_ref[...] = jnp.dot(x_flat, w_ref[0],
                               preferred_element_type=jnp.float32)

        # conv[t, f] = sum_i x[t + i, :] @ W[i, :, f].  For tap i we add the
        # row-shifted partial z_i[t + i] in place, restricted to the lane
        # slice [off:] of the filter sizes that use tap i (no zero-padded MXU
        # work).  The dropped rows t >= Lp - i all satisfy t > L - k for every
        # group with k > i, so they are masked to -BIG before the time-max
        # below (requires Lp >= L, asserted by the wrapper).
        for i in range(1, k_max):          # k_max small & static -> unrolled
            off = lane_offsets[i]
            if off >= f3:                  # no group uses this tap
                continue
            w_i = w_ref[i] if off == 0 else w_ref[i, :, off:]
            zi = jnp.dot(x_flat, w_i, preferred_element_type=jnp.float32)
            if off == 0:
                acc_ref[0:m - i, :] += zi[i:, :]
            else:
                acc_ref[0:m - i, off:] += zi[i:, :]

        # Additive mask (-BIG on t > L - k and on padded rows/lanes), max over
        # time, then bias + ReLU after the max (exact; saves (T-1)*F VPU work).
        vals = acc_ref[...].reshape(bt, lp, f3) + mask_ref[...]
        pooled = jnp.max(vals, axis=1)                       # (Bt, F3)
        o_ref[...] = jnp.maximum(pooled + b_ref[...], 0.0).astype(o_ref.dtype)

    return kernel


def _tpu_defaults():
    """Per-generation (target matmul rows per grid step, min grid tiles)."""
    kind = ""
    try:
        kind = jax.devices()[0].device_kind.lower()
    except Exception:
        pass
    if "v7" in kind:
        # 2 TensorCores/chip: keep grid >= 2 so both cores get work; VMEM is
        # only 64 MiB physical, so stay with moderate tiles + explicit limit.
        return 512, 2
    if "v5" in kind:
        # 128-wide MXU saturates at ~128-256 rows; 16 MiB scoped-VMEM default.
        return 256, 1
    # v6e (and default): bigger tiles amortize the ~0.35 us per-grid-step
    # overhead and the per-tap MXU weight pushes.
    return 768, 1


def _pick_batch_tile(batch: int, lp: int, target_m: int, min_tiles: int) -> int:
    """Divisor of `batch` giving ~target_m matmul rows per grid step, with a
    layout-friendly output block (multiple of 8 sublanes, or the full batch),
    and at least `min_tiles` grid steps when possible (v7x megacore)."""
    want = max(1, target_m // max(lp, 1))
    cands = [d for d in range(1, batch + 1)
             if batch % d == 0 and (d % 8 == 0 or d == batch)]
    with_min = [d for d in cands if batch // d >= min_tiles]
    pool = with_min or cands
    return min(pool, key=lambda d: (abs(d - want), d))


@functools.lru_cache(maxsize=None)
def _build_forward(B, L, E, Lp, Ep, F3, F3p, k_max, lane_offsets, bt):
    kernel = _make_fused_kernel(k_max, lane_offsets)
    grid = (B // bt,)

    # VMEM budget: double-buffered blocks + the f32 scratch accumulator, with
    # headroom; clipped to v7x's 64 MiB physical VMEM.
    need = (2 * (bt * Lp * Ep * 2            # x tile (bf16)
                 + k_max * Ep * F3p * 2      # stacked weights (bf16)
                 + F3p * 4                   # bias
                 + Lp * F3p * 4              # additive mask
                 + bt * F3p * 4)             # output tile
            + bt * Lp * F3p * 4)             # f32 accumulator scratch
    vmem_limit = int(min(max(need + need // 2 + (4 << 20), 32 << 20), 64 << 20))

    call = pl.pallas_call(
        kernel,
        out_shape=jax.ShapeDtypeStruct((B, F3p), jnp.float32),
        grid_spec=pltpu.PrefetchScalarGridSpec(
            num_scalar_prefetch=0,
            grid=grid,
            in_specs=[
                pl.BlockSpec((bt, Lp, Ep), lambda i: (i, 0, 0)),
                # NOTE: weight/bias/mask block indices never change, so Pallas
                # DMAs them only once; on jax versions that accept it,
                # pipeline_mode=pl.Buffered(1) would also reclaim the unused
                # second buffer's VMEM for the ~MB-scale weight block.
                pl.BlockSpec((k_max, Ep, F3p), lambda i: (0, 0, 0)),
                pl.BlockSpec((1, F3p), lambda i: (0, 0)),
                pl.BlockSpec((Lp, F3p), lambda i: (0, 0)),
            ],
            out_specs=pl.BlockSpec((bt, F3p), lambda i: (i, 0)),
            scratch_shapes=[pltpu.VMEM((bt * Lp, F3p), jnp.float32)],
        ),
        compiler_params=pltpu.CompilerParams(
            dimension_semantics=("parallel",),
            vmem_limit_bytes=vmem_limit),
    )

    def fwd(x, w_bf, b2, mask2):
        # Cast + pad of x live under the same jit as the pallas_call, so x is
        # rewritten in HBM exactly once (no extra eager f32->bf16 / pad pass).
        x_bf = x.astype(jnp.bfloat16)
        if Lp != L or Ep != E:
            x_bf = jnp.pad(x_bf, ((0, 0), (0, Lp - L), (0, Ep - E)))
        out = call(x_bf, w_bf, b2, mask2)
        return out[:, :F3] if F3p != F3 else out

    return jax.jit(fwd)


def textcnn_forward(x, filter_sizes, weights, biases, *, batch_tile=None):
    """Fused TextCNN forward.

    x:        (B, L, E) float32
    weights:  list of (k, E, F) float32 per filter size
              (Conv2d weight (F, 1, k, E) transposed to (k, E, F))
    biases:   list of (F,) float32
    returns:  (B, len(filter_sizes) * F) float32
    """
    B, L, E = map(int, x.shape)
    fs = tuple(int(k) for k in filter_sizes)
    F = int(weights[0].shape[2])
    F3 = len(fs) * F
    k_max = max(fs)

    if L < k_max:
        raise ValueError(f"sequence length {L} < largest filter size {k_max}; "
                         "the reference Conv2d would fail here too.")
    if fs != tuple(sorted(fs)):
        # Lane-sliced taps rely on ascending-k stacking of the filter groups.
        raise ValueError("filter_sizes must be sorted ascending")

    # Pad time to a multiple of 16 (bf16 sublane tile) and lanes / contraction
    # to multiples of 128 so output stores stay lane-dense and the MXU K dim
    # is full for non-default configs (no-ops for the default shapes).
    Lp = _round_up(max(L, k_max), 16)
    Ep = _round_up(E, 128)
    F3p = _round_up(F3, 128)
    assert Lp >= L  # shifted-row accumulation invariant (see kernel comment)

    # First lane that uses tap i (groups with k <= i sit below it).
    lane_offsets = tuple(F * sum(1 for k in fs if k <= i) for i in range(k_max))

    # Stack per-size weights along the output-filter (lane) axis and build the
    # additive time-validity mask (0 where t <= L - k, else -BIG; padded rows
    # and padded lanes are always -BIG).
    w_stacked = np.zeros((k_max, Ep, F3p), np.float32)
    b_cat = np.zeros((F3p,), np.float32)
    mask = np.full((Lp, F3p), _NEG_BIG, np.float32)
    for j, (k, w, b) in enumerate(zip(fs, weights, biases)):
        w_np = np.asarray(w, np.float32)
        assert w_np.shape == (k, E, F), (w_np.shape, (k, E, F))
        w_stacked[:k, :E, j * F:(j + 1) * F] = w_np
        b_cat[j * F:(j + 1) * F] = np.asarray(b, np.float32)
        mask[:L - k + 1, j * F:(j + 1) * F] = 0.0

    # bf16 operands, f32 accumulation (MXU-friendly, halves x/W DMA bytes).
    # TODO(synk): in a real model, hoist this parameter packing out of the
    # per-call path (weights are static across calls).
    w_bf = jnp.asarray(w_stacked).astype(jnp.bfloat16)
    b2 = jnp.asarray(b_cat).reshape(1, F3p)
    mask2 = jnp.asarray(mask)

    target_m, min_tiles = _tpu_defaults()
    bt = batch_tile if batch_tile is not None else _pick_batch_tile(
        B, Lp, target_m, min_tiles)
    assert B % bt == 0, (B, bt)

    fwd = _build_forward(B, L, E, Lp, Ep, F3, F3p, k_max, lane_offsets, bt)
    return fwd(x, w_bf, b2, mask2)


def textcnn_forward_ref(x, filter_sizes, weights, biases):
    """Pure-JAX reference mirroring the PyTorch module (bias + relu BEFORE the
    time-max), evaluated on the same bf16-rounded operands the kernel sees.
    NOTE: validates the kernel arithmetic; it does not bound the bf16
    quantization error vs. a pure-f32 PyTorch run."""
    xf = x.astype(jnp.bfloat16).astype(jnp.float32)
    L = x.shape[1]
    outs = []
    for k, w, b in zip(filter_sizes, weights, biases):
        wf = jnp.asarray(w).astype(jnp.bfloat16).astype(jnp.float32)
        T = L - k + 1
        acc = jnp.zeros((x.shape[0], T, w.shape[2]), jnp.float32)
        for i in range(k):
            acc = acc + jnp.einsum("bte,ef->btf", xf[:, i:i + T, :], wf[i])
        acc = jnp.maximum(acc + jnp.asarray(b)[None, None, :], 0.0)
        outs.append(jnp.max(acc, axis=1))
    return jnp.concatenate(outs, axis=1)


if __name__ == "__main__":
    # Small shapes consistent with the module's forward
    # (original config: E=768, F=256, filter_sizes=(2, 3, 4)).
    B, L, E = 16, 16, 128
    NUM_FILTERS = 128
    FILTER_SIZES = (2, 3, 4)

    key = jax.random.PRNGKey(0)
    kx, *kws = jax.random.split(key, 1 + 2 * len(FILTER_SIZES))

    x = jax.random.normal(kx, (B, L, E), dtype=jnp.float32)

    # Conv2d(1, F, (k, E)): weight (F, 1, k, E), bias (F,); stored here already
    # transposed to (k, E, F) for the kernel layout.
    weights, biases = [], []
    for idx, k in enumerate(FILTER_SIZES):
        kw, kb = kws[2 * idx], kws[2 * idx + 1]
        bound = 1.0 / np.sqrt(1 * k * E)
        w_torch = jax.random.uniform(kw, (NUM_FILTERS, 1, k, E),
                                     minval=-bound, maxval=bound,
                                     dtype=jnp.float32)
        b = jax.random.uniform(kb, (NUM_FILTERS,), minval=-bound, maxval=bound,
                               dtype=jnp.float32)
        weights.append(jnp.transpose(w_torch[:, 0, :, :], (1, 2, 0)))  # (k,E,F)
        biases.append(b)

    out = textcnn_forward(x, FILTER_SIZES, weights, biases)
    out = jax.block_until_ready(out)

    ref = textcnn_forward_ref(x, FILTER_SIZES, weights, biases)
    assert out.shape == (B, NUM_FILTERS * len(FILTER_SIZES))
    # bf16 operands / f32 accumulation: loose-but-meaningful tolerance.
    np.testing.assert_allclose(np.asarray(out), np.asarray(ref),
                               rtol=2e-2, atol=2e-2)

    # TODO(synk): dropout / num_classes are attributes of the PyTorch module
    # but are unused in forward(), so they are intentionally not implemented.
    print("KERNEL_OK")
</pallas_src>

<mosaic_0001>
module attributes {stable_mosaic.version = 11 : i64} {
  func.func @kernel(%arg0: i32, %arg1: memref<16x16x128xbf16, #tpu.memory_space<vmem>>, %arg2: memref<4x128x384xbf16, #tpu.memory_space<vmem>>, %arg3: memref<1x384xf32, #tpu.memory_space<vmem>>, %arg4: memref<16x384xf32, #tpu.memory_space<vmem>>, %arg5: memref<16x384xf32, #tpu.memory_space<vmem>>, %arg6: memref<256x384xf32, #tpu.memory_space<vmem>>) attributes {dimension_semantics = [#tpu.dimension_semantics<parallel>], iteration_bounds = array<i64: 1>, scalar_prefetch = 0 : i64, scratch_operands = 1 : i64, tpu.core_type = #tpu.core_type<tc>, window_params = [{transform_indices = @transform_0, window_bounds = array<i64: 16, 16, 128>}, {pipeline_mode = #tpu.pipeline_mode<synchronous>, transform_indices = @transform_1, window_bounds = array<i64: 4, 128, 384>}, {pipeline_mode = #tpu.pipeline_mode<synchronous>, transform_indices = @transform_2, window_bounds = array<i64: 1, 384>}, {pipeline_mode = #tpu.pipeline_mode<synchronous>, transform_indices = @transform_3, window_bounds = array<i64: 16, 384>}, {transform_indices = @transform_4, window_bounds = array<i64: 16, 384>}]} {
    %c0 = arith.constant 0 : index
    %c0_0 = arith.constant 0 : index
    %c0_1 = arith.constant 0 : index
    %0 = vector.load %arg1[%c0, %c0_0, %c0_1] : memref<16x16x128xbf16, #tpu.memory_space<vmem>>, vector<16x16x128xbf16>
    %1 = vector.shape_cast %0 : vector<16x16x128xbf16> to vector<256x128xbf16>
    %c0_2 = arith.constant 0 : index
    %c0_3 = arith.constant 0 : index
    %c0_4 = arith.constant 0 : index
    %2 = vector.load %arg2[%c0_2, %c0_3, %c0_4] : memref<4x128x384xbf16, #tpu.memory_space<vmem>>, vector<1x128x384xbf16>
    %3 = vector.shape_cast %2 : vector<1x128x384xbf16> to vector<128x384xbf16>
    %cst = arith.constant dense<0.000000e+00> : vector<256x384xf32>
    %4 = tpu.matmul %1, %3, %cst {dimension_numbers = #tpu.dot_dimension_numbers<[1], [0], [0], [1], [0, 0, 1, 1], [], []>} : vector<256x128xbf16>, vector<128x384xbf16>, vector<256x384xf32> -> vector<256x384xf32>
    %c0_5 = arith.constant 0 : index
    %c0_6 = arith.constant 0 : index
    %5 = vector.load %arg6[%c0_5, %c0_6] : memref<256x384xf32, #tpu.memory_space<vmem>>, vector<256x384xf32>
    tpu.vector_store %arg6[%c0_5, %c0_6], %4 {strides = array<i32>} : memref<256x384xf32, #tpu.memory_space<vmem>>, vector<256x384xf32>,
    %c1 = arith.constant 1 : index
    %c0_7 = arith.constant 0 : index
    %c0_8 = arith.constant 0 : index
    %6 = vector.load %arg2[%c1, %c0_7, %c0_8] : memref<4x128x384xbf16, #tpu.memory_space<vmem>>, vector<1x128x384xbf16>
    %7 = vector.shape_cast %6 : vector<1x128x384xbf16> to vector<128x384xbf16>
    %cst_9 = arith.constant dense<0.000000e+00> : vector<256x384xf32>
    %8 = tpu.matmul %1, %7, %cst_9 {dimension_numbers = #tpu.dot_dimension_numbers<[1], [0], [0], [1], [0, 0, 1, 1], [], []>} : vector<256x128xbf16>, vector<128x384xbf16>, vector<256x384xf32> -> vector<256x384xf32>
    %c0_10 = arith.constant 0 : index
    %c0_11 = arith.constant 0 : index
    %9 = vector.load %arg6[%c0_10, %c0_11] : memref<256x384xf32, #tpu.memory_space<vmem>>, vector<255x384xf32>
    %10 = vector.extract_strided_slice %8 {offsets = [1, 0], sizes = [255, 384], strides = [1, 1]} : vector<256x384xf32> to vector<255x384xf32>
    %11 = arith.addf %9, %10 : vector<255x384xf32>
    %c0_12 = arith.constant 0 : index
    %c0_13 = arith.constant 0 : index
    %12 = vector.load %arg6[%c0_12, %c0_13] : memref<256x384xf32, #tpu.memory_space<vmem>>, vector<255x384xf32>
    tpu.vector_store %arg6[%c0_12, %c0_13], %11 {strides = array<i32>} : memref<256x384xf32, #tpu.memory_space<vmem>>, vector<255x384xf32>,
    %c2 = arith.constant 2 : index
    %c0_14 = arith.constant 0 : index
    %c128 = arith.constant 128 : index
    %13 = vector.load %arg2[%c2, %c0_14, %c128] : memref<4x128x384xbf16, #tpu.memory_space<vmem>>, vector<1x128x256xbf16>
    %14 = vector.shape_cast %13 : vector<1x128x256xbf16> to vector<128x256xbf16>
    %cst_15 = arith.constant dense<0.000000e+00> : vector<256x256xf32>
    %15 = tpu.matmul %1, %14, %cst_15 {dimension_numbers = #tpu.dot_dimension_numbers<[1], [0], [0], [1], [0, 0, 1, 1], [], []>} : vector<256x128xbf16>, vector<128x256xbf16>, vector<256x256xf32> -> vector<256x256xf32>
    %c0_16 = arith.constant 0 : index
    %c128_17 = arith.constant 128 : index
    %16 = vector.load %arg6[%c0_16, %c128_17] : memref<256x384xf32, #tpu.memory_space<vmem>>, vector<254x256xf32>
    %17 = vector.extract_strided_slice %15 {offsets = [2, 0], sizes = [254, 256], strides = [1, 1]} : vector<256x256xf32> to vector<254x256xf32>
    %18 = arith.addf %16, %17 : vector<254x256xf32>
    %c0_18 = arith.constant 0 : index
    %c128_19 = arith.constant 128 : index
    %19 = vector.load %arg6[%c0_18, %c128_19] : memref<256x384xf32, #tpu.memory_space<vmem>>, vector<254x256xf32>
    tpu.vector_store %arg6[%c0_18, %c128_19], %18 {strides = array<i32>} : memref<256x384xf32, #tpu.memory_space<vmem>>, vector<254x256xf32>,
    %c3 = arith.constant 3 : index
    %c0_20 = arith.constant 0 : index
    %c256 = arith.constant 256 : index
    %20 = vector.load %arg2[%c3, %c0_20, %c256] : memref<4x128x384xbf16, #tpu.memory_space<vmem>>, vector<1x128x128xbf16>
    %21 = vector.shape_cast %20 : vector<1x128x128xbf16> to vector<128x128xbf16>
    %cst_21 = arith.constant dense<0.000000e+00> : vector<256x128xf32>
    %22 = tpu.matmul %1, %21, %cst_21 {dimension_numbers = #tpu.dot_dimension_numbers<[1], [0], [0], [1], [0, 0, 1, 1], [], []>} : vector<256x128xbf16>, vector<128x128xbf16>, vector<256x128xf32> -> vector<256x128xf32>
    %c0_22 = arith.constant 0 : index
    %c256_23 = arith.constant 256 : index
    %23 = vector.load %arg6[%c0_22, %c256_23] : memref<256x384xf32, #tpu.memory_space<vmem>>, vector<253x128xf32>
    %24 = vector.extract_strided_slice %22 {offsets = [3, 0], sizes = [253, 128], strides = [1, 1]} : vector<256x128xf32> to vector<253x128xf32>
    %25 = arith.addf %23, %24 : vector<253x128xf32>
    %c0_24 = arith.constant 0 : index
    %c256_25 = arith.constant 256 : index
    %26 = vector.load %arg6[%c0_24, %c256_25] : memref<256x384xf32, #tpu.memory_space<vmem>>, vector<253x128xf32>
    tpu.vector_store %arg6[%c0_24, %c256_25], %25 {strides = array<i32>} : memref<256x384xf32, #tpu.memory_space<vmem>>, vector<253x128xf32>,
    %c0_26 = arith.constant 0 : index
    %c0_27 = arith.constant 0 : index
    %27 = vector.load %arg6[%c0_26, %c0_27] : memref<256x384xf32, #tpu.memory_space<vmem>>, vector<256x384xf32>
    %28 = vector.shape_cast %27 : vector<256x384xf32> to vector<16x16x384xf32>
    %c0_28 = arith.constant 0 : index
    %c0_29 = arith.constant 0 : index
    %29 = vector.load %arg4[%c0_28, %c0_29] : memref<16x384xf32, #tpu.memory_space<vmem>>, vector<16x384xf32>
    %30 = vector.shape_cast %29 : vector<16x384xf32> to vector<1x16x384xf32>
    %31 = vector.broadcast %30 : vector<1x16x384xf32> to vector<16x16x384xf32>
    %32 = arith.addf %28, %31 : vector<16x16x384xf32>
    %cst_30 = arith.constant dense<0xFF800000> : vector<16x384xf32>
    %33 = vector.multi_reduction <maximumf>, %32, %cst_30 [1] : vector<16x16x384xf32> to vector<16x384xf32>
    %c0_31 = arith.constant 0 : index
    %c0_32 = arith.constant 0 : index
    %34 = vector.load %arg3[%c0_31, %c0_32] : memref<1x384xf32, #tpu.memory_space<vmem>>, vector<1x384xf32>
    %35 = vector.broadcast %34 : vector<1x384xf32> to vector<16x384xf32>
    %36 = arith.addf %33, %35 : vector<16x384xf32>
    %cst_33 = arith.constant 0.000000e+00 : f32
    %37 = vector.broadcast %cst_33 : f32 to vector<16x384xf32>
    %38 = arith.maximumf %36, %37 : vector<16x384xf32>
    %c0_34 = arith.constant 0 : index
    %c0_35 = arith.constant 0 : index
    %39 = vector.load %arg5[%c0_34, %c0_35] : memref<16x384xf32, #tpu.memory_space<vmem>>, vector<16x384xf32>
    tpu.vector_store %arg5[%c0_34, %c0_35], %38 {strides = array<i32>} : memref<16x384xf32, #tpu.memory_space<vmem>>, vector<16x384xf32>,
    return
  }
  func.func @transform_0(%arg0: i32) -> (i32, i32, i32) {
    %c0_i32 = arith.constant 0 : i32
    %c0_i32_0 = arith.constant 0 : i32
    %c0_i32_1 = arith.constant 0 : i32
    return %arg0, %c0_i32, %c0_i32_0 : i32, i32, i32
  }
  func.func @transform_1(%arg0: i32) -> (i32, i32, i32) {
    %c0_i32 = arith.constant 0 : i32
    %c0_i32_0 = arith.constant 0 : i32
    %c0_i32_1 = arith.constant 0 : i32
    %c0_i32_2 = arith.constant 0 : i32
    return %c0_i32, %c0_i32_0, %c0_i32_1 : i32, i32, i32
  }
  func.func @transform_2(%arg0: i32) -> (i32, i32) {
    %c0_i32 = arith.constant 0 : i32
    %c0_i32_0 = arith.constant 0 : i32
    %c0_i32_1 = arith.constant 0 : i32
    return %c0_i32, %c0_i32_0 : i32, i32
  }
  func.func @transform_3(%arg0: i32) -> (i32, i32) {
    %c0_i32 = arith.constant 0 : i32
    %c0_i32_0 = arith.constant 0 : i32
    %c0_i32_1 = arith.constant 0 : i32
    return %c0_i32, %c0_i32_0 : i32, i32
  }
  func.func @transform_4(%arg0: i32) -> (i32, i32) {
    %c0_i32 = arith.constant 0 : i32
    %c0_i32_0 = arith.constant 0 : i32
    return %arg0, %c0_i32 : i32, i32
  }
}

</mosaic_0001>

<llo_original>
// kernel: fwd.1
$region0: #{fwd.1}
  #allocation0 [shape = 'u32[]', space=smem, size = 0x4, offset = 0x4, fixed_abs, tag = 'smem constant byte address 0x4 - core index']
  #allocation1 [shape = 'u32[144,128]{1,0:T(1,128)}', space=vmem, size = 0x12000, scoped, tag = 'internal scratch']
  #allocation2 [shape = 'f32[256,384]{1,0:T(8,128)}', space=vmem, size = 0x60000, scoped, tag = 'scratch operand']
  %s0 = inlined_call_operand.vmem [shape: bf16[16,16,128], index: 0, kind: input, shape index: {}]
  %s1 = inlined_call_operand.hbm [shape: bf16[4,128,384], index: 1, kind: input, shape index: {}]
  %s2 = inlined_call_operand.vmem [shape: f32[1,384], index: 2, kind: input, shape index: {}]
  %s3 = inlined_call_operand.vmem [shape: f32[16,384], index: 3, kind: input, shape index: {}]
  %s4 = inlined_call_operand.hbm [shape: f32[16,384], index: 4, kind: output, shape index: {}]
  %s5 = sld [smem:[#allocation0]]
  $region30: #{fwd.1} parent=0
    _
  %s7 = ssub.s32 1, %s5
  %s8 = scalar_select 0, %s7, %s5
  $region1: #{fwd.1} parent=0
    #allocation3 [shape = 'u8[393216]{0}', space=vmem, size = 0x60000, scoped, tag = 'input window, operand 1, single buffered']
    #allocation4 [shape = 's32[1]{0}', space=sflag, size = 0x4, scoped, tag = 'scoped memory for fwd.1']
    #allocation5 [shape = 's32[1]{0}', space=sflag, size = 0x4, scoped, tag = 'scoped memory for fwd.1']
    #allocation6 [shape = 'u8[24576]{0}', space=vmem, size = 0x6000, scoped, tag = 'output window, operand 0, single buffered']
    %9 = vsyncpa [#allocation4], 0
    %10 = vsyncpa [#allocation5], 0
    // Predicated region
    $region2: #{fwd.1} parent=1 // pred_check
      _
    $region3: #{fwd.1} parent=1 // pred_check_branch
      %12 = sbr.rel (0) target = $region5
    $region4: #{fwd.1} parent=1 // pred_region
      _
    $region5: #{fwd.1} parent=1 // pred_fallthru
      _
    // Predicated region
    $region6: #{fwd.1} parent=1 // pred_check
      _
    $region7: #{fwd.1} parent=1 // pred_check_branch
      %14 = sbr.rel (0) target = $region9
    $region8: #{fwd.1} parent=1 // pred_region
      %s16 = ssub.s32 12288, 12288
      %17 = vsyncadd [#allocation4], %s16
      %s18 = sshll.u32 [#allocation3], 4
      %s19 = int_to_ptr.vmem [resolvable:$true] %s18
      %24 = dma.hbm_to_vmem [thread:$0]  %s1, 12288, %s19, [#allocation4], 192, 192, 12
    $region9: #{fwd.1} parent=1 // pred_fallthru
      _
    // Predicated region
    $region10: #{fwd.1} parent=1 // pred_check
      _
    $region11: #{fwd.1} parent=1 // pred_check_branch
      %26 = sbr.rel (0) target = $region13
    $region12: #{fwd.1} parent=1 // pred_region
      _
    $region13: #{fwd.1} parent=1 // pred_fallthru
      _
    // Predicated region
    $region14: #{fwd.1} parent=1 // pred_check
      _
    $region15: #{fwd.1} parent=1 // pred_check_branch
      %28 = sbr.rel (0) target = $region17
    $region16: #{fwd.1} parent=1 // pred_region
      _
    $region17: #{fwd.1} parent=1 // pred_fallthru
      _
    // Predicated region
    $region18: #{fwd.1} parent=1 // pred_check
      _
    $region19: #{fwd.1} parent=1 // pred_check_branch
      %30 = sbr.rel (0) target = $region21
    $region20: #{fwd.1} parent=1 // pred_region
      %31 = dma.done [#allocation4], 12288
    $region21: #{fwd.1} parent=1 // pred_fallthru
      _
    %v33 = vld [vmem:[%s0] sm:$0xf]
    %v34 = vld [vmem:[%s0 + $0x4] sm:$0xf]
    %v35 = vld [vmem:[%s0 + $0x8] sm:$0xf]
    %v36 = vld [vmem:[%s0 + $0xc] sm:$0xf]
    %v37 = vld [vmem:[%s0 + $0x10] sm:$0xf]
    %v38 = vld [vmem:[%s0 + $0x14] sm:$0xf]
    %v39 = vld [vmem:[%s0 + $0x18] sm:$0xf]
    %v40 = vld [vmem:[%s0 + $0x1c] sm:$0xf]
    %v41 = vld [vmem:[%s0 + $0x20] sm:$0xf]
    %v42 = vld [vmem:[%s0 + $0x24] sm:$0xf]
    %v43 = vld [vmem:[%s0 + $0x28] sm:$0xf]
    %v44 = vld [vmem:[%s0 + $0x2c] sm:$0xf]
    %v45 = vld [vmem:[%s0 + $0x30] sm:$0xf]
    %v46 = vld [vmem:[%s0 + $0x34] sm:$0xf]
    %v47 = vld [vmem:[%s0 + $0x38] sm:$0xf]
    %v48 = vld [vmem:[%s0 + $0x3c] sm:$0xf]
    %v49 = vld [vmem:[%s0 + $0x40] sm:$0xf]
    %v50 = vld [vmem:[%s0 + $0x44] sm:$0xf]
    %v51 = vld [vmem:[%s0 + $0x48] sm:$0xf]
    %v52 = vld [vmem:[%s0 + $0x4c] sm:$0xf]
    %v53 = vld [vmem:[%s0 + $0x50] sm:$0xf]
    %v54 = vld [vmem:[%s0 + $0x54] sm:$0xf]
    %v55 = vld [vmem:[%s0 + $0x58] sm:$0xf]
    %v56 = vld [vmem:[%s0 + $0x5c] sm:$0xf]
    %v57 = vld [vmem:[%s0 + $0x60] sm:$0xf]
    %v58 = vld [vmem:[%s0 + $0x64] sm:$0xf]
    %v59 = vld [vmem:[%s0 + $0x68] sm:$0xf]
    %v60 = vld [vmem:[%s0 + $0x6c] sm:$0xf]
    %v61 = vld [vmem:[%s0 + $0x70] sm:$0xf]
    %v62 = vld [vmem:[%s0 + $0x74] sm:$0xf]
    %v63 = vld [vmem:[%s0 + $0x78] sm:$0xf]
    %v64 = vld [vmem:[%s0 + $0x7c] sm:$0xf]
    %v65 = vld [vmem:[#allocation3] sm:$0xff]
    %v66 = vld [vmem:[#allocation3 + $0x8] sm:$0xf]
    %v67 = vld [vmem:[#allocation3 + $0xc] sm:$0xff]
    %v68 = vld [vmem:[#allocation3 + $0x14] sm:$0xf]
    %v69 = vld [vmem:[#allocation3 + $0x18] sm:$0xff]
    %v70 = vld [vmem:[#allocation3 + $0x20] sm:$0xf]
    %v71 = vld [vmem:[#allocation3 + $0x24] sm:$0xff]
    %v72 = vld [vmem:[#allocation3 + $0x2c] sm:$0xf]
    %v73 = vld [vmem:[#allocation3 + $0x30] sm:$0xff]
    %v74 = vld [vmem:[#allocation3 + $0x38] sm:$0xf]
    %v75 = vld [vmem:[#allocation3 + $0x3c] sm:$0xff]
    %v76 = vld [vmem:[#allocation3 + $0x44] sm:$0xf]
    %v77 = vld [vmem:[#allocation3 + $0x48] sm:$0xff]
    %v78 = vld [vmem:[#allocation3 + $0x50] sm:$0xf]
    %v79 = vld [vmem:[#allocation3 + $0x54] sm:$0xff]
    %v80 = vld [vmem:[#allocation3 + $0x5c] sm:$0xf]
    %v81 = vld [vmem:[#allocation3 + $0x60] sm:$0xff]
    %v82 = vld [vmem:[#allocation3 + $0x68] sm:$0xf]
    %v83 = vld [vmem:[#allocation3 + $0x6c] sm:$0xff]
    %v84 = vld [vmem:[#allocation3 + $0x74] sm:$0xf]
    %v85 = vld [vmem:[#allocation3 + $0x78] sm:$0xff]
    %v86 = vld [vmem:[#allocation3 + $0x80] sm:$0xf]
    %v87 = vld [vmem:[#allocation3 + $0x84] sm:$0xff]
    %v88 = vld [vmem:[#allocation3 + $0x8c] sm:$0xf]
    %v89 = vld [vmem:[#allocation3 + $0x90] sm:$0xff]
    %v90 = vld [vmem:[#allocation3 + $0x98] sm:$0xf]
    %v91 = vld [vmem:[#allocation3 + $0x9c] sm:$0xff]
    %v92 = vld [vmem:[#allocation3 + $0xa4] sm:$0xf]
    %v93 = vld [vmem:[#allocation3 + $0xa8] sm:$0xff]
    %v94 = vld [vmem:[#allocation3 + $0xb0] sm:$0xf]
    %v95 = vld [vmem:[#allocation3 + $0xb4] sm:$0xff]
    %v96 = vld [vmem:[#allocation3 + $0xbc] sm:$0xf]
    %v129 = vunpack.c.l.b16 %v33
    %v130 = vunpack.c.l.b16 %v34
    %v131 = vunpack.c.l.b16 %v35
    %v132 = vunpack.c.l.b16 %v36
    %v133 = vunpack.c.l.b16 %v37
    %v134 = vunpack.c.l.b16 %v38
    %v135 = vunpack.c.l.b16 %v39
    %v136 = vunpack.c.l.b16 %v40
    %v137 = vunpack.c.l.b16 %v41
    %v138 = vunpack.c.l.b16 %v42
    %v139 = vunpack.c.l.b16 %v43
    %v140 = vunpack.c.l.b16 %v44
    %v141 = vunpack.c.l.b16 %v45
    %v142 = vunpack.c.l.b16 %v46
    %v143 = vunpack.c.l.b16 %v47
    %v144 = vunpack.c.l.b16 %v48
    %v145 = vunpack.c.l.b16 %v49
    %v146 = vunpack.c.l.b16 %v50
    %v147 = vunpack.c.l.b16 %v51
    %v148 = vunpack.c.l.b16 %v52
    %v149 = vunpack.c.l.b16 %v53
    %v150 = vunpack.c.l.b16 %v54
    %v151 = vunpack.c.l.b16 %v55
    %v152 = vunpack.c.l.b16 %v56
    %v153 = vunpack.c.l.b16 %v57
    %v154 = vunpack.c.l.b16 %v58
    %v155 = vunpack.c.l.b16 %v59
    %v156 = vunpack.c.l.b16 %v60
    %v157 = vunpack.c.l.b16 %v61
    %v158 = vunpack.c.l.b16 %v62
    %v159 = vunpack.c.l.b16 %v63
    %v160 = vunpack.c.l.b16 %v64
    %v161 = vpack.c.b16 %v130, %v129
    %v162 = vpack.c.b16 %v132, %v131
    %v163 = vpack.c.b16 %v134, %v133
    %v164 = vpack.c.b16 %v136, %v135
    %v165 = vpack.c.b16 %v138, %v137
    %v166 = vpack.c.b16 %v140, %v139
    %v167 = vpack.c.b16 %v142, %v141
    %v168 = vpack.c.b16 %v144, %v143
    %v169 = vpack.c.b16 %v146, %v145
    %v170 = vpack.c.b16 %v148, %v147
    %v171 = vpack.c.b16 %v150, %v149
    %v172 = vpack.c.b16 %v152, %v151
    %v173 = vpack.c.b16 %v154, %v153
    %v174 = vpack.c.b16 %v156, %v155
    %v175 = vpack.c.b16 %v158, %v157
    %v176 = vpack.c.b16 %v160, %v159
    %v225 = vunpack.c.l.b16 %v65
    %v226 = vunpack.c.h.b16 %v65
    %v227 = vunpack.c.l.b16 %v66
    %v228 = vunpack.c.l.b16 %v67
    %v229 = vunpack.c.h.b16 %v67
    %v230 = vunpack.c.l.b16 %v68
    %v231 = vunpack.c.l.b16 %v69
    %v232 = vunpack.c.h.b16 %v69
    %v233 = vunpack.c.l.b16 %v70
    %v234 = vunpack.c.l.b16 %v71
    %v235 = vunpack.c.h.b16 %v71
    %v236 = vunpack.c.l.b16 %v72
    %v237 = vunpack.c.l.b16 %v73
    %v238 = vunpack.c.h.b16 %v73
    %v239 = vunpack.c.l.b16 %v74
    %v240 = vunpack.c.l.b16 %v75
    %v241 = vunpack.c.h.b16 %v75
    %v242 = vunpack.c.l.b16 %v76
    %v243 = vunpack.c.l.b16 %v77
    %v244 = vunpack.c.h.b16 %v77
    %v245 = vunpack.c.l.b16 %v78
    %v246 = vunpack.c.l.b16 %v79
    %v247 = vunpack.c.h.b16 %v79
    %v248 = vunpack.c.l.b16 %v80
    %v249 = vunpack.c.l.b16 %v81
    %v250 = vunpack.c.h.b16 %v81
    %v251 = vunpack.c.l.b16 %v82
    %v252 = vunpack.c.l.b16 %v83
    %v253 = vunpack.c.h.b16 %v83
    %v254 = vunpack.c.l.b16 %v84
    %v255 = vunpack.c.l.b16 %v85
    %v256 = vunpack.c.h.b16 %v85
    %v257 = vunpack.c.l.b16 %v86
    %v258 = vunpack.c.l.b16 %v87
    %v259 = vunpack.c.h.b16 %v87
    %v260 = vunpack.c.l.b16 %v88
    %v261 = vunpack.c.l.b16 %v89
    %v262 = vunpack.c.h.b16 %v89
    %v263 = vunpack.c.l.b16 %v90
    %v264 = vunpack.c.l.b16 %v91
    %v265 = vunpack.c.h.b16 %v91
    %v266 = vunpack.c.l.b16 %v92
    %v267 = vunpack.c.l.b16 %v93
    %v268 = vunpack.c.h.b16 %v93
    %v269 = vunpack.c.l.b16 %v94
    %v270 = vunpack.c.l.b16 %v95
    %v271 = vunpack.c.h.b16 %v95
    %v272 = vunpack.c.l.b16 %v96
    %v273 = vpack.c.b16 %v228, %v225
    %v274 = vpack.c.b16 %v229, %v226
    %v275 = vpack.c.b16 %v230, %v227
    %v276 = vpack.c.b16 %v234, %v231
    %v277 = vpack.c.b16 %v235, %v232
    %v278 = vpack.c.b16 %v236, %v233
    %v279 = vpack.c.b16 %v240, %v237
    %v280 = vpack.c.b16 %v241, %v238
    %v281 = vpack.c.b16 %v242, %v239
    %v282 = vpack.c.b16 %v246, %v243
    %v283 = vpack.c.b16 %v247, %v244
    %v284 = vpack.c.b16 %v248, %v245
    %v285 = vpack.c.b16 %v252, %v249
    %v286 = vpack.c.b16 %v253, %v250
    %v287 = vpack.c.b16 %v254, %v251
    %v288 = vpack.c.b16 %v258, %v255
    %v289 = vpack.c.b16 %v259, %v256
    %v290 = vpack.c.b16 %v260, %v257
    %v291 = vpack.c.b16 %v264, %v261
    %v292 = vpack.c.b16 %v265, %v262
    %v293 = vpack.c.b16 %v266, %v263
    %v294 = vpack.c.b16 %v270, %v267
    %v295 = vpack.c.b16 %v271, %v268
    %v296 = vpack.c.b16 %v272, %v269
    %321 = vmatprep.subr.bf16.mxu0 %v274
    %322 = vmatpush1.bf16.msra.mxu0 %v273
    %323 = vmatprep.subr.bf16.mxu0 %v277
    %324 = vmatpush1.bf16.msra.mxu0 %v276
    %325 = vmatprep.subr.bf16.mxu0 %v280
    %326 = vmatpush1.bf16.msra.mxu0 %v279
    %327 = vmatprep.subr.bf16.mxu0 %v283
    %328 = vmatpush1.bf16.msra.mxu0 %v282
    %329 = vmatprep.subr.bf16.mxu0 %v286
    %330 = vmatpush1.bf16.msra.mxu0 %v285
    %331 = vmatprep.subr.bf16.mxu0 %v289
    %332 = vmatpush1.bf16.msra.mxu0 %v288
    %333 = vmatprep.subr.bf16.mxu0 %v292
    %334 = vmatpush1.bf16.msra.mxu0 %v291
    %335 = vmatprep.subr.bf16.mxu0 %v295
    %336 = vmatpush1.bf16.msra.mxu0 %v294
    %337 = vmatprep.subr.bf16.mxu0 0
    %338 = vmatpush1.bf16.msra.mxu0 0
    %339 = vmatprep.subr.bf16.mxu0 0
    %340 = vmatpush1.bf16.msra.mxu0 0
    %341 = vmatprep.subr.bf16.mxu0 0
    %342 = vmatpush1.bf16.msra.mxu0 0
    %343 = vmatprep.subr.bf16.mxu0 0
    %344 = vmatpush1.bf16.msra.mxu0 0
    %345 = vmatprep.subr.bf16.mxu0 0
    %346 = vmatpush1.bf16.msra.mxu0 0
    %347 = vmatprep.subr.bf16.mxu0 0
    %348 = vmatpush1.bf16.msra.mxu0 0
    %349 = vmatprep.subr.bf16.mxu0 0
    %350 = vmatpush1.bf16.msra.mxu0 0
    %351 = vmatprep.subr.bf16.mxu0 0
    %352 = vmatpush1.bf16.msra.mxu0 0
    %353 = vmatprep.mubr.bf16.mxu0 0
    %354 = vmatmul.mubr.bf16.gmra.mrb[0].mxu0 %v161
    %v355 = vpop.f32.mrb[0].mxu0
    %v356 = vadd.f32 0.0, %v355
    %v357 = vpop.f32.mrb[0].mxu0
    %v358 = vadd.f32 0.0, %v357
    %v359 = vpop.f32.mrb[0].mxu0
    %v360 = vadd.f32 0.0, %v359
    %v361 = vpop.f32.mrb[0].mxu0
    %v362 = vadd.f32 0.0, %v361
    %363 = vmatprep.mubr.bf16.mxu0 0
    %364 = vmatmul.mubr.bf16.gmra.mrb[0].mxu0 %v162
    %v365 = vpop.f32.mrb[0].mxu0
    %v366 = vadd.f32 0.0, %v365
    %v367 = vpop.f32.mrb[0].mxu0
    %v368 = vadd.f32 0.0, %v367
    %v369 = vpop.f32.mrb[0].mxu0
    %v370 = vadd.f32 0.0, %v369
    %v371 = vpop.f32.mrb[0].mxu0
    %v372 = vadd.f32 0.0, %v371
    %373 = vmatprep.mubr.bf16.mxu0 0
    %374 = vmatmul.mubr.bf16.gmra.mrb[0].mxu0 %v163
    %v375 = vpop.f32.mrb[0].mxu0
    %v376 = vadd.f32 0.0, %v375
    %v377 = vpop.f32.mrb[0].mxu0
    %v378 = vadd.f32 0.0, %v377
    %v379 = vpop.f32.mrb[0].mxu0
    %v380 = vadd.f32 0.0, %v379
    %v381 = vpop.f32.mrb[0].mxu0
    %v382 = vadd.f32 0.0, %v381
    %383 = vmatprep.mubr.bf16.mxu0 0
    %384 = vmatmul.mubr.bf16.gmra.mrb[0].mxu0 %v164
    %v385 = vpop.f32.mrb[0].mxu0
    %v386 = vadd.f32 0.0, %v385
    %v387 = vpop.f32.mrb[0].mxu0
    %v388 = vadd.f32 0.0, %v387
    %v389 = vpop.f32.mrb[0].mxu0
    %v390 = vadd.f32 0.0, %v389
    %v391 = vpop.f32.mrb[0].mxu0
    %v392 = vadd.f32 0.0, %v391
    %393 = vmatprep.mubr.bf16.mxu0 0
    %394 = vmatmul.mubr.bf16.gmra.mrb[0].mxu0 %v165
    %v395 = vpop.f32.mrb[0].mxu0
    %v396 = vadd.f32 0.0, %v395
    %v397 = vpop.f32.mrb[0].mxu0
    %v398 = vadd.f32 0.0, %v397
    %v399 = vpop.f32.mrb[0].mxu0
    %v400 = vadd.f32 0.0, %v399
    %v401 = vpop.f32.mrb[0].mxu0
    %v402 = vadd.f32 0.0, %v401
    %403 = vmatprep.mubr.bf16.mxu0 0
    %404 = vmatmul.mubr.bf16.gmra.mrb[0].mxu0 %v166
    %v405 = vpop.f32.mrb[0].mxu0
    %v406 = vadd.f32 0.0, %v405
    %v407 = vpop.f32.mrb[0].mxu0
    %v408 = vadd.f32 0.0, %v407
    %v409 = vpop.f32.mrb[0].mxu0
    %v410 = vadd.f32 0.0, %v409
    %v411 = vpop.f32.mrb[0].mxu0
    %v412 = vadd.f32 0.0, %v411
    %413 = vmatprep.mubr.bf16.mxu0 0
    %414 = vmatmul.mubr.bf16.gmra.mrb[0].mxu0 %v167
    %v415 = vpop.f32.mrb[0].mxu0
    %v416 = vadd.f32 0.0, %v415
    %v417 = vpop.f32.mrb[0].mxu0
    %v418 = vadd.f32 0.0, %v417
    %v419 = vpop.f32.mrb[0].mxu0
    %v420 = vadd.f32 0.0, %v419
    %v421 = vpop.f32.mrb[0].mxu0
    %v422 = vadd.f32 0.0, %v421
    %423 = vmatprep.mubr.bf16.mxu0 0
    %424 = vmatmul.mubr.bf16.gmra.mrb[0].mxu0 %v168
    %v425 = vpop.f32.mrb[0].mxu0
    %v426 = vadd.f32 0.0, %v425
    %v427 = vpop.f32.mrb[0].mxu0
    %v428 = vadd.f32 0.0, %v427
    %v429 = vpop.f32.mrb[0].mxu0
    %v430 = vadd.f32 0.0, %v429
    %v431 = vpop.f32.mrb[0].mxu0
    %v432 = vadd.f32 0.0, %v431
    %433 = vmatprep.mubr.bf16.mxu0 0
    %434 = vmatmul.mubr.bf16.gmra.mrb[0].mxu0 %v169
    %v435 = vpop.f32.mrb[0].mxu0
    %v436 = vadd.f32 0.0, %v435
    %v437 = vpop.f32.mrb[0].mxu0
    %v438 = vadd.f32 0.0, %v437
    %v439 = vpop.f32.mrb[0].mxu0
    %v440 = vadd.f32 0.0, %v439
    %v441 = vpop.f32.mrb[0].mxu0
    %v442 = vadd.f32 0.0, %v441
    %443 = vmatprep.mubr.bf16.mxu0 0
    %444 = vmatmul.mubr.bf16.gmra.mrb[0].mxu0 %v170
    %v445 = vpop.f32.mrb[0].mxu0
    %v446 = vadd.f32 0.0, %v445
    %v447 = vpop.f32.mrb[0].mxu0
    %v448 = vadd.f32 0.0, %v447
    %v449 = vpop.f32.mrb[0].mxu0
    %v450 = vadd.f32 0.0, %v449
    %v451 = vpop.f32.mrb[0].mxu0
    %v452 = vadd.f32 0.0, %v451
    %453 = vmatprep.mubr.bf16.mxu0 0
    %454 = vmatmul.mubr.bf16.gmra.mrb[0].mxu0 %v171
    %v455 = vpop.f32.mrb[0].mxu0
    %v456 = vadd.f32 0.0, %v455
    %v457 = vpop.f32.mrb[0].mxu0
    %v458 = vadd.f32 0.0, %v457
    %v459 = vpop.f32.mrb[0].mxu0
    %v460 = vadd.f32 0.0, %v459
    %v461 = vpop.f32.mrb[0].mxu0
    %v462 = vadd.f32 0.0, %v461
    %463 = vmatprep.mubr.bf16.mxu0 0
    %464 = vmatmul.mubr.bf16.gmra.mrb[0].mxu0 %v172
    %v465 = vpop.f32.mrb[0].mxu0
    %v466 = vadd.f32 0.0, %v465
    %v467 = vpop.f32.mrb[0].mxu0
    %v468 = vadd.f32 0.0, %v467
    %v469 = vpop.f32.mrb[0].mxu0
    %v470 = vadd.f32 0.0, %v469
    %v471 = vpop.f32.mrb[0].mxu0
    %v472 = vadd.f32 0.0, %v471
    %473 = vmatprep.mubr.bf16.mxu0 0
    %474 = vmatmul.mubr.bf16.gmra.mrb[0].mxu0 %v173
    %v475 = vpop.f32.mrb[0].mxu0
    %v476 = vadd.f32 0.0, %v475
    %v477 = vpop.f32.mrb[0].mxu0
    %v478 = vadd.f32 0.0, %v477
    %v479 = vpop.f32.mrb[0].mxu0
    %v480 = vadd.f32 0.0, %v479
    %v481 = vpop.f32.mrb[0].mxu0
    %v482 = vadd.f32 0.0, %v481
    %483 = vmatprep.mubr.bf16.mxu0 0
    %484 = vmatmul.mubr.bf16.gmra.mrb[0].mxu0 %v174
    %v485 = vpop.f32.mrb[0].mxu0
    %v486 = vadd.f32 0.0, %v485
    %v487 = vpop.f32.mrb[0].mxu0
    %v488 = vadd.f32 0.0, %v487
    %v489 = vpop.f32.mrb[0].mxu0
    %v490 = vadd.f32 0.0, %v489
    %v491 = vpop.f32.mrb[0].mxu0
    %v492 = vadd.f32 0.0, %v491
    %493 = vmatprep.mubr.bf16.mxu0 0
    %494 = vmatmul.mubr.bf16.gmra.mrb[0].mxu0 %v175
    %v495 = vpop.f32.mrb[0].mxu0
    %v496 = vadd.f32 0.0, %v495
    %v497 = vpop.f32.mrb[0].mxu0
    %v498 = vadd.f32 0.0, %v497
    %v499 = vpop.f32.mrb[0].mxu0
    %v500 = vadd.f32 0.0, %v499
    %v501 = vpop.f32.mrb[0].mxu0
    %v502 = vadd.f32 0.0, %v501
    %503 = vmatprep.mubr.bf16.mxu0 0
    %504 = vmatmul.mubr.bf16.gmra.mrb[0].mxu0 %v176
    %v505 = vpop.f32.mrb[0].mxu0
    %v506 = vadd.f32 0.0, %v505
    %v507 = vpop.f32.mrb[0].mxu0
    %v508 = vadd.f32 0.0, %v507
    %v509 = vpop.f32.mrb[0].mxu0
    %v510 = vadd.f32 0.0, %v509
    %v511 = vpop.f32.mrb[0].mxu0
    %v512 = vadd.f32 0.0, %v511
    %513 = vdwg.mxu0
    %514 = vmatprep.subr.bf16.mxu0 0
    %515 = vmatpush1.bf16.msra.mxu0 %v275
    %516 = vmatprep.subr.bf16.mxu0 0
    %517 = vmatpush1.bf16.msra.mxu0 %v278
    %518 = vmatprep.subr.bf16.mxu0 0
    %519 = vmatpush1.bf16.msra.mxu0 %v281
    %520 = vmatprep.subr.bf16.mxu0 0
    %521 = vmatpush1.bf16.msra.mxu0 %v284
    %522 = vmatprep.subr.bf16.mxu0 0
    %523 = vmatpush1.bf16.msra.mxu0 %v287
    %524 = vmatprep.subr.bf16.mxu0 0
    %525 = vmatpush1.bf16.msra.mxu0 %v290
    %526 = vmatprep.subr.bf16.mxu0 0
    %527 = vmatpush1.bf16.msra.mxu0 %v293
    %528 = vmatprep.subr.bf16.mxu0 0
    %529 = vmatpush1.bf16.msra.mxu0 %v296
    %530 = vmatprep.subr.bf16.mxu0 0
    %531 = vmatpush1.bf16.msra.mxu0 0
    %532 = vmatprep.subr.bf16.mxu0 0
    %533 = vmatpush1.bf16.msra.mxu0 0
    %534 = vmatprep.subr.bf16.mxu0 0
    %535 = vmatpush1.bf16.msra.mxu0 0
    %536 = vmatprep.subr.bf16.mxu0 0
    %537 = vmatpush1.bf16.msra.mxu0 0
    %538 = vmatprep.subr.bf16.mxu0 0
    %539 = vmatpush1.bf16.msra.mxu0 0
    %540 = vmatprep.subr.bf16.mxu0 0
    %541 = vmatpush1.bf16.msra.mxu0 0
    %542 = vmatprep.subr.bf16.mxu0 0
    %543 = vmatpush1.bf16.msra.mxu0 0
    %544 = vmatprep.subr.bf16.mxu0 0
    %545 = vmatpush1.bf16.msra.mxu0 0
    %546 = vmatprep.mubr.bf16.mxu0 0
    %547 = vmatmul.mubr.bf16.gmra.mrb[0].mxu0 %v161
    %v548 = vpop.f32.mrb[0].mxu0
    %v549 = vadd.f32 0.0, %v548
    %v550 = vpop.f32.mrb[0].mxu0
    %v551 = vpop.f32.mrb[0].mxu0
    %v552 = vadd.f32 0.0, %v551
    %v553 = vpop.f32.mrb[0].mxu0
    %554 = vmatprep.mubr.bf16.mxu0 0
    %555 = vmatmul.mubr.bf16.gmra.mrb[0].mxu0 %v162
    %v556 = vpop.f32.mrb[0].mxu0
    %v557 = vadd.f32 0.0, %v556
    %v558 = vpop.f32.mrb[0].mxu0
    %v559 = vpop.f32.mrb[0].mxu0
    %v560 = vadd.f32 0.0, %v559
    %v561 = vpop.f32.mrb[0].mxu0
    %562 = vmatprep.mubr.bf16.mxu0 0
    %563 = vmatmul.mubr.bf16.gmra.mrb[0].mxu0 %v163
    %v564 = vpop.f32.mrb[0].mxu0
    %v565 = vadd.f32 0.0, %v564
    %v566 = vpop.f32.mrb[0].mxu0
    %v567 = vpop.f32.mrb[0].mxu0
    %v568 = vadd.f32 0.0, %v567
    %v569 = vpop.f32.mrb[0].mxu0
    %570 = vmatprep.mubr.bf16.mxu0 0
    %571 = vmatmul.mubr.bf16.gmra.mrb[0].mxu0 %v164
    %v572 = vpop.f32.mrb[0].mxu0
    %v573 = vadd.f32 0.0, %v572
    %v574 = vpop.f32.mrb[0].mxu0
    %v575 = vpop.f32.mrb[0].mxu0
    %v576 = vadd.f32 0.0, %v575
    %v577 = vpop.f32.mrb[0].mxu0
    %578 = vmatprep.mubr.bf16.mxu0 0
    %579 = vmatmul.mubr.bf16.gmra.mrb[0].mxu0 %v165
    %v580 = vpop.f32.mrb[0].mxu0
    %v581 = vadd.f32 0.0, %v580
    %v582 = vpop.f32.mrb[0].mxu0
    %v583 = vpop.f32.mrb[0].mxu0
    %v584 = vadd.f32 0.0, %v583
    %v585 = vpop.f32.mrb[0].mxu0
    %586 = vmatprep.mubr.bf16.mxu0 0
    %587 = vmatmul.mubr.bf16.gmra.mrb[0].mxu0 %v166
    %v588 = vpop.f32.mrb[0].mxu0
    %v589 = vadd.f32 0.0, %v588
    %v590 = vpop.f32.mrb[0].mxu0
    %v591 = vpop.f32.mrb[0].mxu0
    %v592 = vadd.f32 0.0, %v591
    %v593 = vpop.f32.mrb[0].mxu0
    %594 = vmatprep.mubr.bf16.mxu0 0
    %595 = vmatmul.mubr.bf16.gmra.mrb[0].mxu0 %v167
    %v596 = vpop.f32.mrb[0].mxu0
    %v597 = vadd.f32 0.0, %v596
    %v598 = vpop.f32.mrb[0].mxu0
    %v599 = vpop.f32.mrb[0].mxu0
    %v600 = vadd.f32 0.0, %v599
    %v601 = vpop.f32.mrb[0].mxu0
    %602 = vmatprep.mubr.bf16.mxu0 0
    %603 = vmatmul.mubr.bf16.gmra.mrb[0].mxu0 %v168
    %v604 = vpop.f32.mrb[0].mxu0
    %v605 = vadd.f32 0.0, %v604
    %v606 = vpop.f32.mrb[0].mxu0
    %v607 = vpop.f32.mrb[0].mxu0
    %v608 = vadd.f32 0.0, %v607
    %v609 = vpop.f32.mrb[0].mxu0
    %610 = vmatprep.mubr.bf16.mxu0 0
    %611 = vmatmul.mubr.bf16.gmra.mrb[0].mxu0 %v169
    %v612 = vpop.f32.mrb[0].mxu0
    %v613 = vadd.f32 0.0, %v612
    %v614 = vpop.f32.mrb[0].mxu0
    %v615 = vpop.f32.mrb[0].mxu0
    %v616 = vadd.f32 0.0, %v615
    %v617 = vpop.f32.mrb[0].mxu0
    %618 = vmatprep.mubr.bf16.mxu0 0
    %619 = vmatmul.mubr.bf16.gmra.mrb[0].mxu0 %v170
    %v620 = vpop.f32.mrb[0].mxu0
    %v621 = vadd.f32 0.0, %v620
    %v622 = vpop.f32.mrb[0].mxu0
    %v623 = vpop.f32.mrb[0].mxu0
    %v624 = vadd.f32 0.0, %v623
    %v625 = vpop.f32.mrb[0].mxu0
    %626 = vmatprep.mubr.bf16.mxu0 0
    %627 = vmatmul.mubr.bf16.gmra.mrb[0].mxu0 %v171
    %v628 = vpop.f32.mrb[0].mxu0
    %v629 = vadd.f32 0.0, %v628
    %v630 = vpop.f32.mrb[0].mxu0
    %v631 = vpop.f32.mrb[0].mxu0
    %v632 = vadd.f32 0.0, %v631
    %v633 = vpop.f32.mrb[0].mxu0
    %634 = vmatprep.mubr.bf16.mxu0 0
    %635 = vmatmul.mubr.bf16.gmra.mrb[0].mxu0 %v172
    %v636 = vpop.f32.mrb[0].mxu0
    %v637 = vadd.f32 0.0, %v636
    %v638 = vpop.f32.mrb[0].mxu0
    %v639 = vpop.f32.mrb[0].mxu0
    %v640 = vadd.f32 0.0, %v639
    %v641 = vpop.f32.mrb[0].mxu0
    %642 = vmatprep.mubr.bf16.mxu0 0
    %643 = vmatmul.mubr.bf16.gmra.mrb[0].mxu0 %v173
    %v644 = vpop.f32.mrb[0].mxu0
    %v645 = vadd.f32 0.0, %v644
    %v646 = vpop.f32.mrb[0].mxu0
    %v647 = vpop.f32.mrb[0].mxu0
    %v648 = vadd.f32 0.0, %v647
    %v649 = vpop.f32.mrb[0].mxu0
    %650 = vmatprep.mubr.bf16.mxu0 0
    %651 = vmatmul.mubr.bf16.gmra.mrb[0].mxu0 %v174
    %v652 = vpop.f32.mrb[0].mxu0
    %v653 = vadd.f32 0.0, %v652
    %v654 = vpop.f32.mrb[0].mxu0
    %v655 = vpop.f32.mrb[0].mxu0
    %v656 = vadd.f32 0.0, %v655
    %v657 = vpop.f32.mrb[0].mxu0
    %658 = vmatprep.mubr.bf16.mxu0 0
    %659 = vmatmul.mubr.bf16.gmra.mrb[0].mxu0 %v175
    %v660 = vpop.f32.mrb[0].mxu0
    %v661 = vadd.f32 0.0, %v660
    %v662 = vpop.f32.mrb[0].mxu0
    %v663 = vpop.f32.mrb[0].mxu0
    %v664 = vadd.f32 0.0, %v663
    %v665 = vpop.f32.mrb[0].mxu0
    %666 = vmatprep.mubr.bf16.mxu0 0
    %667 = vmatmul.mubr.bf16.gmra.mrb[0].mxu0 %v176
    %v668 = vpop.f32.mrb[0].mxu0
    %v669 = vadd.f32 0.0, %v668
    %v670 = vpop.f32.mrb[0].mxu0
    %v671 = vpop.f32.mrb[0].mxu0
    %v672 = vadd.f32 0.0, %v671
    %v673 = vpop.f32.mrb[0].mxu0
    %674 = vdwg.mxu0
    %675 = vst [vmem:[#allocation2] sm:$0xff] %v356
    %676 = vst [vmem:[#allocation2 + $0x8] sm:$0xff] %v358
    %677 = vst [vmem:[#allocation2 + $0x10] sm:$0xff] %v549
    %678 = vst [vmem:[#allocation2 + $0x18] sm:$0xff] %v360
    %679 = vst [vmem:[#allocation2 + $0x20] sm:$0xff] %v362
    %680 = vst [vmem:[#allocation2 + $0x28] sm:$0xff] %v552
    %681 = vst [vmem:[#allocation2 + $0x30] sm:$0xff] %v366
    %682 = vst [vmem:[#allocation2 + $0x38] sm:$0xff] %v368
    %683 = vst [vmem:[#allocation2 + $0x40] sm:$0xff] %v557
    %684 = vst [vmem:[#allocation2 + $0x48] sm:$0xff] %v370
    %685 = vst [vmem:[#allocation2 + $0x50] sm:$0xff] %v372
    %686 = vst [vmem:[#allocation2 + $0x58] sm:$0xff] %v560
    %687 = vst [vmem:[#allocation2 + $0x60] sm:$0xff] %v376
    %688 = vst [vmem:[#allocation2 + $0x68] sm:$0xff] %v378
    %689 = vst [vmem:[#allocation2 + $0x70] sm:$0xff] %v565
    %690 = vst [vmem:[#allocation2 + $0x78] sm:$0xff] %v380
    %691 = vst [vmem:[#allocation2 + $0x80] sm:$0xff] %v382
    %692 = vst [vmem:[#allocation2 + $0x88] sm:$0xff] %v568
    %693 = vst [vmem:[#allocation2 + $0x90] sm:$0xff] %v386
    %694 = vst [vmem:[#allocation2 + $0x98] sm:$0xff] %v388
    %695 = vst [vmem:[#allocation2 + $0xa0] sm:$0xff] %v573
    %696 = vst [vmem:[#allocation2 + $0xa8] sm:$0xff] %v390
    %697 = vst [vmem:[#allocation2 + $0xb0] sm:$0xff] %v392
    %698 = vst [vmem:[#allocation2 + $0xb8] sm:$0xff] %v576
    %699 = vst [vmem:[#allocation2 + $0xc0] sm:$0xff] %v396
    %700 = vst [vmem:[#allocation2 + $0xc8] sm:$0xff] %v398
    %701 = vst [vmem:[#allocation2 + $0xd0] sm:$0xff] %v581
    %702 = vst [vmem:[#allocation2 + $0xd8] sm:$0xff] %v400
    %703 = vst [vmem:[#allocation2 + $0xe0] sm:$0xff] %v402
    %704 = vst [vmem:[#allocation2 + $0xe8] sm:$0xff] %v584
    %705 = vst [vmem:[#allocation2 + $0xf0] sm:$0xff] %v406
    %706 = vst [vmem:[#allocation2 + $0xf8] sm:$0xff] %v408
    %707 = vst [vmem:[#allocation2 + $0x100] sm:$0xff] %v589
    %708 = vst [vmem:[#allocation2 + $0x108] sm:$0xff] %v410
    %709 = vst [vmem:[#allocation2 + $0x110] sm:$0xff] %v412
    %710 = vst [vmem:[#allocation2 + $0x118] sm:$0xff] %v592
    %711 = vst [vmem:[#allocation2 + $0x120] sm:$0xff] %v416
    %712 = vst [vmem:[#allocation2 + $0x128] sm:$0xff] %v418
    %713 = vst [vmem:[#allocation2 + $0x130] sm:$0xff] %v597
    %714 = vst [vmem:[#allocation2 + $0x138] sm:$0xff] %v420
    %715 = vst [vmem:[#allocation2 + $0x140] sm:$0xff] %v422
    %716 = vst [vmem:[#allocation2 + $0x148] sm:$0xff] %v600
    %717 = vst [vmem:[#allocation2 + $0x150] sm:$0xff] %v426
    %718 = vst [vmem:[#allocation2 + $0x158] sm:$0xff] %v428
    %719 = vst [vmem:[#allocation2 + $0x160] sm:$0xff] %v605
    %720 = vst [vmem:[#allocation2 + $0x168] sm:$0xff] %v430
    %721 = vst [vmem:[#allocation2 + $0x170] sm:$0xff] %v432
    %722 = vst [vmem:[#allocation2 + $0x178] sm:$0xff] %v608
    %723 = vst [vmem:[#allocation2 + $0x180] sm:$0xff] %v436
    %724 = vst [vmem:[#allocation2 + $0x188] sm:$0xff] %v438
    %725 = vst [vmem:[#allocation2 + $0x190] sm:$0xff] %v613
    %726 = vst [vmem:[#allocation2 + $0x198] sm:$0xff] %v440
    %727 = vst [vmem:[#allocation2 + $0x1a0] sm:$0xff] %v442
    %728 = vst [vmem:[#allocation2 + $0x1a8] sm:$0xff] %v616
    %729 = vst [vmem:[#allocation2 + $0x1b0] sm:$0xff] %v446
    %730 = vst [vmem:[#allocation2 + $0x1b8] sm:$0xff] %v448
    %731 = vst [vmem:[#allocation2 + $0x1c0] sm:$0xff] %v621
    %732 = vst [vmem:[#allocation2 + $0x1c8] sm:$0xff] %v450
    %733 = vst [vmem:[#allocation2 + $0x1d0] sm:$0xff] %v452
    %734 = vst [vmem:[#allocation2 + $0x1d8] sm:$0xff] %v624
    %735 = vst [vmem:[#allocation2 + $0x1e0] sm:$0xff] %v456
    %736 = vst [vmem:[#allocation2 + $0x1e8] sm:$0xff] %v458
    %737 = vst [vmem:[#allocation2 + $0x1f0] sm:$0xff] %v629
    %738 = vst [vmem:[#allocation2 + $0x1f8] sm:$0xff] %v460
    %739 = vst [vmem:[#allocation2 + $0x200] sm:$0xff] %v462
    %740 = vst [vmem:[#allocation2 + $0x208] sm:$0xff] %v632
    %741 = vst [vmem:[#allocation2 + $0x210] sm:$0xff] %v466
    %742 = vst [vmem:[#allocation2 + $0x218] sm:$0xff] %v468
    %743 = vst [vmem:[#allocation2 + $0x220] sm:$0xff] %v637
    %744 = vst [vmem:[#allocation2 + $0x228] sm:$0xff] %v470
    %745 = vst [vmem:[#allocation2 + $0x230] sm:$0xff] %v472
    %746 = vst [vmem:[#allocation2 + $0x238] sm:$0xff] %v640
    %747 = vst [vmem:[#allocation2 + $0x240] sm:$0xff] %v476
    %748 = vst [vmem:[#allocation2 + $0x248] sm:$0xff] %v478
    %749 = vst [vmem:[#allocation2 + $0x250] sm:$0xff] %v645
    %750 = vst [vmem:[#allocation2 + $0x258] sm:$0xff] %v480
    %751 = vst [vmem:[#allocation2 + $0x260] sm:$0xff] %v482
    %752 = vst [vmem:[#allocation2 + $0x268] sm:$0xff] %v648
    %753 = vst [vmem:[#allocation2 + $0x270] sm:$0xff] %v486
    %754 = vst [vmem:[#allocation2 + $0x278] sm:$0xff] %v488
    %755 = vst [vmem:[#allocation2 + $0x280] sm:$0xff] %v653
    %756 = vst [vmem:[#allocation2 + $0x288] sm:$0xff] %v490
    %757 = vst [vmem:[#allocation2 + $0x290] sm:$0xff] %v492
    %758 = vst [vmem:[#allocation2 + $0x298] sm:$0xff] %v656
    %759 = vst [vmem:[#allocation2 + $0x2a0] sm:$0xff] %v496
    %760 = vst [vmem:[#allocation2 + $0x2a8] sm:$0xff] %v498
    %761 = vst [vmem:[#allocation2 + $0x2b0] sm:$0xff] %v661
    %762 = vst [vmem:[#allocation2 + $0x2b8] sm:$0xff] %v500
    %763 = vst [vmem:[#allocation2 + $0x2c0] sm:$0xff] %v502
    %764 = vst [vmem:[#allocation2 + $0x2c8] sm:$0xff] %v664
    %765 = vst [vmem:[#allocation2 + $0x2d0] sm:$0xff] %v506
    %766 = vst [vmem:[#allocation2 + $0x2d8] sm:$0xff] %v508
    %767 = vst [vmem:[#allocation2 + $0x2e0] sm:$0xff] %v669
    %768 = vst [vmem:[#allocation2 + $0x2e8] sm:$0xff] %v510
    %769 = vst [vmem:[#allocation2 + $0x2f0] sm:$0xff] %v512
    %770 = vst [vmem:[#allocation2 + $0x2f8] sm:$0xff] %v672
    %s771 = scalar_lea.vmem [#allocation3], 192
    %v772 = vld [vmem:[%s771] sm:$0xff]
    %v773 = vld [vmem:[%s771 + $0x8] sm:$0xf]
    %v774 = vld [vmem:[%s771 + $0xc] sm:$0xff]
    %v775 = vld [vmem:[%s771 + $0x14] sm:$0xf]
    %v776 = vld [vmem:[%s771 + $0x18] sm:$0xff]
    %v777 = vld [vmem:[%s771 + $0x20] sm:$0xf]
    %v778 = vld [vmem:[%s771 + $0x24] sm:$0xff]
    %v779 = vld [vmem:[%s771 + $0x2c] sm:$0xf]
    %v780 = vld [vmem:[%s771 + $0x30] sm:$0xff]
    %v781 = vld [vmem:[%s771 + $0x38] sm:$0xf]
    %v782 = vld [vmem:[%s771 + $0x3c] sm:$0xff]
    %v783 = vld [vmem:[%s771 + $0x44] sm:$0xf]
    %v784 = vld [vmem:[%s771 + $0x48] sm:$0xff]
    %v785 = vld [vmem:[%s771 + $0x50] sm:$0xf]
    %v786 = vld [vmem:[%s771 + $0x54] sm:$0xff]
    %v787 = vld [vmem:[%s771 + $0x5c] sm:$0xf]
    %v788 = vld [vmem:[%s771 + $0x60] sm:$0xff]
    %v789 = vld [vmem:[%s771 + $0x68] sm:$0xf]
    %v790 = vld [vmem:[%s771 + $0x6c] sm:$0xff]
    %v791 = vld [vmem:[%s771 + $0x74] sm:$0xf]
    %v792 = vld [vmem:[%s771 + $0x78] sm:$0xff]
    %v793 = vld [vmem:[%s771 + $0x80] sm:$0xf]
    %v794 = vld [vmem:[%s771 + $0x84] sm:$0xff]
    %v795 = vld [vmem:[%s771 + $0x8c] sm:$0xf]
    %v796 = vld [vmem:[%s771 + $0x90] sm:$0xff]
    %v797 = vld [vmem:[%s771 + $0x98] sm:$0xf]
    %v798 = vld [vmem:[%s771 + $0x9c] sm:$0xff]
    %v799 = vld [vmem:[%s771 + $0xa4] sm:$0xf]
    %v800 = vld [vmem:[%s771 + $0xa8] sm:$0xff]
    %v801 = vld [vmem:[%s771 + $0xb0] sm:$0xf]
    %v802 = vld [vmem:[%s771 + $0xb4] sm:$0xff]
    %v803 = vld [vmem:[%s771 + $0xbc] sm:$0xf]
    %v836 = vunpack.c.l.b16 %v772
    %v837 = vunpack.c.h.b16 %v772
    %v838 = vunpack.c.l.b16 %v773
    %v839 = vunpack.c.l.b16 %v774
    %v840 = vunpack.c.h.b16 %v774
    %v841 = vunpack.c.l.b16 %v775
    %v842 = vunpack.c.l.b16 %v776
    %v843 = vunpack.c.h.b16 %v776
    %v844 = vunpack.c.l.b16 %v777
    %v845 = vunpack.c.l.b16 %v778
    %v846 = vunpack.c.h.b16 %v778
    %v847 = vunpack.c.l.b16 %v779
    %v848 = vunpack.c.l.b16 %v780
    %v849 = vunpack.c.h.b16 %v780
    %v850 = vunpack.c.l.b16 %v781
    %v851 = vunpack.c.l.b16 %v782
    %v852 = vunpack.c.h.b16 %v782
    %v853 = vunpack.c.l.b16 %v783
    %v854 = vunpack.c.l.b16 %v784
    %v855 = vunpack.c.h.b16 %v784
    %v856 = vunpack.c.l.b16 %v785
    %v857 = vunpack.c.l.b16 %v786
    %v858 = vunpack.c.h.b16 %v786
    %v859 = vunpack.c.l.b16 %v787
    %v860 = vunpack.c.l.b16 %v788
    %v861 = vunpack.c.h.b16 %v788
    %v862 = vunpack.c.l.b16 %v789
    %v863 = vunpack.c.l.b16 %v790
    %v864 = vunpack.c.h.b16 %v790
    %v865 = vunpack.c.l.b16 %v791
    %v866 = vunpack.c.l.b16 %v792
    %v867 = vunpack.c.h.b16 %v792
    %v868 = vunpack.c.l.b16 %v793
    %v869 = vunpack.c.l.b16 %v794
    %v870 = vunpack.c.h.b16 %v794
    %v871 = vunpack.c.l.b16 %v795
    %v872 = vunpack.c.l.b16 %v796
    %v873 = vunpack.c.h.b16 %v796
    %v874 = vunpack.c.l.b16 %v797
    %v875 = vunpack.c.l.b16 %v798
    %v876 = vunpack.c.h.b16 %v798
    %v877 = vunpack.c.l.b16 %v799
    %v878 = vunpack.c.l.b16 %v800
    %v879 = vunpack.c.h.b16 %v800
    %v880 = vunpack.c.l.b16 %v801
    %v881 = vunpack.c.l.b16 %v802
    %v882 = vunpack.c.h.b16 %v802
    %v883 = vunpack.c.l.b16 %v803
    %v884 = vpack.c.b16 %v839, %v836
    %v885 = vpack.c.b16 %v840, %v837
    %v886 = vpack.c.b16 %v841, %v838
    %v887 = vpack.c.b16 %v845, %v842
    %v888 = vpack.c.b16 %v846, %v843
    %v889 = vpack.c.b16 %v847, %v844
    %v890 = vpack.c.b16 %v851, %v848
    %v891 = vpack.c.b16 %v852, %v849
    %v892 = vpack.c.b16 %v853, %v850
    %v893 = vpack.c.b16 %v857, %v854
    %v894 = vpack.c.b16 %v858, %v855
    %v895 = vpack.c.b16 %v859, %v856
    %v896 = vpack.c.b16 %v863, %v860
    %v897 = vpack.c.b16 %v864, %v861
    %v898 = vpack.c.b16 %v865, %v862
    %v899 = vpack.c.b16 %v869, %v866
    %v900 = vpack.c.b16 %v870, %v867
    %v901 = vpack.c.b16 %v871, %v868
    %v902 = vpack.c.b16 %v875, %v872
    %v903 = vpack.c.b16 %v876, %v873
    %v904 = vpack.c.b16 %v877, %v874
    %v905 = vpack.c.b16 %v881, %v878
    %v906 = vpack.c.b16 %v882, %v879
    %v907 = vpack.c.b16 %v883, %v880
    %932 = vmatprep.subr.bf16.mxu0 %v885
    %933 = vmatpush1.bf16.msra.mxu0 %v884
    %934 = vmatprep.subr.bf16.mxu0 %v888
    %935 = vmatpush1.bf16.msra.mxu0 %v887
    %936 = vmatprep.subr.bf16.mxu0 %v891
    %937 = vmatpush1.bf16.msra.mxu0 %v890
    %938 = vmatprep.subr.bf16.mxu0 %v894
    %939 = vmatpush1.bf16.msra.mxu0 %v893
    %940 = vmatprep.subr.bf16.mxu0 %v897
    %941 = vmatpush1.bf16.msra.mxu0 %v896
    %942 = vmatprep.subr.bf16.mxu0 %v900
    %943 = vmatpush1.bf16.msra.mxu0 %v899
    %944 = vmatprep.subr.bf16.mxu0 %v903
    %945 = vmatpush1.bf16.msra.mxu0 %v902
    %946 = vmatprep.subr.bf16.mxu0 %v906
    %947 = vmatpush1.bf16.msra.mxu0 %v905
    %948 = vmatprep.subr.bf16.mxu0 0
    %949 = vmatpush1.bf16.msra.mxu0 0
    %950 = vmatprep.subr.bf16.mxu0 0
    %951 = vmatpush1.bf16.msra.mxu0 0
    %952 = vmatprep.subr.bf16.mxu0 0
    %953 = vmatpush1.bf16.msra.mxu0 0
    %954 = vmatprep.subr.bf16.mxu0 0
    %955 = vmatpush1.bf16.msra.mxu0 0
    %956 = vmatprep.subr.bf16.mxu0 0
    %957 = vmatpush1.bf16.msra.mxu0 0
    %958 = vmatprep.subr.bf16.mxu0 0
    %959 = vmatpush1.bf16.msra.mxu0 0
    %960 = vmatprep.subr.bf16.mxu0 0
    %961 = vmatpush1.bf16.msra.mxu0 0
    %962 = vmatprep.subr.bf16.mxu0 0
    %963 = vmatpush1.bf16.msra.mxu0 0
    %964 = vmatprep.mubr.bf16.mxu0 0
    %965 = vmatmul.mubr.bf16.gmra.mrb[0].mxu0 %v161
    %v966 = vpop.f32.mrb[0].mxu0
    %v967 = vadd.f32 0.0, %v966
    %v968 = vpop.f32.mrb[0].mxu0
    %v969 = vadd.f32 0.0, %v968
    %v970 = vpop.f32.mrb[0].mxu0
    %v971 = vadd.f32 0.0, %v970
    %v972 = vpop.f32.mrb[0].mxu0
    %v973 = vadd.f32 0.0, %v972
    %974 = vmatprep.mubr.bf16.mxu0 0
    %975 = vmatmul.mubr.bf16.gmra.mrb[0].mxu0 %v162
    %v976 = vpop.f32.mrb[0].mxu0
    %v977 = vadd.f32 0.0, %v976
    %v978 = vpop.f32.mrb[0].mxu0
    %v979 = vadd.f32 0.0, %v978
    %v980 = vpop.f32.mrb[0].mxu0
    %v981 = vadd.f32 0.0, %v980
    %v982 = vpop.f32.mrb[0].mxu0
    %v983 = vadd.f32 0.0, %v982
    %984 = vmatprep.mubr.bf16.mxu0 0
    %985 = vmatmul.mubr.bf16.gmra.mrb[0].mxu0 %v163
    %v986 = vpop.f32.mrb[0].mxu0
    %v987 = vadd.f32 0.0, %v986
    %v988 = vpop.f32.mrb[0].mxu0
    %v989 = vadd.f32 0.0, %v988
    %v990 = vpop.f32.mrb[0].mxu0
    %v991 = vadd.f32 0.0, %v990
    %v992 = vpop.f32.mrb[0].mxu0
    %v993 = vadd.f32 0.0, %v992
    %994 = vmatprep.mubr.bf16.mxu0 0
    %995 = vmatmul.mubr.bf16.gmra.mrb[0].mxu0 %v164
    %v996 = vpop.f32.mrb[0].mxu0
    %v997 = vadd.f32 0.0, %v996
    %v998 = vpop.f32.mrb[0].mxu0
    %v999 = vadd.f32 0.0, %v998
    %v1000 = vpop.f32.mrb[0].mxu0
    %v1001 = vadd.f32 0.0, %v1000
    %v1002 = vpop.f32.mrb[0].mxu0
    %v1003 = vadd.f32 0.0, %v1002
    %1004 = vmatprep.mubr.bf16.mxu0 0
    %1005 = vmatmul.mubr.bf16.gmra.mrb[0].mxu0 %v165
    %v1006 = vpop.f32.mrb[0].mxu0
    %v1007 = vadd.f32 0.0, %v1006
    %v1008 = vpop.f32.mrb[0].mxu0
    %v1009 = vadd.f32 0.0, %v1008
    %v1010 = vpop.f32.mrb[0].mxu0
    %v1011 = vadd.f32 0.0, %v1010
    %v1012 = vpop.f32.mrb[0].mxu0
    %v1013 = vadd.f32 0.0, %v1012
    %1014 = vmatprep.mubr.bf16.mxu0 0
    %1015 = vmatmul.mubr.bf16.gmra.mrb[0].mxu0 %v166
    %v1016 = vpop.f32.mrb[0].mxu0
    %v1017 = vadd.f32 0.0, %v1016
    %v1018 = vpop.f32.mrb[0].mxu0
    %v1019 = vadd.f32 0.0, %v1018
    %v1020 = vpop.f32.mrb[0].mxu0
    %v1021 = vadd.f32 0.0, %v1020
    %v1022 = vpop.f32.mrb[0].mxu0
    %v1023 = vadd.f32 0.0, %v1022
    %1024 = vmatprep.mubr.bf16.mxu0 0
    %1025 = vmatmul.mubr.bf16.gmra.mrb[0].mxu0 %v167
    %v1026 = vpop.f32.mrb[0].mxu0
    %v1027 = vadd.f32 0.0, %v1026
    %v1028 = vpop.f32.mrb[0].mxu0
    %v1029 = vadd.f32 0.0, %v1028
    %v1030 = vpop.f32.mrb[0].mxu0
    %v1031 = vadd.f32 0.0, %v1030
    %v1032 = vpop.f32.mrb[0].mxu0
    %v1033 = vadd.f32 0.0, %v1032
    %1034 = vmatprep.mubr.bf16.mxu0 0
    %1035 = vmatmul.mubr.bf16.gmra.mrb[0].mxu0 %v168
    %v1036 = vpop.f32.mrb[0].mxu0
    %v1037 = vadd.f32 0.0, %v1036
    %v1038 = vpop.f32.mrb[0].mxu0
    %v1039 = vadd.f32 0.0, %v1038
    %v1040 = vpop.f32.mrb[0].mxu0
    %v1041 = vadd.f32 0.0, %v1040
    %v1042 = vpop.f32.mrb[0].mxu0
    %v1043 = vadd.f32 0.0, %v1042
    %1044 = vmatprep.mubr.bf16.mxu0 0
    %1045 = vmatmul.mubr.bf16.gmra.mrb[0].mxu0 %v169
    %v1046 = vpop.f32.mrb[0].mxu0
    %v1047 = vadd.f32 0.0, %v1046
    %v1048 = vpop.f32.mrb[0].mxu0
    %v1049 = vadd.f32 0.0, %v1048
    %v1050 = vpop.f32.mrb[0].mxu0
    %v1051 = vadd.f32 0.0, %v1050
    %v1052 = vpop.f32.mrb[0].mxu0
    %v1053 = vadd.f32 0.0, %v1052
    %1054 = vmatprep.mubr.bf16.mxu0 0
    %1055 = vmatmul.mubr.bf16.gmra.mrb[0].mxu0 %v170
    %v1056 = vpop.f32.mrb[0].mxu0
    %v1057 = vadd.f32 0.0, %v1056
    %v1058 = vpop.f32.mrb[0].mxu0
    %v1059 = vadd.f32 0.0, %v1058
    %v1060 = vpop.f32.mrb[0].mxu0
    %v1061 = vadd.f32 0.0, %v1060
    %v1062 = vpop.f32.mrb[0].mxu0
    %v1063 = vadd.f32 0.0, %v1062
    %1064 = vmatprep.mubr.bf16.mxu0 0
    %1065 = vmatmul.mubr.bf16.gmra.mrb[0].mxu0 %v171
    %v1066 = vpop.f32.mrb[0].mxu0
    %v1067 = vadd.f32 0.0, %v1066
    %v1068 = vpop.f32.mrb[0].mxu0
    %v1069 = vadd.f32 0.0, %v1068
    %v1070 = vpop.f32.mrb[0].mxu0
    %v1071 = vadd.f32 0.0, %v1070
    %v1072 = vpop.f32.mrb[0].mxu0
    %v1073 = vadd.f32 0.0, %v1072
    %1074 = vmatprep.mubr.bf16.mxu0 0
    %1075 = vmatmul.mubr.bf16.gmra.mrb[0].mxu0 %v172
    %v1076 = vpop.f32.mrb[0].mxu0
    %v1077 = vadd.f32 0.0, %v1076
    %v1078 = vpop.f32.mrb[0].mxu0
    %v1079 = vadd.f32 0.0, %v1078
    %v1080 = vpop.f32.mrb[0].mxu0
    %v1081 = vadd.f32 0.0, %v1080
    %v1082 = vpop.f32.mrb[0].mxu0
    %v1083 = vadd.f32 0.0, %v1082
    %1084 = vmatprep.mubr.bf16.mxu0 0
    %1085 = vmatmul.mubr.bf16.gmra.mrb[0].mxu0 %v173
    %v1086 = vpop.f32.mrb[0].mxu0
    %v1087 = vadd.f32 0.0, %v1086
    %v1088 = vpop.f32.mrb[0].mxu0
    %v1089 = vadd.f32 0.0, %v1088
    %v1090 = vpop.f32.mrb[0].mxu0
    %v1091 = vadd.f32 0.0, %v1090
    %v1092 = vpop.f32.mrb[0].mxu0
    %v1093 = vadd.f32 0.0, %v1092
    %1094 = vmatprep.mubr.bf16.mxu0 0
    %1095 = vmatmul.mubr.bf16.gmra.mrb[0].mxu0 %v174
    %v1096 = vpop.f32.mrb[0].mxu0
    %v1097 = vadd.f32 0.0, %v1096
    %v1098 = vpop.f32.mrb[0].mxu0
    %v1099 = vadd.f32 0.0, %v1098
    %v1100 = vpop.f32.mrb[0].mxu0
    %v1101 = vadd.f32 0.0, %v1100
    %v1102 = vpop.f32.mrb[0].mxu0
    %v1103 = vadd.f32 0.0, %v1102
    %1104 = vmatprep.mubr.bf16.mxu0 0
    %1105 = vmatmul.mubr.bf16.gmra.mrb[0].mxu0 %v175
    %v1106 = vpop.f32.mrb[0].mxu0
    %v1107 = vadd.f32 0.0, %v1106
    %v1108 = vpop.f32.mrb[0].mxu0
    %v1109 = vadd.f32 0.0, %v1108
    %v1110 = vpop.f32.mrb[0].mxu0
    %v1111 = vadd.f32 0.0, %v1110
    %v1112 = vpop.f32.mrb[0].mxu0
    %v1113 = vadd.f32 0.0, %v1112
    %1114 = vmatprep.mubr.bf16.mxu0 0
    %1115 = vmatmul.mubr.bf16.gmra.mrb[0].mxu0 %v176
    %v1116 = vpop.f32.mrb[0].mxu0
    %v1117 = vadd.f32 0.0, %v1116
    %v1118 = vpop.f32.mrb[0].mxu0
    %v1119 = vadd.f32 0.0, %v1118
    %v1120 = vpop.f32.mrb[0].mxu0
    %v1121 = vadd.f32 0.0, %v1120
    %v1122 = vpop.f32.mrb[0].mxu0
    %v1123 = vadd.f32 0.0, %v1122
    %1124 = vdwg.mxu0
    %1125 = vmatprep.subr.bf16.mxu0 0
    %1126 = vmatpush1.bf16.msra.mxu0 %v886
    %1127 = vmatprep.subr.bf16.mxu0 0
    %1128 = vmatpush1.bf16.msra.mxu0 %v889
    %1129 = vmatprep.subr.bf16.mxu0 0
    %1130 = vmatpush1.bf16.msra.mxu0 %v892
    %1131 = vmatprep.subr.bf16.mxu0 0
    %1132 = vmatpush1.bf16.msra.mxu0 %v895
    %1133 = vmatprep.subr.bf16.mxu0 0
    %1134 = vmatpush1.bf16.msra.mxu0 %v898
    %1135 = vmatprep.subr.bf16.mxu0 0
    %1136 = vmatpush1.bf16.msra.mxu0 %v901
    %1137 = vmatprep.subr.bf16.mxu0 0
    %1138 = vmatpush1.bf16.msra.mxu0 %v904
    %1139 = vmatprep.subr.bf16.mxu0 0
    %1140 = vmatpush1.bf16.msra.mxu0 %v907
    %1141 = vmatprep.subr.bf16.mxu0 0
    %1142 = vmatpush1.bf16.msra.mxu0 0
    %1143 = vmatprep.subr.bf16.mxu0 0
    %1144 = vmatpush1.bf16.msra.mxu0 0
    %1145 = vmatprep.subr.bf16.mxu0 0
    %1146 = vmatpush1.bf16.msra.mxu0 0
    %1147 = vmatprep.subr.bf16.mxu0 0
    %1148 = vmatpush1.bf16.msra.mxu0 0
    %1149 = vmatprep.subr.bf16.mxu0 0
    %1150 = vmatpush1.bf16.msra.mxu0 0
    %1151 = vmatprep.subr.bf16.mxu0 0
    %1152 = vmatpush1.bf16.msra.mxu0 0
    %1153 = vmatprep.subr.bf16.mxu0 0
    %1154 = vmatpush1.bf16.msra.mxu0 0
    %1155 = vmatprep.subr.bf16.mxu0 0
    %1156 = vmatpush1.bf16.msra.mxu0 0
    %1157 = vmatprep.mubr.bf16.mxu0 0
    %1158 = vmatmul.mubr.bf16.gmra.mrb[0].mxu0 %v161
    %v1159 = vpop.f32.mrb[0].mxu0
    %v1160 = vadd.f32 0.0, %v1159
    %v1161 = vpop.f32.mrb[0].mxu0
    %v1162 = vpop.f32.mrb[0].mxu0
    %v1163 = vadd.f32 0.0, %v1162
    %v1164 = vpop.f32.mrb[0].mxu0
    %1165 = vmatprep.mubr.bf16.mxu0 0
    %1166 = vmatmul.mubr.bf16.gmra.mrb[0].mxu0 %v162
    %v1167 = vpop.f32.mrb[0].mxu0
    %v1168 = vadd.f32 0.0, %v1167
    %v1169 = vpop.f32.mrb[0].mxu0
    %v1170 = vpop.f32.mrb[0].mxu0
    %v1171 = vadd.f32 0.0, %v1170
    %v1172 = vpop.f32.mrb[0].mxu0
    %1173 = vmatprep.mubr.bf16.mxu0 0
    %1174 = vmatmul.mubr.bf16.gmra.mrb[0].mxu0 %v163
    %v1175 = vpop.f32.mrb[0].mxu0
    %v1176 = vadd.f32 0.0, %v1175
    %v1177 = vpop.f32.mrb[0].mxu0
    %v1178 = vpop.f32.mrb[0].mxu0
    %v1179 = vadd.f32 0.0, %v1178
    %v1180 = vpop.f32.mrb[0].mxu0
    %1181 = vmatprep.mubr.bf16.mxu0 0
    %1182 = vmatmul.mubr.bf16.gmra.mrb[0].mxu0 %v164
    %v1183 = vpop.f32.mrb[0].mxu0
    %v1184 = vadd.f32 0.0, %v1183
    %v1185 = vpop.f32.mrb[0].mxu0
    %v1186 = vpop.f32.mrb[0].mxu0
    %v1187 = vadd.f32 0.0, %v1186
    %v1188 = vpop.f32.mrb[0].mxu0
    %1189 = vmatprep.mubr.bf16.mxu0 0
    %1190 = vmatmul.mubr.bf16.gmra.mrb[0].mxu0 %v165
    %v1191 = vpop.f32.mrb[0].mxu0
    %v1192 = vadd.f32 0.0, %v1191
    %v1193 = vpop.f32.mrb[0].mxu0
    %v1194 = vpop.f32.mrb[0].mxu0
    %v1195 = vadd.f32 0.0, %v1194
    %v1196 = vpop.f32.mrb[0].mxu0
    %1197 = vmatprep.mubr.bf16.mxu0 0
    %1198 = vmatmul.mubr.bf16.gmra.mrb[0].mxu0 %v166
    %v1199 = vpop.f32.mrb[0].mxu0
    %v1200 = vadd.f32 0.0, %v1199
    %v1201 = vpop.f32.mrb[0].mxu0
    %v1202 = vpop.f32.mrb[0].mxu0
    %v1203 = vadd.f32 0.0, %v1202
    %v1204 = vpop.f32.mrb[0].mxu0
    %1205 = vmatprep.mubr.bf16.mxu0 0
    %1206 = vmatmul.mubr.bf16.gmra.mrb[0].mxu0 %v167
    %v1207 = vpop.f32.mrb[0].mxu0
    %v1208 = vadd.f32 0.0, %v1207
    %v1209 = vpop.f32.mrb[0].mxu0
    %v1210 = vpop.f32.mrb[0].mxu0
    %v1211 = vadd.f32 0.0, %v1210
    %v1212 = vpop.f32.mrb[0].mxu0
    %1213 = vmatprep.mubr.bf16.mxu0 0
    %1214 = vmatmul.mubr.bf16.gmra.mrb[0].mxu0 %v168
    %v1215 = vpop.f32.mrb[0].mxu0
    %v1216 = vadd.f32 0.0, %v1215
    %v1217 = vpop.f32.mrb[0].mxu0
    %v1218 = vpop.f32.mrb[0].mxu0
    %v1219 = vadd.f32 0.0, %v1218
    %v1220 = vpop.f32.mrb[0].mxu0
    %1221 = vmatprep.mubr.bf16.mxu0 0
    %1222 = vmatmul.mubr.bf16.gmra.mrb[0].mxu0 %v169
    %v1223 = vpop.f32.mrb[0].mxu0
    %v1224 = vadd.f32 0.0, %v1223
    %v1225 = vpop.f32.mrb[0].mxu0
    %v1226 = vpop.f32.mrb[0].mxu0
    %v1227 = vadd.f32 0.0, %v1226
    %v1228 = vpop.f32.mrb[0].mxu0
    %1229 = vmatprep.mubr.bf16.mxu0 0
    %1230 = vmatmul.mubr.bf16.gmra.mrb[0].mxu0 %v170
    %v1231 = vpop.f32.mrb[0].mxu0
    %v1232 = vadd.f32 0.0, %v1231
    %v1233 = vpop.f32.mrb[0].mxu0
    %v1234 = vpop.f32.mrb[0].mxu0
    %v1235 = vadd.f32 0.0, %v1234
    %v1236 = vpop.f32.mrb[0].mxu0
    %1237 = vmatprep.mubr.bf16.mxu0 0
    %1238 = vmatmul.mubr.bf16.gmra.mrb[0].mxu0 %v171
    %v1239 = vpop.f32.mrb[0].mxu0
    %v1240 = vadd.f32 0.0, %v1239
    %v1241 = vpop.f32.mrb[0].mxu0
    %v1242 = vpop.f32.mrb[0].mxu0
    %v1243 = vadd.f32 0.0, %v1242
    %v1244 = vpop.f32.mrb[0].mxu0
    %1245 = vmatprep.mubr.bf16.mxu0 0
    %1246 = vmatmul.mubr.bf16.gmra.mrb[0].mxu0 %v172
    %v1247 = vpop.f32.mrb[0].mxu0
    %v1248 = vadd.f32 0.0, %v1247
    %v1249 = vpop.f32.mrb[0].mxu0
    %v1250 = vpop.f32.mrb[0].mxu0
    %v1251 = vadd.f32 0.0, %v1250
    %v1252 = vpop.f32.mrb[0].mxu0
    %1253 = vmatprep.mubr.bf16.mxu0 0
    %1254 = vmatmul.mubr.bf16.gmra.mrb[0].mxu0 %v173
    %v1255 = vpop.f32.mrb[0].mxu0
    %v1256 = vadd.f32 0.0, %v1255
    %v1257 = vpop.f32.mrb[0].mxu0
    %v1258 = vpop.f32.mrb[0].mxu0
    %v1259 = vadd.f32 0.0, %v1258
    %v1260 = vpop.f32.mrb[0].mxu0
    %1261 = vmatprep.mubr.bf16.mxu0 0
    %1262 = vmatmul.mubr.bf16.gmra.mrb[0].mxu0 %v174
    %v1263 = vpop.f32.mrb[0].mxu0
    %v1264 = vadd.f32 0.0, %v1263
    %v1265 = vpop.f32.mrb[0].mxu0
    %v1266 = vpop.f32.mrb[0].mxu0
    %v1267 = vadd.f32 0.0, %v1266
    %v1268 = vpop.f32.mrb[0].mxu0
    %1269 = vmatprep.mubr.bf16.mxu0 0
    %1270 = vmatmul.mubr.bf16.gmra.mrb[0].mxu0 %v175
    %v1271 = vpop.f32.mrb[0].mxu0
    %v1272 = vadd.f32 0.0, %v1271
    %v1273 = vpop.f32.mrb[0].mxu0
    %v1274 = vpop.f32.mrb[0].mxu0
    %v1275 = vadd.f32 0.0, %v1274
    %v1276 = vpop.f32.mrb[0].mxu0
    %1277 = vmatprep.mubr.bf16.mxu0 0
    %1278 = vmatmul.mubr.bf16.gmra.mrb[0].mxu0 %v176
    %v1279 = vpop.f32.mrb[0].mxu0
    %v1280 = vadd.f32 0.0, %v1279
    %v1281 = vpop.f32.mrb[0].mxu0
    %v1282 = vpop.f32.mrb[0].mxu0
    %v1283 = vadd.f32 0.0, %v1282
    %v1284 = vpop.f32.mrb[0].mxu0
    %1285 = vdwg.mxu0
    %v1286 = vld [vmem:[#allocation2] sm:$0xff]
    %v1287 = vld [vmem:[#allocation2 + $0x8] sm:$0xff]
    %v1288 = vld [vmem:[#allocation2 + $0x10] sm:$0xff]
    %v1289 = vld [vmem:[#allocation2 + $0x18] sm:$0xff]
    %v1290 = vld [vmem:[#allocation2 + $0x20] sm:$0xff]
    %v1291 = vld [vmem:[#allocation2 + $0x28] sm:$0xff]
    %v1292 = vld [vmem:[#allocation2 + $0x30] sm:$0xff]
    %v1293 = vld [vmem:[#allocation2 + $0x38] sm:$0xff]
    %v1294 = vld [vmem:[#allocation2 + $0x40] sm:$0xff]
    %v1295 = vld [vmem:[#allocation2 + $0x48] sm:$0xff]
    %v1296 = vld [vmem:[#allocation2 + $0x50] sm:$0xff]
    %v1297 = vld [vmem:[#allocation2 + $0x58] sm:$0xff]
    %v1298 = vld [vmem:[#allocation2 + $0x60] sm:$0xff]
    %v1299 = vld [vmem:[#allocation2 + $0x68] sm:$0xff]
    %v1300 = vld [vmem:[#allocation2 + $0x70] sm:$0xff]
    %v1301 = vld [vmem:[#allocation2 + $0x78] sm:$0xff]
    %v1302 = vld [vmem:[#allocation2 + $0x80] sm:$0xff]
    %v1303 = vld [vmem:[#allocation2 + $0x88] sm:$0xff]
    %v1304 = vld [vmem:[#allocation2 + $0x90] sm:$0xff]
    %v1305 = vld [vmem:[#allocation2 + $0x98] sm:$0xff]
    %v1306 = vld [vmem:[#allocation2 + $0xa0] sm:$0xff]
    %v1307 = vld [vmem:[#allocation2 + $0xa8] sm:$0xff]
    %v1308 = vld [vmem:[#allocation2 + $0xb0] sm:$0xff]
    %v1309 = vld [vmem:[#allocation2 + $0xb8] sm:$0xff]
    %v1310 = vld [vmem:[#allocation2 + $0xc0] sm:$0xff]
    %v1311 = vld [vmem:[#allocation2 + $0xc8] sm:$0xff]
    %v1312 = vld [vmem:[#allocation2 + $0xd0] sm:$0xff]
    %v1313 = vld [vmem:[#allocation2 + $0xd8] sm:$0xff]
    %v1314 = vld [vmem:[#allocation2 + $0xe0] sm:$0xff]
    %v1315 = vld [vmem:[#allocation2 + $0xe8] sm:$0xff]
    %v1316 = vld [vmem:[#allocation2 + $0xf0] sm:$0xff]
    %v1317 = vld [vmem:[#allocation2 + $0xf8] sm:$0xff]
    %v1318 = vld [vmem:[#allocation2 + $0x100] sm:$0xff]
    %v1319 = vld [vmem:[#allocation2 + $0x108] sm:$0xff]
    %v1320 = vld [vmem:[#allocation2 + $0x110] sm:$0xff]
    %v1321 = vld [vmem:[#allocation2 + $0x118] sm:$0xff]
    %v1322 = vld [vmem:[#allocation2 + $0x120] sm:$0xff]
    %v1323 = vld [vmem:[#allocation2 + $0x128] sm:$0xff]
    %v1324 = vld [vmem:[#allocation2 + $0x130] sm:$0xff]
    %v1325 = vld [vmem:[#allocation2 + $0x138] sm:$0xff]
    %v1326 = vld [vmem:[#allocation2 + $0x140] sm:$0xff]
    %v1327 = vld [vmem:[#allocation2 + $0x148] sm:$0xff]
    %v1328 = vld [vmem:[#allocation2 + $0x150] sm:$0xff]
    %v1329 = vld [vmem:[#allocation2 + $0x158] sm:$0xff]
    %v1330 = vld [vmem:[#allocation2 + $0x160] sm:$0xff]
    %v1331 = vld [vmem:[#allocation2 + $0x168] sm:$0xff]
    %v1332 = vld [vmem:[#allocation2 + $0x170] sm:$0xff]
    %v1333 = vld [vmem:[#allocation2 + $0x178] sm:$0xff]
    %v1334 = vld [vmem:[#allocation2 + $0x180] sm:$0xff]
    %v1335 = vld [vmem:[#allocation2 + $0x188] sm:$0xff]
    %v1336 = vld [vmem:[#allocation2 + $0x190] sm:$0xff]
    %v1337 = vld [vmem:[#allocation2 + $0x198] sm:$0xff]
    %v1338 = vld [vmem:[#allocation2 + $0x1a0] sm:$0xff]
    %v1339 = vld [vmem:[#allocation2 + $0x1a8] sm:$0xff]
    %v1340 = vld [vmem:[#allocation2 + $0x1b0] sm:$0xff]
    %v1341 = vld [vmem:[#allocation2 + $0x1b8] sm:$0xff]
    %v1342 = vld [vmem:[#allocation2 + $0x1c0] sm:$0xff]
    %v1343 = vld [vmem:[#allocation2 + $0x1c8] sm:$0xff]
    %v1344 = vld [vmem:[#allocation2 + $0x1d0] sm:$0xff]
    %v1345 = vld [vmem:[#allocation2 + $0x1d8] sm:$0xff]
    %v1346 = vld [vmem:[#allocation2 + $0x1e0] sm:$0xff]
    %v1347 = vld [vmem:[#allocation2 + $0x1e8] sm:$0xff]
    %v1348 = vld [vmem:[#allocation2 + $0x1f0] sm:$0xff]
    %v1349 = vld [vmem:[#allocation2 + $0x1f8] sm:$0xff]
    %v1350 = vld [vmem:[#allocation2 + $0x200] sm:$0xff]
    %v1351 = vld [vmem:[#allocation2 + $0x208] sm:$0xff]
    %v1352 = vld [vmem:[#allocation2 + $0x210] sm:$0xff]
    %v1353 = vld [vmem:[#allocation2 + $0x218] sm:$0xff]
    %v1354 = vld [vmem:[#allocation2 + $0x220] sm:$0xff]
    %v1355 = vld [vmem:[#allocation2 + $0x228] sm:$0xff]
    %v1356 = vld [vmem:[#allocation2 + $0x230] sm:$0xff]
    %v1357 = vld [vmem:[#allocation2 + $0x238] sm:$0xff]
    %v1358 = vld [vmem:[#allocation2 + $0x240] sm:$0xff]
    %v1359 = vld [vmem:[#allocation2 + $0x248] sm:$0xff]
    %v1360 = vld [vmem:[#allocation2 + $0x250] sm:$0xff]
    %v1361 = vld [vmem:[#allocation2 + $0x258] sm:$0xff]
    %v1362 = vld [vmem:[#allocation2 + $0x260] sm:$0xff]
    %v1363 = vld [vmem:[#allocation2 + $0x268] sm:$0xff]
    %v1364 = vld [vmem:[#allocation2 + $0x270] sm:$0xff]
    %v1365 = vld [vmem:[#allocation2 + $0x278] sm:$0xff]
    %v1366 = vld [vmem:[#allocation2 + $0x280] sm:$0xff]
    %v1367 = vld [vmem:[#allocation2 + $0x288] sm:$0xff]
    %v1368 = vld [vmem:[#allocation2 + $0x290] sm:$0xff]
    %v1369 = vld [vmem:[#allocation2 + $0x298] sm:$0xff]
    %v1370 = vld [vmem:[#allocation2 + $0x2a0] sm:$0xff]
    %v1371 = vld [vmem:[#allocation2 + $0x2a8] sm:$0xff]
    %v1372 = vld [vmem:[#allocation2 + $0x2b0] sm:$0xff]
    %v1373 = vld [vmem:[#allocation2 + $0x2b8] sm:$0xff]
    %v1374 = vld [vmem:[#allocation2 + $0x2c0] sm:$0xff]
    %v1375 = vld [vmem:[#allocation2 + $0x2c8] sm:$0xff]
    %v1376 = vld [vmem:[#allocation2 + $0x2d0] sm:$0xff]
    %v1377 = vld [vmem:[#allocation2 + $0x2d8] sm:$0xff]
    %v1378 = vld [vmem:[#allocation2 + $0x2e0] sm:$0xff]
    %v1379 = vld [vmem:[#allocation2 + $0x2e8] sm:$0x7f]
    %v1380 = vld [vmem:[#allocation2 + $0x2f0] sm:$0x7f]
    %v1381 = vld [vmem:[#allocation2 + $0x2f8] sm:$0x7f]
    %vm1478 = vcmask 1046528
    %v1479 = vrot.slane %v967, 1
    %v1480 = vrot.slane %v971, 1
    %v1481 = vsel %vm1478, %v1479, %v1480
    %v1482 = vrot.slane %v969, 1
    %v1483 = vrot.slane %v973, 1
    %v1484 = vsel %vm1478, %v1482, %v1483
    %v1485 = vrot.slane %v1160, 1
    %v1486 = vrot.slane %v1163, 1
    %v1487 = vsel %vm1478, %v1485, %v1486
    %v1488 = vrot.slane %v977, 1
    %v1489 = vsel %vm1478, %v1480, %v1488
    %v1490 = vrot.slane %v979, 1
    %v1491 = vsel %vm1478, %v1483, %v1490
    %v1492 = vrot.slane %v1168, 1
    %v1493 = vsel %vm1478, %v1486, %v1492
    %v1494 = vrot.slane %v981, 1
    %v1495 = vsel %vm1478, %v1488, %v1494
    %v1496 = vrot.slane %v983, 1
    %v1497 = vsel %vm1478, %v1490, %v1496
    %v1498 = vrot.slane %v1171, 1
    %v1499 = vsel %vm1478, %v1492, %v1498
    %v1500 = vrot.slane %v987, 1
    %v1501 = vsel %vm1478, %v1494, %v1500
    %v1502 = vrot.slane %v989, 1
    %v1503 = vsel %vm1478, %v1496, %v1502
    %v1504 = vrot.slane %v1176, 1
    %v1505 = vsel %vm1478, %v1498, %v1504
    %v1506 = vrot.slane %v991, 1
    %v1507 = vsel %vm1478, %v1500, %v1506
    %v1508 = vrot.slane %v993, 1
    %v1509 = vsel %vm1478, %v1502, %v1508
    %v1510 = vrot.slane %v1179, 1
    %v1511 = vsel %vm1478, %v1504, %v1510
    %v1512 = vrot.slane %v997, 1
    %v1513 = vsel %vm1478, %v1506, %v1512
    %v1514 = vrot.slane %v999, 1
    %v1515 = vsel %vm1478, %v1508, %v1514
    %v1516 = vrot.slane %v1184, 1
    %v1517 = vsel %vm1478, %v1510, %v1516
    %v1518 = vrot.slane %v1001, 1
    %v1519 = vsel %vm1478, %v1512, %v1518
    %v1520 = vrot.slane %v1003, 1
    %v1521 = vsel %vm1478, %v1514, %v1520
    %v1522 = vrot.slane %v1187, 1
    %v1523 = vsel %vm1478, %v1516, %v1522
    %v1524 = vrot.slane %v1007, 1
    %v1525 = vsel %vm1478, %v1518, %v1524
    %v1526 = vrot.slane %v1009, 1
    %v1527 = vsel %vm1478, %v1520, %v1526
    %v1528 = vrot.slane %v1192, 1
    %v1529 = vsel %vm1478, %v1522, %v1528
    %v1530 = vrot.slane %v1011, 1
    %v1531 = vsel %vm1478, %v1524, %v1530
    %v1532 = vrot.slane %v1013, 1
    %v1533 = vsel %vm1478, %v1526, %v1532
    %v1534 = vrot.slane %v1195, 1
    %v1535 = vsel %vm1478, %v1528, %v1534
    %v1536 = vrot.slane %v1017, 1
    %v1537 = vsel %vm1478, %v1530, %v1536
    %v1538 = vrot.slane %v1019, 1
    %v1539 = vsel %vm1478, %v1532, %v1538
    %v1540 = vrot.slane %v1200, 1
    %v1541 = vsel %vm1478, %v1534, %v1540
    %v1542 = vrot.slane %v1021, 1
    %v1543 = vsel %vm1478, %v1536, %v1542
    %v1544 = vrot.slane %v1023, 1
    %v1545 = vsel %vm1478, %v1538, %v1544
    %v1546 = vrot.slane %v1203, 1
    %v1547 = vsel %vm1478, %v1540, %v1546
    %v1548 = vrot.slane %v1027, 1
    %v1549 = vsel %vm1478, %v1542, %v1548
    %v1550 = vrot.slane %v1029, 1
    %v1551 = vsel %vm1478, %v1544, %v1550
    %v1552 = vrot.slane %v1208, 1
    %v1553 = vsel %vm1478, %v1546, %v1552
    %v1554 = vrot.slane %v1031, 1
    %v1555 = vsel %vm1478, %v1548, %v1554
    %v1556 = vrot.slane %v1033, 1
    %v1557 = vsel %vm1478, %v1550, %v1556
    %v1558 = vrot.slane %v1211, 1
    %v1559 = vsel %vm1478, %v1552, %v1558
    %v1560 = vrot.slane %v1037, 1
    %v1561 = vsel %vm1478, %v1554, %v1560
    %v1562 = vrot.slane %v1039, 1
    %v1563 = vsel %vm1478, %v1556, %v1562
    %v1564 = vrot.slane %v1216, 1
    %v1565 = vsel %vm1478, %v1558, %v1564
    %v1566 = vrot.slane %v1041, 1
    %v1567 = vsel %vm1478, %v1560, %v1566
    %v1568 = vrot.slane %v1043, 1
    %v1569 = vsel %vm1478, %v1562, %v1568
    %v1570 = vrot.slane %v1219, 1
    %v1571 = vsel %vm1478, %v1564, %v1570
    %v1572 = vrot.slane %v1047, 1
    %v1573 = vsel %vm1478, %v1566, %v1572
    %v1574 = vrot.slane %v1049, 1
    %v1575 = vsel %vm1478, %v1568, %v1574
    %v1576 = vrot.slane %v1224, 1
    %v1577 = vsel %vm1478, %v1570, %v1576
    %v1578 = vrot.slane %v1051, 1
    %v1579 = vsel %vm1478, %v1572, %v1578
    %v1580 = vrot.slane %v1053, 1
    %v1581 = vsel %vm1478, %v1574, %v1580
    %v1582 = vrot.slane %v1227, 1
    %v1583 = vsel %vm1478, %v1576, %v1582
    %v1584 = vrot.slane %v1057, 1
    %v1585 = vsel %vm1478, %v1578, %v1584
    %v1586 = vrot.slane %v1059, 1
    %v1587 = vsel %vm1478, %v1580, %v1586
    %v1588 = vrot.slane %v1232, 1
    %v1589 = vsel %vm1478, %v1582, %v1588
    %v1590 = vrot.slane %v1061, 1
    %v1591 = vsel %vm1478, %v1584, %v1590
    %v1592 = vrot.slane %v1063, 1
    %v1593 = vsel %vm1478, %v1586, %v1592
    %v1594 = vrot.slane %v1235, 1
    %v1595 = vsel %vm1478, %v1588, %v1594
    %v1596 = vrot.slane %v1067, 1
    %v1597 = vsel %vm1478, %v1590, %v1596
    %v1598 = vrot.slane %v1069, 1
    %v1599 = vsel %vm1478, %v1592, %v1598
    %v1600 = vrot.slane %v1240, 1
    %v1601 = vsel %vm1478, %v1594, %v1600
    %v1602 = vrot.slane %v1071, 1
    %v1603 = vsel %vm1478, %v1596, %v1602
    %v1604 = vrot.slane %v1073, 1
    %v1605 = vsel %vm1478, %v1598, %v1604
    %v1606 = vrot.slane %v1243, 1
    %v1607 = vsel %vm1478, %v1600, %v1606
    %v1608 = vrot.slane %v1077, 1
    %v1609 = vsel %vm1478, %v1602, %v1608
    %v1610 = vrot.slane %v1079, 1
    %v1611 = vsel %vm1478, %v1604, %v1610
    %v1612 = vrot.slane %v1248, 1
    %v1613 = vsel %vm1478, %v1606, %v1612
    %v1614 = vrot.slane %v1081, 1
    %v1615 = vsel %vm1478, %v1608, %v1614
    %v1616 = vrot.slane %v1083, 1
    %v1617 = vsel %vm1478, %v1610, %v1616
    %v1618 = vrot.slane %v1251, 1
    %v1619 = vsel %vm1478, %v1612, %v1618
    %v1620 = vrot.slane %v1087, 1
    %v1621 = vsel %vm1478, %v1614, %v1620
    %v1622 = vrot.slane %v1089, 1
    %v1623 = vsel %vm1478, %v1616, %v1622
    %v1624 = vrot.slane %v1256, 1
    %v1625 = vsel %vm1478, %v1618, %v1624
    %v1626 = vrot.slane %v1091, 1
    %v1627 = vsel %vm1478, %v1620, %v1626
    %v1628 = vrot.slane %v1093, 1
    %v1629 = vsel %vm1478, %v1622, %v1628
    %v1630 = vrot.slane %v1259, 1
    %v1631 = vsel %vm1478, %v1624, %v1630
    %v1632 = vrot.slane %v1097, 1
    %v1633 = vsel %vm1478, %v1626, %v1632
    %v1634 = vrot.slane %v1099, 1
    %v1635 = vsel %vm1478, %v1628, %v1634
    %v1636 = vrot.slane %v1264, 1
    %v1637 = vsel %vm1478, %v1630, %v1636
    %v1638 = vrot.slane %v1101, 1
    %v1639 = vsel %vm1478, %v1632, %v1638
    %v1640 = vrot.slane %v1103, 1
    %v1641 = vsel %vm1478, %v1634, %v1640
    %v1642 = vrot.slane %v1267, 1
    %v1643 = vsel %vm1478, %v1636, %v1642
    %v1644 = vrot.slane %v1107, 1
    %v1645 = vsel %vm1478, %v1638, %v1644
    %v1646 = vrot.slane %v1109, 1
    %v1647 = vsel %vm1478, %v1640, %v1646
    %v1648 = vrot.slane %v1272, 1
    %v1649 = vsel %vm1478, %v1642, %v1648
    %v1650 = vrot.slane %v1111, 1
    %v1651 = vsel %vm1478, %v1644, %v1650
    %v1652 = vrot.slane %v1113, 1
    %v1653 = vsel %vm1478, %v1646, %v1652
    %v1654 = vrot.slane %v1275, 1
    %v1655 = vsel %vm1478, %v1648, %v1654
    %v1656 = vrot.slane %v1117, 1
    %v1657 = vsel %vm1478, %v1650, %v1656
    %v1658 = vrot.slane %v1119, 1
    %v1659 = vsel %vm1478, %v1652, %v1658
    %v1660 = vrot.slane %v1280, 1
    %v1661 = vsel %vm1478, %v1654, %v1660
    %v1662 = vrot.slane %v1121, 1
    %v1663 = vsel %vm1478, %v1656, %v1662
    %v1664 = vrot.slane %v1123, 1
    %v1665 = vsel %vm1478, %v1658, %v1664
    %v1666 = vrot.slane %v1283, 1
    %v1667 = vsel %vm1478, %v1660, %v1666
    %v1764 = vadd.f32 %v1286, %v1481
    %v1765 = vadd.f32 %v1287, %v1484
    %v1766 = vadd.f32 %v1288, %v1487
    %v1767 = vadd.f32 %v1289, %v1489
    %v1768 = vadd.f32 %v1290, %v1491
    %v1769 = vadd.f32 %v1291, %v1493
    %v1770 = vadd.f32 %v1292, %v1495
    %v1771 = vadd.f32 %v1293, %v1497
    %v1772 = vadd.f32 %v1294, %v1499
    %v1773 = vadd.f32 %v1295, %v1501
    %v1774 = vadd.f32 %v1296, %v1503
    %v1775 = vadd.f32 %v1297, %v1505
    %v1776 = vadd.f32 %v1298, %v1507
    %v1777 = vadd.f32 %v1299, %v1509
    %v1778 = vadd.f32 %v1300, %v1511
    %v1779 = vadd.f32 %v1301, %v1513
    %v1780 = vadd.f32 %v1302, %v1515
    %v1781 = vadd.f32 %v1303, %v1517
    %v1782 = vadd.f32 %v1304, %v1519
    %v1783 = vadd.f32 %v1305, %v1521
    %v1784 = vadd.f32 %v1306, %v1523
    %v1785 = vadd.f32 %v1307, %v1525
    %v1786 = vadd.f32 %v1308, %v1527
    %v1787 = vadd.f32 %v1309, %v1529
    %v1788 = vadd.f32 %v1310, %v1531
    %v1789 = vadd.f32 %v1311, %v1533
    %v1790 = vadd.f32 %v1312, %v1535
    %v1791 = vadd.f32 %v1313, %v1537
    %v1792 = vadd.f32 %v1314, %v1539
    %v1793 = vadd.f32 %v1315, %v1541
    %v1794 = vadd.f32 %v1316, %v1543
    %v1795 = vadd.f32 %v1317, %v1545
    %v1796 = vadd.f32 %v1318, %v1547
    %v1797 = vadd.f32 %v1319, %v1549
    %v1798 = vadd.f32 %v1320, %v1551
    %v1799 = vadd.f32 %v1321, %v1553
    %v1800 = vadd.f32 %v1322, %v1555
    %v1801 = vadd.f32 %v1323, %v1557
    %v1802 = vadd.f32 %v1324, %v1559
    %v1803 = vadd.f32 %v1325, %v1561
    %v1804 = vadd.f32 %v1326, %v1563
    %v1805 = vadd.f32 %v1327, %v1565
    %v1806 = vadd.f32 %v1328, %v1567
    %v1807 = vadd.f32 %v1329, %v1569
    %v1808 = vadd.f32 %v1330, %v1571
    %v1809 = vadd.f32 %v1331, %v1573
    %v1810 = vadd.f32 %v1332, %v1575
    %v1811 = vadd.f32 %v1333, %v1577
    %v1812 = vadd.f32 %v1334, %v1579
    %v1813 = vadd.f32 %v1335, %v1581
    %v1814 = vadd.f32 %v1336, %v1583
    %v1815 = vadd.f32 %v1337, %v1585
    %v1816 = vadd.f32 %v1338, %v1587
    %v1817 = vadd.f32 %v1339, %v1589
    %v1818 = vadd.f32 %v1340, %v1591
    %v1819 = vadd.f32 %v1341, %v1593
    %v1820 = vadd.f32 %v1342, %v1595
    %v1821 = vadd.f32 %v1343, %v1597
    %v1822 = vadd.f32 %v1344, %v1599
    %v1823 = vadd.f32 %v1345, %v1601
    %v1824 = vadd.f32 %v1346, %v1603
    %v1825 = vadd.f32 %v1347, %v1605
    %v1826 = vadd.f32 %v1348, %v1607
    %v1827 = vadd.f32 %v1349, %v1609
    %v1828 = vadd.f32 %v1350, %v1611
    %v1829 = vadd.f32 %v1351, %v1613
    %v1830 = vadd.f32 %v1352, %v1615
    %v1831 = vadd.f32 %v1353, %v1617
    %v1832 = vadd.f32 %v1354, %v1619
    %v1833 = vadd.f32 %v1355, %v1621
    %v1834 = vadd.f32 %v1356, %v1623
    %v1835 = vadd.f32 %v1357, %v1625
    %v1836 = vadd.f32 %v1358, %v1627
    %v1837 = vadd.f32 %v1359, %v1629
    %v1838 = vadd.f32 %v1360, %v1631
    %v1839 = vadd.f32 %v1361, %v1633
    %v1840 = vadd.f32 %v1362, %v1635
    %v1841 = vadd.f32 %v1363, %v1637
    %v1842 = vadd.f32 %v1364, %v1639
    %v1843 = vadd.f32 %v1365, %v1641
    %v1844 = vadd.f32 %v1366, %v1643
    %v1845 = vadd.f32 %v1367, %v1645
    %v1846 = vadd.f32 %v1368, %v1647
    %v1847 = vadd.f32 %v1369, %v1649
    %v1848 = vadd.f32 %v1370, %v1651
    %v1849 = vadd.f32 %v1371, %v1653
    %v1850 = vadd.f32 %v1372, %v1655
    %v1851 = vadd.f32 %v1373, %v1657
    %v1852 = vadd.f32 %v1374, %v1659
    %v1853 = vadd.f32 %v1375, %v1661
    %v1854 = vadd.f32 %v1376, %v1663
    %v1855 = vadd.f32 %v1377, %v1665
    %v1856 = vadd.f32 %v1378, %v1667
    %v1857 = vadd.f32 %v1379, %v1662
    %v1858 = vadd.f32 %v1380, %v1664
    %v1859 = vadd.f32 %v1381, %v1666
    %1860 = vst [vmem:[#allocation2] sm:$0xff] %v1764
    %1861 = vst [vmem:[#allocation2 + $0x8] sm:$0xff] %v1765
    %1862 = vst [vmem:[#allocation2 + $0x10] sm:$0xff] %v1766
    %1863 = vst [vmem:[#allocation2 + $0x18] sm:$0xff] %v1767
    %1864 = vst [vmem:[#allocation2 + $0x20] sm:$0xff] %v1768
    %1865 = vst [vmem:[#allocation2 + $0x28] sm:$0xff] %v1769
    %1866 = vst [vmem:[#allocation2 + $0x30] sm:$0xff] %v1770
    %1867 = vst [vmem:[#allocation2 + $0x38] sm:$0xff] %v1771
    %1868 = vst [vmem:[#allocation2 + $0x40] sm:$0xff] %v1772
    %1869 = vst [vmem:[#allocation2 + $0x48] sm:$0xff] %v1773
    %1870 = vst [vmem:[#allocation2 + $0x50] sm:$0xff] %v1774
    %1871 = vst [vmem:[#allocation2 + $0x58] sm:$0xff] %v1775
    %1872 = vst [vmem:[#allocation2 + $0x60] sm:$0xff] %v1776
    %1873 = vst [vmem:[#allocation2 + $0x68] sm:$0xff] %v1777
    %1874 = vst [vmem:[#allocation2 + $0x70] sm:$0xff] %v1778
    %1875 = vst [vmem:[#allocation2 + $0x78] sm:$0xff] %v1779
    %1876 = vst [vmem:[#allocation2 + $0x80] sm:$0xff] %v1780
    %1877 = vst [vmem:[#allocation2 + $0x88] sm:$0xff] %v1781
    %1878 = vst [vmem:[#allocation2 + $0x90] sm:$0xff] %v1782
    %1879 = vst [vmem:[#allocation2 + $0x98] sm:$0xff] %v1783
    %1880 = vst [vmem:[#allocation2 + $0xa0] sm:$0xff] %v1784
    %1881 = vst [vmem:[#allocation2 + $0xa8] sm:$0xff] %v1785
    %1882 = vst [vmem:[#allocation2 + $0xb0] sm:$0xff] %v1786
    %1883 = vst [vmem:[#allocation2 + $0xb8] sm:$0xff] %v1787
    %1884 = vst [vmem:[#allocation2 + $0xc0] sm:$0xff] %v1788
    %1885 = vst [vmem:[#allocation2 + $0xc8] sm:$0xff] %v1789
    %1886 = vst [vmem:[#allocation2 + $0xd0] sm:$0xff] %v1790
    %1887 = vst [vmem:[#allocation2 + $0xd8] sm:$0xff] %v1791
    %1888 = vst [vmem:[#allocation2 + $0xe0] sm:$0xff] %v1792
    %1889 = vst [vmem:[#allocation2 + $0xe8] sm:$0xff] %v1793
    %1890 = vst [vmem:[#allocation2 + $0xf0] sm:$0xff] %v1794
    %1891 = vst [vmem:[#allocation2 + $0xf8] sm:$0xff] %v1795
    %1892 = vst [vmem:[#allocation2 + $0x100] sm:$0xff] %v1796
    %1893 = vst [vmem:[#allocation2 + $0x108] sm:$0xff] %v1797
    %1894 = vst [vmem:[#allocation2 + $0x110] sm:$0xff] %v1798
    %1895 = vst [vmem:[#allocation2 + $0x118] sm:$0xff] %v1799
    %1896 = vst [vmem:[#allocation2 + $0x120] sm:$0xff] %v1800
    %1897 = vst [vmem:[#allocation2 + $0x128] sm:$0xff] %v1801
    %1898 = vst [vmem:[#allocation2 + $0x130] sm:$0xff] %v1802
    %1899 = vst [vmem:[#allocation2 + $0x138] sm:$0xff] %v1803
    %1900 = vst [vmem:[#allocation2 + $0x140] sm:$0xff] %v1804
    %1901 = vst [vmem:[#allocation2 + $0x148] sm:$0xff] %v1805
    %1902 = vst [vmem:[#allocation2 + $0x150] sm:$0xff] %v1806
    %1903 = vst [vmem:[#allocation2 + $0x158] sm:$0xff] %v1807
    %1904 = vst [vmem:[#allocation2 + $0x160] sm:$0xff] %v1808
    %1905 = vst [vmem:[#allocation2 + $0x168] sm:$0xff] %v1809
    %1906 = vst [vmem:[#allocation2 + $0x170] sm:$0xff] %v1810
    %1907 = vst [vmem:[#allocation2 + $0x178] sm:$0xff] %v1811
    %1908 = vst [vmem:[#allocation2 + $0x180] sm:$0xff] %v1812
    %1909 = vst [vmem:[#allocation2 + $0x188] sm:$0xff] %v1813
    %1910 = vst [vmem:[#allocation2 + $0x190] sm:$0xff] %v1814
    %1911 = vst [vmem:[#allocation2 + $0x198] sm:$0xff] %v1815
    %1912 = vst [vmem:[#allocation2 + $0x1a0] sm:$0xff] %v1816
    %1913 = vst [vmem:[#allocation2 + $0x1a8] sm:$0xff] %v1817
    %1914 = vst [vmem:[#allocation2 + $0x1b0] sm:$0xff] %v1818
    %1915 = vst [vmem:[#allocation2 + $0x1b8] sm:$0xff] %v1819
    %1916 = vst [vmem:[#allocation2 + $0x1c0] sm:$0xff] %v1820
    %1917 = vst [vmem:[#allocation2 + $0x1c8] sm:$0xff] %v1821
    %1918 = vst [vmem:[#allocation2 + $0x1d0] sm:$0xff] %v1822
    %1919 = vst [vmem:[#allocation2 + $0x1d8] sm:$0xff] %v1823
    %1920 = vst [vmem:[#allocation2 + $0x1e0] sm:$0xff] %v1824
    %1921 = vst [vmem:[#allocation2 + $0x1e8] sm:$0xff] %v1825
    %1922 = vst [vmem:[#allocation2 + $0x1f0] sm:$0xff] %v1826
    %1923 = vst [vmem:[#allocation2 + $0x1f8] sm:$0xff] %v1827
    %1924 = vst [vmem:[#allocation2 + $0x200] sm:$0xff] %v1828
    %1925 = vst [vmem:[#allocation2 + $0x208] sm:$0xff] %v1829
    %1926 = vst [vmem:[#allocation2 + $0x210] sm:$0xff] %v1830
    %1927 = vst [vmem:[#allocation2 + $0x218] sm:$0xff] %v1831
    %1928 = vst [vmem:[#allocation2 + $0x220] sm:$0xff] %v1832
    %1929 = vst [vmem:[#allocation2 + $0x228] sm:$0xff] %v1833
    %1930 = vst [vmem:[#allocation2 + $0x230] sm:$0xff] %v1834
    %1931 = vst [vmem:[#allocation2 + $0x238] sm:$0xff] %v1835
    %1932 = vst [vmem:[#allocation2 + $0x240] sm:$0xff] %v1836
    %1933 = vst [vmem:[#allocation2 + $0x248] sm:$0xff] %v1837
    %1934 = vst [vmem:[#allocation2 + $0x250] sm:$0xff] %v1838
    %1935 = vst [vmem:[#allocation2 + $0x258] sm:$0xff] %v1839
    %1936 = vst [vmem:[#allocation2 + $0x260] sm:$0xff] %v1840
    %1937 = vst [vmem:[#allocation2 + $0x268] sm:$0xff] %v1841
    %1938 = vst [vmem:[#allocation2 + $0x270] sm:$0xff] %v1842
    %1939 = vst [vmem:[#allocation2 + $0x278] sm:$0xff] %v1843
    %1940 = vst [vmem:[#allocation2 + $0x280] sm:$0xff] %v1844
    %1941 = vst [vmem:[#allocation2 + $0x288] sm:$0xff] %v1845
    %1942 = vst [vmem:[#allocation2 + $0x290] sm:$0xff] %v1846
    %1943 = vst [vmem:[#allocation2 + $0x298] sm:$0xff] %v1847
    %1944 = vst [vmem:[#allocation2 + $0x2a0] sm:$0xff] %v1848
    %1945 = vst [vmem:[#allocation2 + $0x2a8] sm:$0xff] %v1849
    %1946 = vst [vmem:[#allocation2 + $0x2b0] sm:$0xff] %v1850
    %1947 = vst [vmem:[#allocation2 + $0x2b8] sm:$0xff] %v1851
    %1948 = vst [vmem:[#allocation2 + $0x2c0] sm:$0xff] %v1852
    %1949 = vst [vmem:[#allocation2 + $0x2c8] sm:$0xff] %v1853
    %1950 = vst [vmem:[#allocation2 + $0x2d0] sm:$0xff] %v1854
    %1951 = vst [vmem:[#allocation2 + $0x2d8] sm:$0xff] %v1855
    %1952 = vst [vmem:[#allocation2 + $0x2e0] sm:$0xff] %v1856
    %1953 = vst [vmem:[#allocation2 + $0x2e8] sm:$0x7f] %v1857
    %1954 = vst [vmem:[#allocation2 + $0x2f0] sm:$0x7f] %v1858
    %1955 = vst [vmem:[#allocation2 + $0x2f8] sm:$0x7f] %v1859
    %s1956 = scalar_lea.vmem [#allocation3], 384
    %v1957 = vld [vmem:[%s1956 + $0x4] sm:$0xff]
    %v1958 = vld [vmem:[%s1956 + $0x10] sm:$0xff]
    %v1959 = vld [vmem:[%s1956 + $0x1c] sm:$0xff]
    %v1960 = vld [vmem:[%s1956 + $0x28] sm:$0xff]
    %v1961 = vld [vmem:[%s1956 + $0x34] sm:$0xff]
    %v1962 = vld [vmem:[%s1956 + $0x40] sm:$0xff]
    %v1963 = vld [vmem:[%s1956 + $0x4c] sm:$0xff]
    %v1964 = vld [vmem:[%s1956 + $0x58] sm:$0xff]
    %v1965 = vld [vmem:[%s1956 + $0x64] sm:$0xff]
    %v1966 = vld [vmem:[%s1956 + $0x70] sm:$0xff]
    %v1967 = vld [vmem:[%s1956 + $0x7c] sm:$0xff]
    %v1968 = vld [vmem:[%s1956 + $0x88] sm:$0xff]
    %v1969 = vld [vmem:[%s1956 + $0x94] sm:$0xff]
    %v1970 = vld [vmem:[%s1956 + $0xa0] sm:$0xff]
    %v1971 = vld [vmem:[%s1956 + $0xac] sm:$0xff]
    %v1972 = vld [vmem:[%s1956 + $0xb8] sm:$0xff]
    %v1989 = vunpack.c.l.b16 %v1957
    %v1990 = vunpack.c.h.b16 %v1957
    %v1991 = vunpack.c.l.b16 %v1958
    %v1992 = vunpack.c.h.b16 %v1958
    %v1993 = vunpack.c.l.b16 %v1959
    %v1994 = vunpack.c.h.b16 %v1959
    %v1995 = vunpack.c.l.b16 %v1960
    %v1996 = vunpack.c.h.b16 %v1960
    %v1997 = vunpack.c.l.b16 %v1961
    %v1998 = vunpack.c.h.b16 %v1961
    %v1999 = vunpack.c.l.b16 %v1962
    %v2000 = vunpack.c.h.b16 %v1962
    %v2001 = vunpack.c.l.b16 %v1963
    %v2002 = vunpack.c.h.b16 %v1963
    %v2003 = vunpack.c.l.b16 %v1964
    %v2004 = vunpack.c.h.b16 %v1964
    %v2005 = vunpack.c.l.b16 %v1965
    %v2006 = vunpack.c.h.b16 %v1965
    %v2007 = vunpack.c.l.b16 %v1966
    %v2008 = vunpack.c.h.b16 %v1966
    %v2009 = vunpack.c.l.b16 %v1967
    %v2010 = vunpack.c.h.b16 %v1967
    %v2011 = vunpack.c.l.b16 %v1968
    %v2012 = vunpack.c.h.b16 %v1968
    %v2013 = vunpack.c.l.b16 %v1969
    %v2014 = vunpack.c.h.b16 %v1969
    %v2015 = vunpack.c.l.b16 %v1970
    %v2016 = vunpack.c.h.b16 %v1970
    %v2017 = vunpack.c.l.b16 %v1971
    %v2018 = vunpack.c.h.b16 %v1971
    %v2019 = vunpack.c.l.b16 %v1972
    %v2020 = vunpack.c.h.b16 %v1972
    %v2021 = vpack.c.b16 %v1991, %v1989
    %v2022 = vpack.c.b16 %v1992, %v1990
    %v2023 = vpack.c.b16 %v1995, %v1993
    %v2024 = vpack.c.b16 %v1996, %v1994
    %v2025 = vpack.c.b16 %v1999, %v1997
    %v2026 = vpack.c.b16 %v2000, %v1998
    %v2027 = vpack.c.b16 %v2003, %v2001
    %v2028 = vpack.c.b16 %v2004, %v2002
    %v2029 = vpack.c.b16 %v2007, %v2005
    %v2030 = vpack.c.b16 %v2008, %v2006
    %v2031 = vpack.c.b16 %v2011, %v2009
    %v2032 = vpack.c.b16 %v2012, %v2010
    %v2033 = vpack.c.b16 %v2015, %v2013
    %v2034 = vpack.c.b16 %v2016, %v2014
    %v2035 = vpack.c.b16 %v2019, %v2017
    %v2036 = vpack.c.b16 %v2020, %v2018
    %2053 = vmatprep.subr.bf16.mxu0 %v2022
    %2054 = vmatpush1.bf16.msra.mxu0 %v2021
    %2055 = vmatprep.subr.bf16.mxu0 %v2024
    %2056 = vmatpush1.bf16.msra.mxu0 %v2023
    %2057 = vmatprep.subr.bf16.mxu0 %v2026
    %2058 = vmatpush1.bf16.msra.mxu0 %v2025
    %2059 = vmatprep.subr.bf16.mxu0 %v2028
    %2060 = vmatpush1.bf16.msra.mxu0 %v2027
    %2061 = vmatprep.subr.bf16.mxu0 %v2030
    %2062 = vmatpush1.bf16.msra.mxu0 %v2029
    %2063 = vmatprep.subr.bf16.mxu0 %v2032
    %2064 = vmatpush1.bf16.msra.mxu0 %v2031
    %2065 = vmatprep.subr.bf16.mxu0 %v2034
    %2066 = vmatpush1.bf16.msra.mxu0 %v2033
    %2067 = vmatprep.subr.bf16.mxu0 %v2036
    %2068 = vmatpush1.bf16.msra.mxu0 %v2035
    %2069 = vmatprep.subr.bf16.mxu0 0
    %2070 = vmatpush1.bf16.msra.mxu0 0
    %2071 = vmatprep.subr.bf16.mxu0 0
    %2072 = vmatpush1.bf16.msra.mxu0 0
    %2073 = vmatprep.subr.bf16.mxu0 0
    %2074 = vmatpush1.bf16.msra.mxu0 0
    %2075 = vmatprep.subr.bf16.mxu0 0
    %2076 = vmatpush1.bf16.msra.mxu0 0
    %2077 = vmatprep.subr.bf16.mxu0 0
    %2078 = vmatpush1.bf16.msra.mxu0 0
    %2079 = vmatprep.subr.bf16.mxu0 0
    %2080 = vmatpush1.bf16.msra.mxu0 0
    %2081 = vmatprep.subr.bf16.mxu0 0
    %2082 = vmatpush1.bf16.msra.mxu0 0
    %2083 = vmatprep.subr.bf16.mxu0 0
    %2084 = vmatpush1.bf16.msra.mxu0 0
    %2085 = vmatprep.mubr.bf16.mxu0 0
    %2086 = vmatmul.mubr.bf16.gmra.mrb[0].mxu0 %v161
    %v2087 = vpop.f32.mrb[0].mxu0
    %v2088 = vadd.f32 0.0, %v2087
    %v2089 = vpop.f32.mrb[0].mxu0
    %v2090 = vadd.f32 0.0, %v2089
    %v2091 = vpop.f32.mrb[0].mxu0
    %v2092 = vadd.f32 0.0, %v2091
    %v2093 = vpop.f32.mrb[0].mxu0
    %v2094 = vadd.f32 0.0, %v2093
    %2095 = vmatprep.mubr.bf16.mxu0 0
    %2096 = vmatmul.mubr.bf16.gmra.mrb[0].mxu0 %v162
    %v2097 = vpop.f32.mrb[0].mxu0
    %v2098 = vadd.f32 0.0, %v2097
    %v2099 = vpop.f32.mrb[0].mxu0
    %v2100 = vadd.f32 0.0, %v2099
    %v2101 = vpop.f32.mrb[0].mxu0
    %v2102 = vadd.f32 0.0, %v2101
    %v2103 = vpop.f32.mrb[0].mxu0
    %v2104 = vadd.f32 0.0, %v2103
    %2105 = vmatprep.mubr.bf16.mxu0 0
    %2106 = vmatmul.mubr.bf16.gmra.mrb[0].mxu0 %v163
    %v2107 = vpop.f32.mrb[0].mxu0
    %v2108 = vadd.f32 0.0, %v2107
    %v2109 = vpop.f32.mrb[0].mxu0
    %v2110 = vadd.f32 0.0, %v2109
    %v2111 = vpop.f32.mrb[0].mxu0
    %v2112 = vadd.f32 0.0, %v2111
    %v2113 = vpop.f32.mrb[0].mxu0
    %v2114 = vadd.f32 0.0, %v2113
    %2115 = vmatprep.mubr.bf16.mxu0 0
    %2116 = vmatmul.mubr.bf16.gmra.mrb[0].mxu0 %v164
    %v2117 = vpop.f32.mrb[0].mxu0
    %v2118 = vadd.f32 0.0, %v2117
    %v2119 = vpop.f32.mrb[0].mxu0
    %v2120 = vadd.f32 0.0, %v2119
    %v2121 = vpop.f32.mrb[0].mxu0
    %v2122 = vadd.f32 0.0, %v2121
    %v2123 = vpop.f32.mrb[0].mxu0
    %v2124 = vadd.f32 0.0, %v2123
    %2125 = vmatprep.mubr.bf16.mxu0 0
    %2126 = vmatmul.mubr.bf16.gmra.mrb[0].mxu0 %v165
    %v2127 = vpop.f32.mrb[0].mxu0
    %v2128 = vadd.f32 0.0, %v2127
    %v2129 = vpop.f32.mrb[0].mxu0
    %v2130 = vadd.f32 0.0, %v2129
    %v2131 = vpop.f32.mrb[0].mxu0
    %v2132 = vadd.f32 0.0, %v2131
    %v2133 = vpop.f32.mrb[0].mxu0
    %v2134 = vadd.f32 0.0, %v2133
    %2135 = vmatprep.mubr.bf16.mxu0 0
    %2136 = vmatmul.mubr.bf16.gmra.mrb[0].mxu0 %v166
    %v2137 = vpop.f32.mrb[0].mxu0
    %v2138 = vadd.f32 0.0, %v2137
    %v2139 = vpop.f32.mrb[0].mxu0
    %v2140 = vadd.f32 0.0, %v2139
    %v2141 = vpop.f32.mrb[0].mxu0
    %v2142 = vadd.f32 0.0, %v2141
    %v2143 = vpop.f32.mrb[0].mxu0
    %v2144 = vadd.f32 0.0, %v2143
    %2145 = vmatprep.mubr.bf16.mxu0 0
    %2146 = vmatmul.mubr.bf16.gmra.mrb[0].mxu0 %v167
    %v2147 = vpop.f32.mrb[0].mxu0
    %v2148 = vadd.f32 0.0, %v2147
    %v2149 = vpop.f32.mrb[0].mxu0
    %v2150 = vadd.f32 0.0, %v2149
    %v2151 = vpop.f32.mrb[0].mxu0
    %v2152 = vadd.f32 0.0, %v2151
    %v2153 = vpop.f32.mrb[0].mxu0
    %v2154 = vadd.f32 0.0, %v2153
    %2155 = vmatprep.mubr.bf16.mxu0 0
    %2156 = vmatmul.mubr.bf16.gmra.mrb[0].mxu0 %v168
    %v2157 = vpop.f32.mrb[0].mxu0
    %v2158 = vadd.f32 0.0, %v2157
    %v2159 = vpop.f32.mrb[0].mxu0
    %v2160 = vadd.f32 0.0, %v2159
    %v2161 = vpop.f32.mrb[0].mxu0
    %v2162 = vadd.f32 0.0, %v2161
    %v2163 = vpop.f32.mrb[0].mxu0
    %v2164 = vadd.f32 0.0, %v2163
    %2165 = vmatprep.mubr.bf16.mxu0 0
    %2166 = vmatmul.mubr.bf16.gmra.mrb[0].mxu0 %v169
    %v2167 = vpop.f32.mrb[0].mxu0
    %v2168 = vadd.f32 0.0, %v2167
    %v2169 = vpop.f32.mrb[0].mxu0
    %v2170 = vadd.f32 0.0, %v2169
    %v2171 = vpop.f32.mrb[0].mxu0
    %v2172 = vadd.f32 0.0, %v2171
    %v2173 = vpop.f32.mrb[0].mxu0
    %v2174 = vadd.f32 0.0, %v2173
    %2175 = vmatprep.mubr.bf16.mxu0 0
    %2176 = vmatmul.mubr.bf16.gmra.mrb[0].mxu0 %v170
    %v2177 = vpop.f32.mrb[0].mxu0
    %v2178 = vadd.f32 0.0, %v2177
    %v2179 = vpop.f32.mrb[0].mxu0
    %v2180 = vadd.f32 0.0, %v2179
    %v2181 = vpop.f32.mrb[0].mxu0
    %v2182 = vadd.f32 0.0, %v2181
    %v2183 = vpop.f32.mrb[0].mxu0
    %v2184 = vadd.f32 0.0, %v2183
    %2185 = vmatprep.mubr.bf16.mxu0 0
    %2186 = vmatmul.mubr.bf16.gmra.mrb[0].mxu0 %v171
    %v2187 = vpop.f32.mrb[0].mxu0
    %v2188 = vadd.f32 0.0, %v2187
    %v2189 = vpop.f32.mrb[0].mxu0
    %v2190 = vadd.f32 0.0, %v2189
    %v2191 = vpop.f32.mrb[0].mxu0
    %v2192 = vadd.f32 0.0, %v2191
    %v2193 = vpop.f32.mrb[0].mxu0
    %v2194 = vadd.f32 0.0, %v2193
    %2195 = vmatprep.mubr.bf16.mxu0 0
    %2196 = vmatmul.mubr.bf16.gmra.mrb[0].mxu0 %v172
    %v2197 = vpop.f32.mrb[0].mxu0
    %v2198 = vadd.f32 0.0, %v2197
    %v2199 = vpop.f32.mrb[0].mxu0
    %v2200 = vadd.f32 0.0, %v2199
    %v2201 = vpop.f32.mrb[0].mxu0
    %v2202 = vadd.f32 0.0, %v2201
    %v2203 = vpop.f32.mrb[0].mxu0
    %v2204 = vadd.f32 0.0, %v2203
    %2205 = vmatprep.mubr.bf16.mxu0 0
    %2206 = vmatmul.mubr.bf16.gmra.mrb[0].mxu0 %v173
    %v2207 = vpop.f32.mrb[0].mxu0
    %v2208 = vadd.f32 0.0, %v2207
    %v2209 = vpop.f32.mrb[0].mxu0
    %v2210 = vadd.f32 0.0, %v2209
    %v2211 = vpop.f32.mrb[0].mxu0
    %v2212 = vadd.f32 0.0, %v2211
    %v2213 = vpop.f32.mrb[0].mxu0
    %v2214 = vadd.f32 0.0, %v2213
    %2215 = vmatprep.mubr.bf16.mxu0 0
    %2216 = vmatmul.mubr.bf16.gmra.mrb[0].mxu0 %v174
    %v2217 = vpop.f32.mrb[0].mxu0
    %v2218 = vadd.f32 0.0, %v2217
    %v2219 = vpop.f32.mrb[0].mxu0
    %v2220 = vadd.f32 0.0, %v2219
    %v2221 = vpop.f32.mrb[0].mxu0
    %v2222 = vadd.f32 0.0, %v2221
    %v2223 = vpop.f32.mrb[0].mxu0
    %v2224 = vadd.f32 0.0, %v2223
    %2225 = vmatprep.mubr.bf16.mxu0 0
    %2226 = vmatmul.mubr.bf16.gmra.mrb[0].mxu0 %v175
    %v2227 = vpop.f32.mrb[0].mxu0
    %v2228 = vadd.f32 0.0, %v2227
    %v2229 = vpop.f32.mrb[0].mxu0
    %v2230 = vadd.f32 0.0, %v2229
    %v2231 = vpop.f32.mrb[0].mxu0
    %v2232 = vadd.f32 0.0, %v2231
    %v2233 = vpop.f32.mrb[0].mxu0
    %v2234 = vadd.f32 0.0, %v2233
    %2235 = vmatprep.mubr.bf16.mxu0 0
    %2236 = vmatmul.mubr.bf16.gmra.mrb[0].mxu0 %v176
    %v2237 = vpop.f32.mrb[0].mxu0
    %v2238 = vadd.f32 0.0, %v2237
    %v2239 = vpop.f32.mrb[0].mxu0
    %v2240 = vadd.f32 0.0, %v2239
    %v2241 = vpop.f32.mrb[0].mxu0
    %v2242 = vadd.f32 0.0, %v2241
    %v2243 = vpop.f32.mrb[0].mxu0
    %v2244 = vadd.f32 0.0, %v2243
    %2245 = vdwg.mxu0
    %v2246 = vld [vmem:[#allocation2 + $0x8] sm:$0xff]
    %v2247 = vld [vmem:[#allocation2 + $0x10] sm:$0xff]
    %v2248 = vld [vmem:[#allocation2 + $0x20] sm:$0xff]
    %v2249 = vld [vmem:[#allocation2 + $0x28] sm:$0xff]
    %v2250 = vld [vmem:[#allocation2 + $0x38] sm:$0xff]
    %v2251 = vld [vmem:[#allocation2 + $0x40] sm:$0xff]
    %v2252 = vld [vmem:[#allocation2 + $0x50] sm:$0xff]
    %v2253 = vld [vmem:[#allocation2 + $0x58] sm:$0xff]
    %v2254 = vld [vmem:[#allocation2 + $0x68] sm:$0xff]
    %v2255 = vld [vmem:[#allocation2 + $0x70] sm:$0xff]
    %v2256 = vld [vmem:[#allocation2 + $0x80] sm:$0xff]
    %v2257 = vld [vmem:[#allocation2 + $0x88] sm:$0xff]
    %v2258 = vld [vmem:[#allocation2 + $0x98] sm:$0xff]
    %v2259 = vld [vmem:[#allocation2 + $0xa0] sm:$0xff]
    %v2260 = vld [vmem:[#allocation2 + $0xb0] sm:$0xff]
    %v2261 = vld [vmem:[#allocation2 + $0xb8] sm:$0xff]
    %v2262 = vld [vmem:[#allocation2 + $0xc8] sm:$0xff]
    %v2263 = vld [vmem:[#allocation2 + $0xd0] sm:$0xff]
    %v2264 = vld [vmem:[#allocation2 + $0xe0] sm:$0xff]
    %v2265 = vld [vmem:[#allocation2 + $0xe8] sm:$0xff]
    %v2266 = vld [vmem:[#allocation2 + $0xf8] sm:$0xff]
    %v2267 = vld [vmem:[#allocation2 + $0x100] sm:$0xff]
    %v2268 = vld [vmem:[#allocation2 + $0x110] sm:$0xff]
    %v2269 = vld [vmem:[#allocation2 + $0x118] sm:$0xff]
    %v2270 = vld [vmem:[#allocation2 + $0x128] sm:$0xff]
    %v2271 = vld [vmem:[#allocation2 + $0x130] sm:$0xff]
    %v2272 = vld [vmem:[#allocation2 + $0x140] sm:$0xff]
    %v2273 = vld [vmem:[#allocation2 + $0x148] sm:$0xff]
    %v2274 = vld [vmem:[#allocation2 + $0x158] sm:$0xff]
    %v2275 = vld [vmem:[#allocation2 + $0x160] sm:$0xff]
    %v2276 = vld [vmem:[#allocation2 + $0x170] sm:$0xff]
    %v2277 = vld [vmem:[#allocation2 + $0x178] sm:$0xff]
    %v2278 = vld [vmem:[#allocation2 + $0x188] sm:$0xff]
    %v2279 = vld [vmem:[#allocation2 + $0x190] sm:$0xff]
    %v2280 = vld [vmem:[#allocation2 + $0x1a0] sm:$0xff]
    %v2281 = vld [vmem:[#allocation2 + $0x1a8] sm:$0xff]
    %v2282 = vld [vmem:[#allocation2 + $0x1b8] sm:$0xff]
    %v2283 = vld [vmem:[#allocation2 + $0x1c0] sm:$0xff]
    %v2284 = vld [vmem:[#allocation2 + $0x1d0] sm:$0xff]
    %v2285 = vld [vmem:[#allocation2 + $0x1d8] sm:$0xff]
    %v2286 = vld [vmem:[#allocation2 + $0x1e8] sm:$0xff]
    %v2287 = vld [vmem:[#allocation2 + $0x1f0] sm:$0xff]
    %v2288 = vld [vmem:[#allocation2 + $0x200] sm:$0xff]
    %v2289 = vld [vmem:[#allocation2 + $0x208] sm:$0xff]
    %v2290 = vld [vmem:[#allocation2 + $0x218] sm:$0xff]
    %v2291 = vld [vmem:[#allocation2 + $0x220] sm:$0xff]
    %v2292 = vld [vmem:[#allocation2 + $0x230] sm:$0xff]
    %v2293 = vld [vmem:[#allocation2 + $0x238] sm:$0xff]
    %v2294 = vld [vmem:[#allocation2 + $0x248] sm:$0xff]
    %v2295 = vld [vmem:[#allocation2 + $0x250] sm:$0xff]
    %v2296 = vld [vmem:[#allocation2 + $0x260] sm:$0xff]
    %v2297 = vld [vmem:[#allocation2 + $0x268] sm:$0xff]
    %v2298 = vld [vmem:[#allocation2 + $0x278] sm:$0xff]
    %v2299 = vld [vmem:[#allocation2 + $0x280] sm:$0xff]
    %v2300 = vld [vmem:[#allocation2 + $0x290] sm:$0xff]
    %v2301 = vld [vmem:[#allocation2 + $0x298] sm:$0xff]
    %v2302 = vld [vmem:[#allocation2 + $0x2a8] sm:$0xff]
    %v2303 = vld [vmem:[#allocation2 + $0x2b0] sm:$0xff]
    %v2304 = vld [vmem:[#allocation2 + $0x2c0] sm:$0xff]
    %v2305 = vld [vmem:[#allocation2 + $0x2c8] sm:$0xff]
    %v2306 = vld [vmem:[#allocation2 + $0x2d8] sm:$0xff]
    %v2307 = vld [vmem:[#allocation2 + $0x2e0] sm:$0xff]
    %v2308 = vld [vmem:[#allocation2 + $0x2f0] sm:$0x3f]
    %v2309 = vld [vmem:[#allocation2 + $0x2f8] sm:$0x3f]
    %vm2374 = vcmask 1045504
    %v2375 = vrot.slane %v2088, 2
    %v2376 = vrot.slane %v2092, 2
    %v2377 = vsel %vm2374, %v2375, %v2376
    %v2378 = vrot.slane %v2090, 2
    %v2379 = vrot.slane %v2094, 2
    %v2380 = vsel %vm2374, %v2378, %v2379
    %v2381 = vrot.slane %v2098, 2
    %v2382 = vsel %vm2374, %v2376, %v2381
    %v2383 = vrot.slane %v2100, 2
    %v2384 = vsel %vm2374, %v2379, %v2383
    %v2385 = vrot.slane %v2102, 2
    %v2386 = vsel %vm2374, %v2381, %v2385
    %v2387 = vrot.slane %v2104, 2
    %v2388 = vsel %vm2374, %v2383, %v2387
    %v2389 = vrot.slane %v2108, 2
    %v2390 = vsel %vm2374, %v2385, %v2389
    %v2391 = vrot.slane %v2110, 2
    %v2392 = vsel %vm2374, %v2387, %v2391
    %v2393 = vrot.slane %v2112, 2
    %v2394 = vsel %vm2374, %v2389, %v2393
    %v2395 = vrot.slane %v2114, 2
    %v2396 = vsel %vm2374, %v2391, %v2395
    %v2397 = vrot.slane %v2118, 2
    %v2398 = vsel %vm2374, %v2393, %v2397
    %v2399 = vrot.slane %v2120, 2
    %v2400 = vsel %vm2374, %v2395, %v2399
    %v2401 = vrot.slane %v2122, 2
    %v2402 = vsel %vm2374, %v2397, %v2401
    %v2403 = vrot.slane %v2124, 2
    %v2404 = vsel %vm2374, %v2399, %v2403
    %v2405 = vrot.slane %v2128, 2
    %v2406 = vsel %vm2374, %v2401, %v2405
    %v2407 = vrot.slane %v2130, 2
    %v2408 = vsel %vm2374, %v2403, %v2407
    %v2409 = vrot.slane %v2132, 2
    %v2410 = vsel %vm2374, %v2405, %v2409
    %v2411 = vrot.slane %v2134, 2
    %v2412 = vsel %vm2374, %v2407, %v2411
    %v2413 = vrot.slane %v2138, 2
    %v2414 = vsel %vm2374, %v2409, %v2413
    %v2415 = vrot.slane %v2140, 2
    %v2416 = vsel %vm2374, %v2411, %v2415
    %v2417 = vrot.slane %v2142, 2
    %v2418 = vsel %vm2374, %v2413, %v2417
    %v2419 = vrot.slane %v2144, 2
    %v2420 = vsel %vm2374, %v2415, %v2419
    %v2421 = vrot.slane %v2148, 2
    %v2422 = vsel %vm2374, %v2417, %v2421
    %v2423 = vrot.slane %v2150, 2
    %v2424 = vsel %vm2374, %v2419, %v2423
    %v2425 = vrot.slane %v2152, 2
    %v2426 = vsel %vm2374, %v2421, %v2425
    %v2427 = vrot.slane %v2154, 2
    %v2428 = vsel %vm2374, %v2423, %v2427
    %v2429 = vrot.slane %v2158, 2
    %v2430 = vsel %vm2374, %v2425, %v2429
    %v2431 = vrot.slane %v2160, 2
    %v2432 = vsel %vm2374, %v2427, %v2431
    %v2433 = vrot.slane %v2162, 2
    %v2434 = vsel %vm2374, %v2429, %v2433
    %v2435 = vrot.slane %v2164, 2
    %v2436 = vsel %vm2374, %v2431, %v2435
    %v2437 = vrot.slane %v2168, 2
    %v2438 = vsel %vm2374, %v2433, %v2437
    %v2439 = vrot.slane %v2170, 2
    %v2440 = vsel %vm2374, %v2435, %v2439
    %v2441 = vrot.slane %v2172, 2
    %v2442 = vsel %vm2374, %v2437, %v2441
    %v2443 = vrot.slane %v2174, 2
    %v2444 = vsel %vm2374, %v2439, %v2443
    %v2445 = vrot.slane %v2178, 2
    %v2446 = vsel %vm2374, %v2441, %v2445
    %v2447 = vrot.slane %v2180, 2
    %v2448 = vsel %vm2374, %v2443, %v2447
    %v2449 = vrot.slane %v2182, 2
    %v2450 = vsel %vm2374, %v2445, %v2449
    %v2451 = vrot.slane %v2184, 2
    %v2452 = vsel %vm2374, %v2447, %v2451
    %v2453 = vrot.slane %v2188, 2
    %v2454 = vsel %vm2374, %v2449, %v2453
    %v2455 = vrot.slane %v2190, 2
    %v2456 = vsel %vm2374, %v2451, %v2455
    %v2457 = vrot.slane %v2192, 2
    %v2458 = vsel %vm2374, %v2453, %v2457
    %v2459 = vrot.slane %v2194, 2
    %v2460 = vsel %vm2374, %v2455, %v2459
    %v2461 = vrot.slane %v2198, 2
    %v2462 = vsel %vm2374, %v2457, %v2461
    %v2463 = vrot.slane %v2200, 2
    %v2464 = vsel %vm2374, %v2459, %v2463
    %v2465 = vrot.slane %v2202, 2
    %v2466 = vsel %vm2374, %v2461, %v2465
    %v2467 = vrot.slane %v2204, 2
    %v2468 = vsel %vm2374, %v2463, %v2467
    %v2469 = vrot.slane %v2208, 2
    %v2470 = vsel %vm2374, %v2465, %v2469
    %v2471 = vrot.slane %v2210, 2
    %v2472 = vsel %vm2374, %v2467, %v2471
    %v2473 = vrot.slane %v2212, 2
    %v2474 = vsel %vm2374, %v2469, %v2473
    %v2475 = vrot.slane %v2214, 2
    %v2476 = vsel %vm2374, %v2471, %v2475
    %v2477 = vrot.slane %v2218, 2
    %v2478 = vsel %vm2374, %v2473, %v2477
    %v2479 = vrot.slane %v2220, 2
    %v2480 = vsel %vm2374, %v2475, %v2479
    %v2481 = vrot.slane %v2222, 2
    %v2482 = vsel %vm2374, %v2477, %v2481
    %v2483 = vrot.slane %v2224, 2
    %v2484 = vsel %vm2374, %v2479, %v2483
    %v2485 = vrot.slane %v2228, 2
    %v2486 = vsel %vm2374, %v2481, %v2485
    %v2487 = vrot.slane %v2230, 2
    %v2488 = vsel %vm2374, %v2483, %v2487
    %v2489 = vrot.slane %v2232, 2
    %v2490 = vsel %vm2374, %v2485, %v2489
    %v2491 = vrot.slane %v2234, 2
    %v2492 = vsel %vm2374, %v2487, %v2491
    %v2493 = vrot.slane %v2238, 2
    %v2494 = vsel %vm2374, %v2489, %v2493
    %v2495 = vrot.slane %v2240, 2
    %v2496 = vsel %vm2374, %v2491, %v2495
    %v2497 = vrot.slane %v2242, 2
    %v2498 = vsel %vm2374, %v2493, %v2497
    %v2499 = vrot.slane %v2244, 2
    %v2500 = vsel %vm2374, %v2495, %v2499
    %v2565 = vadd.f32 %v2246, %v2377
    %v2566 = vadd.f32 %v2247, %v2380
    %v2567 = vadd.f32 %v2248, %v2382
    %v2568 = vadd.f32 %v2249, %v2384
    %v2569 = vadd.f32 %v2250, %v2386
    %v2570 = vadd.f32 %v2251, %v2388
    %v2571 = vadd.f32 %v2252, %v2390
    %v2572 = vadd.f32 %v2253, %v2392
    %v2573 = vadd.f32 %v2254, %v2394
    %v2574 = vadd.f32 %v2255, %v2396
    %v2575 = vadd.f32 %v2256, %v2398
    %v2576 = vadd.f32 %v2257, %v2400
    %v2577 = vadd.f32 %v2258, %v2402
    %v2578 = vadd.f32 %v2259, %v2404
    %v2579 = vadd.f32 %v2260, %v2406
    %v2580 = vadd.f32 %v2261, %v2408
    %v2581 = vadd.f32 %v2262, %v2410
    %v2582 = vadd.f32 %v2263, %v2412
    %v2583 = vadd.f32 %v2264, %v2414
    %v2584 = vadd.f32 %v2265, %v2416
    %v2585 = vadd.f32 %v2266, %v2418
    %v2586 = vadd.f32 %v2267, %v2420
    %v2587 = vadd.f32 %v2268, %v2422
    %v2588 = vadd.f32 %v2269, %v2424
    %v2589 = vadd.f32 %v2270, %v2426
    %v2590 = vadd.f32 %v2271, %v2428
    %v2591 = vadd.f32 %v2272, %v2430
    %v2592 = vadd.f32 %v2273, %v2432
    %v2593 = vadd.f32 %v2274, %v2434
    %v2594 = vadd.f32 %v2275, %v2436
    %v2595 = vadd.f32 %v2276, %v2438
    %v2596 = vadd.f32 %v2277, %v2440
    %v2597 = vadd.f32 %v2278, %v2442
    %v2598 = vadd.f32 %v2279, %v2444
    %v2599 = vadd.f32 %v2280, %v2446
    %v2600 = vadd.f32 %v2281, %v2448
    %v2601 = vadd.f32 %v2282, %v2450
    %v2602 = vadd.f32 %v2283, %v2452
    %v2603 = vadd.f32 %v2284, %v2454
    %v2604 = vadd.f32 %v2285, %v2456
    %v2605 = vadd.f32 %v2286, %v2458
    %v2606 = vadd.f32 %v2287, %v2460
    %v2607 = vadd.f32 %v2288, %v2462
    %v2608 = vadd.f32 %v2289, %v2464
    %v2609 = vadd.f32 %v2290, %v2466
    %v2610 = vadd.f32 %v2291, %v2468
    %v2611 = vadd.f32 %v2292, %v2470
    %v2612 = vadd.f32 %v2293, %v2472
    %v2613 = vadd.f32 %v2294, %v2474
    %v2614 = vadd.f32 %v2295, %v2476
    %v2615 = vadd.f32 %v2296, %v2478
    %v2616 = vadd.f32 %v2297, %v2480
    %v2617 = vadd.f32 %v2298, %v2482
    %v2618 = vadd.f32 %v2299, %v2484
    %v2619 = vadd.f32 %v2300, %v2486
    %v2620 = vadd.f32 %v2301, %v2488
    %v2621 = vadd.f32 %v2302, %v2490
    %v2622 = vadd.f32 %v2303, %v2492
    %v2623 = vadd.f32 %v2304, %v2494
    %v2624 = vadd.f32 %v2305, %v2496
    %v2625 = vadd.f32 %v2306, %v2498
    %v2626 = vadd.f32 %v2307, %v2500
    %v2627 = vadd.f32 %v2308, %v2497
    %v2628 = vadd.f32 %v2309, %v2499
    %2629 = vst [vmem:[#allocation2 + $0x8] sm:$0xff] %v2565
    %2630 = vst [vmem:[#allocation2 + $0x10] sm:$0xff] %v2566
    %2631 = vst [vmem:[#allocation2 + $0x20] sm:$0xff] %v2567
    %2632 = vst [vmem:[#allocation2 + $0x28] sm:$0xff] %v2568
    %2633 = vst [vmem:[#allocation2 + $0x38] sm:$0xff] %v2569
    %2634 = vst [vmem:[#allocation2 + $0x40] sm:$0xff] %v2570
    %2635 = vst [vmem:[#allocation2 + $0x50] sm:$0xff] %v2571
    %2636 = vst [vmem:[#allocation2 + $0x58] sm:$0xff] %v2572
    %2637 = vst [vmem:[#allocation2 + $0x68] sm:$0xff] %v2573
    %2638 = vst [vmem:[#allocation2 + $0x70] sm:$0xff] %v2574
    %2639 = vst [vmem:[#allocation2 + $0x80] sm:$0xff] %v2575
    %2640 = vst [vmem:[#allocation2 + $0x88] sm:$0xff] %v2576
    %2641 = vst [vmem:[#allocation2 + $0x98] sm:$0xff] %v2577
    %2642 = vst [vmem:[#allocation2 + $0xa0] sm:$0xff] %v2578
    %2643 = vst [vmem:[#allocation2 + $0xb0] sm:$0xff] %v2579
    %2644 = vst [vmem:[#allocation2 + $0xb8] sm:$0xff] %v2580
    %2645 = vst [vmem:[#allocation2 + $0xc8] sm:$0xff] %v2581
    %2646 = vst [vmem:[#allocation2 + $0xd0] sm:$0xff] %v2582
    %2647 = vst [vmem:[#allocation2 + $0xe0] sm:$0xff] %v2583
    %2648 = vst [vmem:[#allocation2 + $0xe8] sm:$0xff] %v2584
    %2649 = vst [vmem:[#allocation2 + $0xf8] sm:$0xff] %v2585
    %2650 = vst [vmem:[#allocation2 + $0x100] sm:$0xff] %v2586
    %2651 = vst [vmem:[#allocation2 + $0x110] sm:$0xff] %v2587
    %2652 = vst [vmem:[#allocation2 + $0x118] sm:$0xff] %v2588
    %2653 = vst [vmem:[#allocation2 + $0x128] sm:$0xff] %v2589
    %2654 = vst [vmem:[#allocation2 + $0x130] sm:$0xff] %v2590
    %2655 = vst [vmem:[#allocation2 + $0x140] sm:$0xff] %v2591
    %2656 = vst [vmem:[#allocation2 + $0x148] sm:$0xff] %v2592
    %2657 = vst [vmem:[#allocation2 + $0x158] sm:$0xff] %v2593
    %2658 = vst [vmem:[#allocation2 + $0x160] sm:$0xff] %v2594
    %2659 = vst [vmem:[#allocation2 + $0x170] sm:$0xff] %v2595
    %2660 = vst [vmem:[#allocation2 + $0x178] sm:$0xff] %v2596
    %2661 = vst [vmem:[#allocation2 + $0x188] sm:$0xff] %v2597
    %2662 = vst [vmem:[#allocation2 + $0x190] sm:$0xff] %v2598
    %2663 = vst [vmem:[#allocation2 + $0x1a0] sm:$0xff] %v2599
    %2664 = vst [vmem:[#allocation2 + $0x1a8] sm:$0xff] %v2600
    %2665 = vst [vmem:[#allocation2 + $0x1b8] sm:$0xff] %v2601
    %2666 = vst [vmem:[#allocation2 + $0x1c0] sm:$0xff] %v2602
    %2667 = vst [vmem:[#allocation2 + $0x1d0] sm:$0xff] %v2603
    %2668 = vst [vmem:[#allocation2 + $0x1d8] sm:$0xff] %v2604
    %2669 = vst [vmem:[#allocation2 + $0x1e8] sm:$0xff] %v2605
    %2670 = vst [vmem:[#allocation2 + $0x1f0] sm:$0xff] %v2606
    %2671 = vst [vmem:[#allocation2 + $0x200] sm:$0xff] %v2607
    %2672 = vst [vmem:[#allocation2 + $0x208] sm:$0xff] %v2608
    %2673 = vst [vmem:[#allocation2 + $0x218] sm:$0xff] %v2609
    %2674 = vst [vmem:[#allocation2 + $0x220] sm:$0xff] %v2610
    %2675 = vst [vmem:[#allocation2 + $0x230] sm:$0xff] %v2611
    %2676 = vst [vmem:[#allocation2 + $0x238] sm:$0xff] %v2612
    %2677 = vst [vmem:[#allocation2 + $0x248] sm:$0xff] %v2613
    %2678 = vst [vmem:[#allocation2 + $0x250] sm:$0xff] %v2614
    %2679 = vst [vmem:[#allocation2 + $0x260] sm:$0xff] %v2615
    %2680 = vst [vmem:[#allocation2 + $0x268] sm:$0xff] %v2616
    %2681 = vst [vmem:[#allocation2 + $0x278] sm:$0xff] %v2617
    %2682 = vst [vmem:[#allocation2 + $0x280] sm:$0xff] %v2618
    %2683 = vst [vmem:[#allocation2 + $0x290] sm:$0xff] %v2619
    %2684 = vst [vmem:[#allocation2 + $0x298] sm:$0xff] %v2620
    %2685 = vst [vmem:[#allocation2 + $0x2a8] sm:$0xff] %v2621
    %2686 = vst [vmem:[#allocation2 + $0x2b0] sm:$0xff] %v2622
    %2687 = vst [vmem:[#allocation2 + $0x2c0] sm:$0xff] %v2623
    %2688 = vst [vmem:[#allocation2 + $0x2c8] sm:$0xff] %v2624
    %2689 = vst [vmem:[#allocation2 + $0x2d8] sm:$0xff] %v2625
    %2690 = vst [vmem:[#allocation2 + $0x2e0] sm:$0xff] %v2626
    %2691 = vst [vmem:[#allocation2 + $0x2f0] sm:$0x3f] %v2627
    %2692 = vst [vmem:[#allocation2 + $0x2f8] sm:$0x3f] %v2628
    %s2693 = scalar_lea.vmem [#allocation3], 576
    %v2694 = vld [vmem:[%s2693 + $0x8] sm:$0xf]
    %v2695 = vld [vmem:[%s2693 + $0x14] sm:$0xf]
    %v2696 = vld [vmem:[%s2693 + $0x20] sm:$0xf]
    %v2697 = vld [vmem:[%s2693 + $0x2c] sm:$0xf]
    %v2698 = vld [vmem:[%s2693 + $0x38] sm:$0xf]
    %v2699 = vld [vmem:[%s2693 + $0x44] sm:$0xf]
    %v2700 = vld [vmem:[%s2693 + $0x50] sm:$0xf]
    %v2701 = vld [vmem:[%s2693 + $0x5c] sm:$0xf]
    %v2702 = vld [vmem:[%s2693 + $0x68] sm:$0xf]
    %v2703 = vld [vmem:[%s2693 + $0x74] sm:$0xf]
    %v2704 = vld [vmem:[%s2693 + $0x80] sm:$0xf]
    %v2705 = vld [vmem:[%s2693 + $0x8c] sm:$0xf]
    %v2706 = vld [vmem:[%s2693 + $0x98] sm:$0xf]
    %v2707 = vld [vmem:[%s2693 + $0xa4] sm:$0xf]
    %v2708 = vld [vmem:[%s2693 + $0xb0] sm:$0xf]
    %v2709 = vld [vmem:[%s2693 + $0xbc] sm:$0xf]
    %v2726 = vunpack.c.l.b16 %v2694
    %v2727 = vunpack.c.l.b16 %v2695
    %v2728 = vunpack.c.l.b16 %v2696
    %v2729 = vunpack.c.l.b16 %v2697
    %v2730 = vunpack.c.l.b16 %v2698
    %v2731 = vunpack.c.l.b16 %v2699
    %v2732 = vunpack.c.l.b16 %v2700
    %v2733 = vunpack.c.l.b16 %v2701
    %v2734 = vunpack.c.l.b16 %v2702
    %v2735 = vunpack.c.l.b16 %v2703
    %v2736 = vunpack.c.l.b16 %v2704
    %v2737 = vunpack.c.l.b16 %v2705
    %v2738 = vunpack.c.l.b16 %v2706
    %v2739 = vunpack.c.l.b16 %v2707
    %v2740 = vunpack.c.l.b16 %v2708
    %v2741 = vunpack.c.l.b16 %v2709
    %v2742 = vpack.c.b16 %v2727, %v2726
    %v2743 = vpack.c.b16 %v2729, %v2728
    %v2744 = vpack.c.b16 %v2731, %v2730
    %v2745 = vpack.c.b16 %v2733, %v2732
    %v2746 = vpack.c.b16 %v2735, %v2734
    %v2747 = vpack.c.b16 %v2737, %v2736
    %v2748 = vpack.c.b16 %v2739, %v2738
    %v2749 = vpack.c.b16 %v2741, %v2740
    %2758 = vmatprep.subr.bf16.mxu0 0
    %2759 = vmatpush1.bf16.msra.mxu0 %v2742
    %2760 = vmatprep.subr.bf16.mxu0 0
    %2761 = vmatpush1.bf16.msra.mxu0 %v2743
    %2762 = vmatprep.subr.bf16.mxu0 0
    %2763 = vmatpush1.bf16.msra.mxu0 %v2744
    %2764 = vmatprep.subr.bf16.mxu0 0
    %2765 = vmatpush1.bf16.msra.mxu0 %v2745
    %2766 = vmatprep.subr.bf16.mxu0 0
    %2767 = vmatpush1.bf16.msra.mxu0 %v2746
    %2768 = vmatprep.subr.bf16.mxu0 0
    %2769 = vmatpush1.bf16.msra.mxu0 %v2747
    %2770 = vmatprep.subr.bf16.mxu0 0
    %2771 = vmatpush1.bf16.msra.mxu0 %v2748
    %2772 = vmatprep.subr.bf16.mxu0 0
    %2773 = vmatpush1.bf16.msra.mxu0 %v2749
    %2774 = vmatprep.subr.bf16.mxu0 0
    %2775 = vmatpush1.bf16.msra.mxu0 0
    %2776 = vmatprep.subr.bf16.mxu0 0
    %2777 = vmatpush1.bf16.msra.mxu0 0
    %2778 = vmatprep.subr.bf16.mxu0 0
    %2779 = vmatpush1.bf16.msra.mxu0 0
    %2780 = vmatprep.subr.bf16.mxu0 0
    %2781 = vmatpush1.bf16.msra.mxu0 0
    %2782 = vmatprep.subr.bf16.mxu0 0
    %2783 = vmatpush1.bf16.msra.mxu0 0
    %2784 = vmatprep.subr.bf16.mxu0 0
    %2785 = vmatpush1.bf16.msra.mxu0 0
    %2786 = vmatprep.subr.bf16.mxu0 0
    %2787 = vmatpush1.bf16.msra.mxu0 0
    %2788 = vmatprep.subr.bf16.mxu0 0
    %2789 = vmatpush1.bf16.msra.mxu0 0
    %2790 = vmatprep.mubr.bf16.mxu0 0
    %2791 = vmatmul.mubr.bf16.gmra.mrb[0].mxu0 %v161
    %v2792 = vpop.f32.mrb[0].mxu0
    %v2793 = vadd.f32 0.0, %v2792
    %v2794 = vpop.f32.mrb[0].mxu0
    %v2795 = vpop.f32.mrb[0].mxu0
    %v2796 = vadd.f32 0.0, %v2795
    %v2797 = vpop.f32.mrb[0].mxu0
    %2798 = vmatprep.mubr.bf16.mxu0 0
    %2799 = vmatmul.mubr.bf16.gmra.mrb[0].mxu0 %v162
    %v2800 = vpop.f32.mrb[0].mxu0
    %v2801 = vadd.f32 0.0, %v2800
    %v2802 = vpop.f32.mrb[0].mxu0
    %v2803 = vpop.f32.mrb[0].mxu0
    %v2804 = vadd.f32 0.0, %v2803
    %v2805 = vpop.f32.mrb[0].mxu0
    %2806 = vmatprep.mubr.bf16.mxu0 0
    %2807 = vmatmul.mubr.bf16.gmra.mrb[0].mxu0 %v163
    %v2808 = vpop.f32.mrb[0].mxu0
    %v2809 = vadd.f32 0.0, %v2808
    %v2810 = vpop.f32.mrb[0].mxu0
    %v2811 = vpop.f32.mrb[0].mxu0
    %v2812 = vadd.f32 0.0, %v2811
    %v2813 = vpop.f32.mrb[0].mxu0
    %2814 = vmatprep.mubr.bf16.mxu0 0
    %2815 = vmatmul.mubr.bf16.gmra.mrb[0].mxu0 %v164
    %v2816 = vpop.f32.mrb[0].mxu0
    %v2817 = vadd.f32 0.0, %v2816
    %v2818 = vpop.f32.mrb[0].mxu0
    %v2819 = vpop.f32.mrb[0].mxu0
    %v2820 = vadd.f32 0.0, %v2819
    %v2821 = vpop.f32.mrb[0].mxu0
    %2822 = vmatprep.mubr.bf16.mxu0 0
    %2823 = vmatmul.mubr.bf16.gmra.mrb[0].mxu0 %v165
    %v2824 = vpop.f32.mrb[0].mxu0
    %v2825 = vadd.f32 0.0, %v2824
    %v2826 = vpop.f32.mrb[0].mxu0
    %v2827 = vpop.f32.mrb[0].mxu0
    %v2828 = vadd.f32 0.0, %v2827
    %v2829 = vpop.f32.mrb[0].mxu0
    %2830 = vmatprep.mubr.bf16.mxu0 0
    %2831 = vmatmul.mubr.bf16.gmra.mrb[0].mxu0 %v166
    %v2832 = vpop.f32.mrb[0].mxu0
    %v2833 = vadd.f32 0.0, %v2832
    %v2834 = vpop.f32.mrb[0].mxu0
    %v2835 = vpop.f32.mrb[0].mxu0
    %v2836 = vadd.f32 0.0, %v2835
    %v2837 = vpop.f32.mrb[0].mxu0
    %2838 = vmatprep.mubr.bf16.mxu0 0
    %2839 = vmatmul.mubr.bf16.gmra.mrb[0].mxu0 %v167
    %v2840 = vpop.f32.mrb[0].mxu0
    %v2841 = vadd.f32 0.0, %v2840
    %v2842 = vpop.f32.mrb[0].mxu0
    %v2843 = vpop.f32.mrb[0].mxu0
    %v2844 = vadd.f32 0.0, %v2843
    %v2845 = vpop.f32.mrb[0].mxu0
    %2846 = vmatprep.mubr.bf16.mxu0 0
    %2847 = vmatmul.mubr.bf16.gmra.mrb[0].mxu0 %v168
    %v2848 = vpop.f32.mrb[0].mxu0
    %v2849 = vadd.f32 0.0, %v2848
    %v2850 = vpop.f32.mrb[0].mxu0
    %v2851 = vpop.f32.mrb[0].mxu0
    %v2852 = vadd.f32 0.0, %v2851
    %v2853 = vpop.f32.mrb[0].mxu0
    %2854 = vmatprep.mubr.bf16.mxu0 0
    %2855 = vmatmul.mubr.bf16.gmra.mrb[0].mxu0 %v169
    %v2856 = vpop.f32.mrb[0].mxu0
    %v2857 = vadd.f32 0.0, %v2856
    %v2858 = vpop.f32.mrb[0].mxu0
    %v2859 = vpop.f32.mrb[0].mxu0
    %v2860 = vadd.f32 0.0, %v2859
    %v2861 = vpop.f32.mrb[0].mxu0
    %2862 = vmatprep.mubr.bf16.mxu0 0
    %2863 = vmatmul.mubr.bf16.gmra.mrb[0].mxu0 %v170
    %v2864 = vpop.f32.mrb[0].mxu0
    %v2865 = vadd.f32 0.0, %v2864
    %v2866 = vpop.f32.mrb[0].mxu0
    %v2867 = vpop.f32.mrb[0].mxu0
    %v2868 = vadd.f32 0.0, %v2867
    %v2869 = vpop.f32.mrb[0].mxu0
    %2870 = vmatprep.mubr.bf16.mxu0 0
    %2871 = vmatmul.mubr.bf16.gmra.mrb[0].mxu0 %v171
    %v2872 = vpop.f32.mrb[0].mxu0
    %v2873 = vadd.f32 0.0, %v2872
    %v2874 = vpop.f32.mrb[0].mxu0
    %v2875 = vpop.f32.mrb[0].mxu0
    %v2876 = vadd.f32 0.0, %v2875
    %v2877 = vpop.f32.mrb[0].mxu0
    %2878 = vmatprep.mubr.bf16.mxu0 0
    %2879 = vmatmul.mubr.bf16.gmra.mrb[0].mxu0 %v172
    %v2880 = vpop.f32.mrb[0].mxu0
    %v2881 = vadd.f32 0.0, %v2880
    %v2882 = vpop.f32.mrb[0].mxu0
    %v2883 = vpop.f32.mrb[0].mxu0
    %v2884 = vadd.f32 0.0, %v2883
    %v2885 = vpop.f32.mrb[0].mxu0
    %2886 = vmatprep.mubr.bf16.mxu0 0
    %2887 = vmatmul.mubr.bf16.gmra.mrb[0].mxu0 %v173
    %v2888 = vpop.f32.mrb[0].mxu0
    %v2889 = vadd.f32 0.0, %v2888
    %v2890 = vpop.f32.mrb[0].mxu0
    %v2891 = vpop.f32.mrb[0].mxu0
    %v2892 = vadd.f32 0.0, %v2891
    %v2893 = vpop.f32.mrb[0].mxu0
    %2894 = vmatprep.mubr.bf16.mxu0 0
    %2895 = vmatmul.mubr.bf16.gmra.mrb[0].mxu0 %v174
    %v2896 = vpop.f32.mrb[0].mxu0
    %v2897 = vadd.f32 0.0, %v2896
    %v2898 = vpop.f32.mrb[0].mxu0
    %v2899 = vpop.f32.mrb[0].mxu0
    %v2900 = vadd.f32 0.0, %v2899
    %v2901 = vpop.f32.mrb[0].mxu0
    %2902 = vmatprep.mubr.bf16.mxu0 0
    %2903 = vmatmul.mubr.bf16.gmra.mrb[0].mxu0 %v175
    %v2904 = vpop.f32.mrb[0].mxu0
    %v2905 = vadd.f32 0.0, %v2904
    %v2906 = vpop.f32.mrb[0].mxu0
    %v2907 = vpop.f32.mrb[0].mxu0
    %v2908 = vadd.f32 0.0, %v2907
    %v2909 = vpop.f32.mrb[0].mxu0
    %2910 = vmatprep.mubr.bf16.mxu0 0
    %2911 = vmatmul.mubr.bf16.gmra.mrb[0].mxu0 %v176
    %v2912 = vpop.f32.mrb[0].mxu0
    %v2913 = vadd.f32 0.0, %v2912
    %v2914 = vpop.f32.mrb[0].mxu0
    %v2915 = vpop.f32.mrb[0].mxu0
    %v2916 = vadd.f32 0.0, %v2915
    %v2917 = vpop.f32.mrb[0].mxu0
    %2918 = vdwg.mxu0
    %v2919 = vld [vmem:[#allocation2 + $0x10] sm:$0xff]
    %v2920 = vld [vmem:[#allocation2 + $0x28] sm:$0xff]
    %v2921 = vld [vmem:[#allocation2 + $0x40] sm:$0xff]
    %v2922 = vld [vmem:[#allocation2 + $0x58] sm:$0xff]
    %v2923 = vld [vmem:[#allocation2 + $0x70] sm:$0xff]
    %v2924 = vld [vmem:[#allocation2 + $0x88] sm:$0xff]
    %v2925 = vld [vmem:[#allocation2 + $0xa0] sm:$0xff]
    %v2926 = vld [vmem:[#allocation2 + $0xb8] sm:$0xff]
    %v2927 = vld [vmem:[#allocation2 + $0xd0] sm:$0xff]
    %v2928 = vld [vmem:[#allocation2 + $0xe8] sm:$0xff]
    %v2929 = vld [vmem:[#allocation2 + $0x100] sm:$0xff]
    %v2930 = vld [vmem:[#allocation2 + $0x118] sm:$0xff]
    %v2931 = vld [vmem:[#allocation2 + $0x130] sm:$0xff]
    %v2932 = vld [vmem:[#allocation2 + $0x148] sm:$0xff]
    %v2933 = vld [vmem:[#allocation2 + $0x160] sm:$0xff]
    %v2934 = vld [vmem:[#allocation2 + $0x178] sm:$0xff]
    %v2935 = vld [vmem:[#allocation2 + $0x190] sm:$0xff]
    %v2936 = vld [vmem:[#allocation2 + $0x1a8] sm:$0xff]
    %v2937 = vld [vmem:[#allocation2 + $0x1c0] sm:$0xff]
    %v2938 = vld [vmem:[#allocation2 + $0x1d8] sm:$0xff]
    %v2939 = vld [vmem:[#allocation2 + $0x1f0] sm:$0xff]
    %v2940 = vld [vmem:[#allocation2 + $0x208] sm:$0xff]
    %v2941 = vld [vmem:[#allocation2 + $0x220] sm:$0xff]
    %v2942 = vld [vmem:[#allocation2 + $0x238] sm:$0xff]
    %v2943 = vld [vmem:[#allocation2 + $0x250] sm:$0xff]
    %v2944 = vld [vmem:[#allocation2 + $0x268] sm:$0xff]
    %v2945 = vld [vmem:[#allocation2 + $0x280] sm:$0xff]
    %v2946 = vld [vmem:[#allocation2 + $0x298] sm:$0xff]
    %v2947 = vld [vmem:[#allocation2 + $0x2b0] sm:$0xff]
    %v2948 = vld [vmem:[#allocation2 + $0x2c8] sm:$0xff]
    %v2949 = vld [vmem:[#allocation2 + $0x2e0] sm:$0xff]
    %v2950 = vld [vmem:[#allocation2 + $0x2f8] sm:$0x1f]
    %vm2983 = vcmask 1044480
    %v2984 = vrot.slane %v2793, 3
    %v2985 = vrot.slane %v2796, 3
    %v2986 = vsel %vm2983, %v2984, %v2985
    %v2987 = vrot.slane %v2801, 3
    %v2988 = vsel %vm2983, %v2985, %v2987
    %v2989 = vrot.slane %v2804, 3
    %v2990 = vsel %vm2983, %v2987, %v2989
    %v2991 = vrot.slane %v2809, 3
    %v2992 = vsel %vm2983, %v2989, %v2991
    %v2993 = vrot.slane %v2812, 3
    %v2994 = vsel %vm2983, %v2991, %v2993
    %v2995 = vrot.slane %v2817, 3
    %v2996 = vsel %vm2983, %v2993, %v2995
    %v2997 = vrot.slane %v2820, 3
    %v2998 = vsel %vm2983, %v2995, %v2997
    %v2999 = vrot.slane %v2825, 3
    %v3000 = vsel %vm2983, %v2997, %v2999
    %v3001 = vrot.slane %v2828, 3
    %v3002 = vsel %vm2983, %v2999, %v3001
    %v3003 = vrot.slane %v2833, 3
    %v3004 = vsel %vm2983, %v3001, %v3003
    %v3005 = vrot.slane %v2836, 3
    %v3006 = vsel %vm2983, %v3003, %v3005
    %v3007 = vrot.slane %v2841, 3
    %v3008 = vsel %vm2983, %v3005, %v3007
    %v3009 = vrot.slane %v2844, 3
    %v3010 = vsel %vm2983, %v3007, %v3009
    %v3011 = vrot.slane %v2849, 3
    %v3012 = vsel %vm2983, %v3009, %v3011
    %v3013 = vrot.slane %v2852, 3
    %v3014 = vsel %vm2983, %v3011, %v3013
    %v3015 = vrot.slane %v2857, 3
    %v3016 = vsel %vm2983, %v3013, %v3015
    %v3017 = vrot.slane %v2860, 3
    %v3018 = vsel %vm2983, %v3015, %v3017
    %v3019 = vrot.slane %v2865, 3
    %v3020 = vsel %vm2983, %v3017, %v3019
    %v3021 = vrot.slane %v2868, 3
    %v3022 = vsel %vm2983, %v3019, %v3021
    %v3023 = vrot.slane %v2873, 3
    %v3024 = vsel %vm2983, %v3021, %v3023
    %v3025 = vrot.slane %v2876, 3
    %v3026 = vsel %vm2983, %v3023, %v3025
    %v3027 = vrot.slane %v2881, 3
    %v3028 = vsel %vm2983, %v3025, %v3027
    %v3029 = vrot.slane %v2884, 3
    %v3030 = vsel %vm2983, %v3027, %v3029
    %v3031 = vrot.slane %v2889, 3
    %v3032 = vsel %vm2983, %v3029, %v3031
    %v3033 = vrot.slane %v2892, 3
    %v3034 = vsel %vm2983, %v3031, %v3033
    %v3035 = vrot.slane %v2897, 3
    %v3036 = vsel %vm2983, %v3033, %v3035
    %v3037 = vrot.slane %v2900, 3
    %v3038 = vsel %vm2983, %v3035, %v3037
    %v3039 = vrot.slane %v2905, 3
    %v3040 = vsel %vm2983, %v3037, %v3039
    %v3041 = vrot.slane %v2908, 3
    %v3042 = vsel %vm2983, %v3039, %v3041
    %v3043 = vrot.slane %v2913, 3
    %v3044 = vsel %vm2983, %v3041, %v3043
    %v3045 = vrot.slane %v2916, 3
    %v3046 = vsel %vm2983, %v3043, %v3045
    %v3079 = vadd.f32 %v2919, %v2986
    %v3080 = vadd.f32 %v2920, %v2988
    %v3081 = vadd.f32 %v2921, %v2990
    %v3082 = vadd.f32 %v2922, %v2992
    %v3083 = vadd.f32 %v2923, %v2994
    %v3084 = vadd.f32 %v2924, %v2996
    %v3085 = vadd.f32 %v2925, %v2998
    %v3086 = vadd.f32 %v2926, %v3000
    %v3087 = vadd.f32 %v2927, %v3002
    %v3088 = vadd.f32 %v2928, %v3004
    %v3089 = vadd.f32 %v2929, %v3006
    %v3090 = vadd.f32 %v2930, %v3008
    %v3091 = vadd.f32 %v2931, %v3010
    %v3092 = vadd.f32 %v2932, %v3012
    %v3093 = vadd.f32 %v2933, %v3014
    %v3094 = vadd.f32 %v2934, %v3016
    %v3095 = vadd.f32 %v2935, %v3018
    %v3096 = vadd.f32 %v2936, %v3020
    %v3097 = vadd.f32 %v2937, %v3022
    %v3098 = vadd.f32 %v2938, %v3024
    %v3099 = vadd.f32 %v2939, %v3026
    %v3100 = vadd.f32 %v2940, %v3028
    %v3101 = vadd.f32 %v2941, %v3030
    %v3102 = vadd.f32 %v2942, %v3032
    %v3103 = vadd.f32 %v2943, %v3034
    %v3104 = vadd.f32 %v2944, %v3036
    %v3105 = vadd.f32 %v2945, %v3038
    %v3106 = vadd.f32 %v2946, %v3040
    %v3107 = vadd.f32 %v2947, %v3042
    %v3108 = vadd.f32 %v2948, %v3044
    %v3109 = vadd.f32 %v2949, %v3046
    %v3110 = vadd.f32 %v2950, %v3045
    %3111 = vst [vmem:[#allocation2 + $0x10] sm:$0xff] %v3079
    %3112 = vst [vmem:[#allocation2 + $0x28] sm:$0xff] %v3080
    %3113 = vst [vmem:[#allocation2 + $0x40] sm:$0xff] %v3081
    %3114 = vst [vmem:[#allocation2 + $0x58] sm:$0xff] %v3082
    %3115 = vst [vmem:[#allocation2 + $0x70] sm:$0xff] %v3083
    %3116 = vst [vmem:[#allocation2 + $0x88] sm:$0xff] %v3084
    %3117 = vst [vmem:[#allocation2 + $0xa0] sm:$0xff] %v3085
    %3118 = vst [vmem:[#allocation2 + $0xb8] sm:$0xff] %v3086
    %3119 = vst [vmem:[#allocation2 + $0xd0] sm:$0xff] %v3087
    %3120 = vst [vmem:[#allocation2 + $0xe8] sm:$0xff] %v3088
    %3121 = vst [vmem:[#allocation2 + $0x100] sm:$0xff] %v3089
    %3122 = vst [vmem:[#allocation2 + $0x118] sm:$0xff] %v3090
    %3123 = vst [vmem:[#allocation2 + $0x130] sm:$0xff] %v3091
    %3124 = vst [vmem:[#allocation2 + $0x148] sm:$0xff] %v3092
    %3125 = vst [vmem:[#allocation2 + $0x160] sm:$0xff] %v3093
    %3126 = vst [vmem:[#allocation2 + $0x178] sm:$0xff] %v3094
    %3127 = vst [vmem:[#allocation2 + $0x190] sm:$0xff] %v3095
    %3128 = vst [vmem:[#allocation2 + $0x1a8] sm:$0xff] %v3096
    %3129 = vst [vmem:[#allocation2 + $0x1c0] sm:$0xff] %v3097
    %3130 = vst [vmem:[#allocation2 + $0x1d8] sm:$0xff] %v3098
    %3131 = vst [vmem:[#allocation2 + $0x1f0] sm:$0xff] %v3099
    %3132 = vst [vmem:[#allocation2 + $0x208] sm:$0xff] %v3100
    %3133 = vst [vmem:[#allocation2 + $0x220] sm:$0xff] %v3101
    %3134 = vst [vmem:[#allocation2 + $0x238] sm:$0xff] %v3102
    %3135 = vst [vmem:[#allocation2 + $0x250] sm:$0xff] %v3103
    %3136 = vst [vmem:[#allocation2 + $0x268] sm:$0xff] %v3104
    %3137 = vst [vmem:[#allocation2 + $0x280] sm:$0xff] %v3105
    %3138 = vst [vmem:[#allocation2 + $0x298] sm:$0xff] %v3106
    %3139 = vst [vmem:[#allocation2 + $0x2b0] sm:$0xff] %v3107
    %3140 = vst [vmem:[#allocation2 + $0x2c8] sm:$0xff] %v3108
    %3141 = vst [vmem:[#allocation2 + $0x2e0] sm:$0xff] %v3109
    %3142 = vst [vmem:[#allocation2 + $0x2f8] sm:$0x1f] %v3110
    %v3143 = vld [vmem:[#allocation2] sm:$0xff]
    %v3144 = vld [vmem:[#allocation2 + $0x8] sm:$0xff]
    %v3145 = vld [vmem:[#allocation2 + $0x10] sm:$0xff]
    %v3146 = vld [vmem:[#allocation2 + $0x18] sm:$0xff]
    %v3147 = vld [vmem:[#allocation2 + $0x20] sm:$0xff]
    %v3148 = vld [vmem:[#allocation2 + $0x28] sm:$0xff]
    %v3149 = vld [vmem:[#allocation2 + $0x30] sm:$0xff]
    %v3150 = vld [vmem:[#allocation2 + $0x38] sm:$0xff]
    %v3151 = vld [vmem:[#allocation2 + $0x40] sm:$0xff]
    %v3152 = vld [vmem:[#allocation2 + $0x48] sm:$0xff]
    %v3153 = vld [vmem:[#allocation2 + $0x50] sm:$0xff]
    %v3154 = vld [vmem:[#allocation2 + $0x58] sm:$0xff]
    %v3155 = vld [vmem:[#allocation2 + $0x60] sm:$0xff]
    %v3156 = vld [vmem:[#allocation2 + $0x68] sm:$0xff]
    %v3157 = vld [vmem:[#allocation2 + $0x70] sm:$0xff]
    %v3158 = vld [vmem:[#allocation2 + $0x78] sm:$0xff]
    %v3159 = vld [vmem:[#allocation2 + $0x80] sm:$0xff]
    %v3160 = vld [vmem:[#allocation2 + $0x88] sm:$0xff]
    %v3161 = vld [vmem:[#allocation2 + $0x90] sm:$0xff]
    %v3162 = vld [vmem:[#allocation2 + $0x98] sm:$0xff]
    %v3163 = vld [vmem:[#allocation2 + $0xa0] sm:$0xff]
    %v3164 = vld [vmem:[#allocation2 + $0xa8] sm:$0xff]
    %v3165 = vld [vmem:[#allocation2 + $0xb0] sm:$0xff]
    %v3166 = vld [vmem:[#allocation2 + $0xb8] sm:$0xff]
    %v3167 = vld [vmem:[#allocation2 + $0xc0] sm:$0xff]
    %v3168 = vld [vmem:[#allocation2 + $0xc8] sm:$0xff]
    %v3169 = vld [vmem:[#allocation2 + $0xd0] sm:$0xff]
    %v3170 = vld [vmem:[#allocation2 + $0xd8] sm:$0xff]
    %v3171 = vld [vmem:[#allocation2 + $0xe0] sm:$0xff]
    %v3172 = vld [vmem:[#allocation2 + $0xe8] sm:$0xff]
    %v3173 = vld [vmem:[#allocation2 + $0xf0] sm:$0xff]
    %v3174 = vld [vmem:[#allocation2 + $0xf8] sm:$0xff]
    %v3175 = vld [vmem:[#allocation2 + $0x100] sm:$0xff]
    %v3176 = vld [vmem:[#allocation2 + $0x108] sm:$0xff]
    %v3177 = vld [vmem:[#allocation2 + $0x110] sm:$0xff]
    %v3178 = vld [vmem:[#allocation2 + $0x118] sm:$0xff]
    %v3179 = vld [vmem:[#allocation2 + $0x120] sm:$0xff]
    %v3180 = vld [vmem:[#allocation2 + $0x128] sm:$0xff]
    %v3181 = vld [vmem:[#allocation2 + $0x130] sm:$0xff]
    %v3182 = vld [vmem:[#allocation2 + $0x138] sm:$0xff]
    %v3183 = vld [vmem:[#allocation2 + $0x140] sm:$0xff]
    %v3184 = vld [vmem:[#allocation2 + $0x148] sm:$0xff]
    %v3185 = vld [vmem:[#allocation2 + $0x150] sm:$0xff]
    %v3186 = vld [vmem:[#allocation2 + $0x158] sm:$0xff]
    %v3187 = vld [vmem:[#allocation2 + $0x160] sm:$0xff]
    %v3188 = vld [vmem:[#allocation2 + $0x168] sm:$0xff]
    %v3189 = vld [vmem:[#allocation2 + $0x170] sm:$0xff]
    %v3190 = vld [vmem:[#allocation2 + $0x178] sm:$0xff]
    %v3191 = vld [vmem:[#allocation2 + $0x180] sm:$0xff]
    %v3192 = vld [vmem:[#allocation2 + $0x188] sm:$0xff]
    %v3193 = vld [vmem:[#allocation2 + $0x190] sm:$0xff]
    %v3194 = vld [vmem:[#allocation2 + $0x198] sm:$0xff]
    %v3195 = vld [vmem:[#allocation2 + $0x1a0] sm:$0xff]
    %v3196 = vld [vmem:[#allocation2 + $0x1a8] sm:$0xff]
    %v3197 = vld [vmem:[#allocation2 + $0x1b0] sm:$0xff]
    %v3198 = vld [vmem:[#allocation2 + $0x1b8] sm:$0xff]
    %v3199 = vld [vmem:[#allocation2 + $0x1c0] sm:$0xff]
    %v3200 = vld [vmem:[#allocation2 + $0x1c8] sm:$0xff]
    %v3201 = vld [vmem:[#allocation2 + $0x1d0] sm:$0xff]
    %v3202 = vld [vmem:[#allocation2 + $0x1d8] sm:$0xff]
    %v3203 = vld [vmem:[#allocation2 + $0x1e0] sm:$0xff]
    %v3204 = vld [vmem:[#allocation2 + $0x1e8] sm:$0xff]
    %v3205 = vld [vmem:[#allocation2 + $0x1f0] sm:$0xff]
    %v3206 = vld [vmem:[#allocation2 + $0x1f8] sm:$0xff]
    %v3207 = vld [vmem:[#allocation2 + $0x200] sm:$0xff]
    %v3208 = vld [vmem:[#allocation2 + $0x208] sm:$0xff]
    %v3209 = vld [vmem:[#allocation2 + $0x210] sm:$0xff]
    %v3210 = vld [vmem:[#allocation2 + $0x218] sm:$0xff]
    %v3211 = vld [vmem:[#allocation2 + $0x220] sm:$0xff]
    %v3212 = vld [vmem:[#allocation2 + $0x228] sm:$0xff]
    %v3213 = vld [vmem:[#allocation2 + $0x230] sm:$0xff]
    %v3214 = vld [vmem:[#allocation2 + $0x238] sm:$0xff]
    %v3215 = vld [vmem:[#allocation2 + $0x240] sm:$0xff]
    %v3216 = vld [vmem:[#allocation2 + $0x248] sm:$0xff]
    %v3217 = vld [vmem:[#allocation2 + $0x250] sm:$0xff]
    %v3218 = vld [vmem:[#allocation2 + $0x258] sm:$0xff]
    %v3219 = vld [vmem:[#allocation2 + $0x260] sm:$0xff]
    %v3220 = vld [vmem:[#allocation2 + $0x268] sm:$0xff]
    %v3221 = vld [vmem:[#allocation2 + $0x270] sm:$0xff]
    %v3222 = vld [vmem:[#allocation2 + $0x278] sm:$0xff]
    %v3223 = vld [vmem:[#allocation2 + $0x280] sm:$0xff]
    %v3224 = vld [vmem:[#allocation2 + $0x288] sm:$0xff]
    %v3225 = vld [vmem:[#allocation2 + $0x290] sm:$0xff]
    %v3226 = vld [vmem:[#allocation2 + $0x298] sm:$0xff]
    %v3227 = vld [vmem:[#allocation2 + $0x2a0] sm:$0xff]
    %v3228 = vld [vmem:[#allocation2 + $0x2a8] sm:$0xff]
    %v3229 = vld [vmem:[#allocation2 + $0x2b0] sm:$0xff]
    %v3230 = vld [vmem:[#allocation2 + $0x2b8] sm:$0xff]
    %v3231 = vld [vmem:[#allocation2 + $0x2c0] sm:$0xff]
    %v3232 = vld [vmem:[#allocation2 + $0x2c8] sm:$0xff]
    %v3233 = vld [vmem:[#allocation2 + $0x2d0] sm:$0xff]
    %v3234 = vld [vmem:[#allocation2 + $0x2d8] sm:$0xff]
    %v3235 = vld [vmem:[#allocation2 + $0x2e0] sm:$0xff]
    %v3236 = vld [vmem:[#allocation2 + $0x2e8] sm:$0xff]
    %v3237 = vld [vmem:[#allocation2 + $0x2f0] sm:$0xff]
    %v3238 = vld [vmem:[#allocation2 + $0x2f8] sm:$0xff]
    %v3239 = vld [vmem:[%s3] sm:$0xff]
    %v3240 = vld [vmem:[%s3 + $0x8] sm:$0xff]
    %v3241 = vld [vmem:[%s3 + $0x10] sm:$0xff]
    %v3242 = vld [vmem:[%s3 + $0x18] sm:$0xff]
    %v3243 = vld [vmem:[%s3 + $0x20] sm:$0xff]
    %v3244 = vld [vmem:[%s3 + $0x28] sm:$0xff]
    %v3245 = vadd.f32 %v3143, %v3239
    %v3246 = vadd.f32 %v3144, %v3240
    %v3247 = vadd.f32 %v3145, %v3241
    %v3248 = vadd.f32 %v3146, %v3242
    %v3249 = vadd.f32 %v3147, %v3243
    %v3250 = vadd.f32 %v3148, %v3244
    %v3251 = vadd.f32 %v3149, %v3239
    %v3252 = vadd.f32 %v3150, %v3240
    %v3253 = vadd.f32 %v3151, %v3241
    %v3254 = vadd.f32 %v3152, %v3242
    %v3255 = vadd.f32 %v3153, %v3243
    %v3256 = vadd.f32 %v3154, %v3244
    %v3257 = vadd.f32 %v3155, %v3239
    %v3258 = vadd.f32 %v3156, %v3240
    %v3259 = vadd.f32 %v3157, %v3241
    %v3260 = vadd.f32 %v3158, %v3242
    %v3261 = vadd.f32 %v3159, %v3243
    %v3262 = vadd.f32 %v3160, %v3244
    %v3263 = vadd.f32 %v3161, %v3239
    %v3264 = vadd.f32 %v3162, %v3240
    %v3265 = vadd.f32 %v3163, %v3241
    %v3266 = vadd.f32 %v3164, %v3242
    %v3267 = vadd.f32 %v3165, %v3243
    %v3268 = vadd.f32 %v3166, %v3244
    %v3269 = vadd.f32 %v3167, %v3239
    %v3270 = vadd.f32 %v3168, %v3240
    %v3271 = vadd.f32 %v3169, %v3241
    %v3272 = vadd.f32 %v3170, %v3242
    %v3273 = vadd.f32 %v3171, %v3243
    %v3274 = vadd.f32 %v3172, %v3244
    %v3275 = vadd.f32 %v3173, %v3239
    %v3276 = vadd.f32 %v3174, %v3240
    %v3277 = vadd.f32 %v3175, %v3241
    %v3278 = vadd.f32 %v3176, %v3242
    %v3279 = vadd.f32 %v3177, %v3243
    %v3280 = vadd.f32 %v3178, %v3244
    %v3281 = vadd.f32 %v3179, %v3239
    %v3282 = vadd.f32 %v3180, %v3240
    %v3283 = vadd.f32 %v3181, %v3241
    %v3284 = vadd.f32 %v3182, %v3242
    %v3285 = vadd.f32 %v3183, %v3243
    %v3286 = vadd.f32 %v3184, %v3244
    %v3287 = vadd.f32 %v3185, %v3239
    %v3288 = vadd.f32 %v3186, %v3240
    %v3289 = vadd.f32 %v3187, %v3241
    %v3290 = vadd.f32 %v3188, %v3242
    %v3291 = vadd.f32 %v3189, %v3243
    %v3292 = vadd.f32 %v3190, %v3244
    %v3293 = vadd.f32 %v3191, %v3239
    %v3294 = vadd.f32 %v3192, %v3240
    %v3295 = vadd.f32 %v3193, %v3241
    %v3296 = vadd.f32 %v3194, %v3242
    %v3297 = vadd.f32 %v3195, %v3243
    %v3298 = vadd.f32 %v3196, %v3244
    %v3299 = vadd.f32 %v3197, %v3239
    %v3300 = vadd.f32 %v3198, %v3240
    %v3301 = vadd.f32 %v3199, %v3241
    %v3302 = vadd.f32 %v3200, %v3242
    %v3303 = vadd.f32 %v3201, %v3243
    %v3304 = vadd.f32 %v3202, %v3244
    %v3305 = vadd.f32 %v3203, %v3239
    %v3306 = vadd.f32 %v3204, %v3240
    %v3307 = vadd.f32 %v3205, %v3241
    %v3308 = vadd.f32 %v3206, %v3242
    %v3309 = vadd.f32 %v3207, %v3243
    %v3310 = vadd.f32 %v3208, %v3244
    %v3311 = vadd.f32 %v3209, %v3239
    %v3312 = vadd.f32 %v3210, %v3240
    %v3313 = vadd.f32 %v3211, %v3241
    %v3314 = vadd.f32 %v3212, %v3242
    %v3315 = vadd.f32 %v3213, %v3243
    %v3316 = vadd.f32 %v3214, %v3244
    %v3317 = vadd.f32 %v3215, %v3239
    %v3318 = vadd.f32 %v3216, %v3240
    %v3319 = vadd.f32 %v3217, %v3241
    %v3320 = vadd.f32 %v3218, %v3242
    %v3321 = vadd.f32 %v3219, %v3243
    %v3322 = vadd.f32 %v3220, %v3244
    %v3323 = vadd.f32 %v3221, %v3239
    %v3324 = vadd.f32 %v3222, %v3240
    %v3325 = vadd.f32 %v3223, %v3241
    %v3326 = vadd.f32 %v3224, %v3242
    %v3327 = vadd.f32 %v3225, %v3243
    %v3328 = vadd.f32 %v3226, %v3244
    %v3329 = vadd.f32 %v3227, %v3239
    %v3330 = vadd.f32 %v3228, %v3240
    %v3331 = vadd.f32 %v3229, %v3241
    %v3332 = vadd.f32 %v3230, %v3242
    %v3333 = vadd.f32 %v3231, %v3243
    %v3334 = vadd.f32 %v3232, %v3244
    %v3335 = vadd.f32 %v3233, %v3239
    %v3336 = vadd.f32 %v3234, %v3240
    %v3337 = vadd.f32 %v3235, %v3241
    %v3338 = vadd.f32 %v3236, %v3242
    %v3339 = vadd.f32 %v3237, %v3243
    %v3340 = vadd.f32 %v3238, %v3244
    %v3341 = vmax.f32 %v3245, %v3248
    %v3342 = vrot.slane %v3341, 4
    %v3343 = vmax.f32 %v3341, %v3342
    %v3344 = vrot.slane %v3343, 2
    %v3345 = vmax.f32 %v3343, %v3344
    %v3346 = vrot.slane %v3345, 1
    %v3347 = vmax.f32 %v3345, %v3346
    %v3348 = vmax.f32 %v3246, %v3249
    %v3349 = vrot.slane %v3348, 4
    %v3350 = vmax.f32 %v3348, %v3349
    %v3351 = vrot.slane %v3350, 2
    %v3352 = vmax.f32 %v3350, %v3351
    %v3353 = vrot.slane %v3352, 1
    %v3354 = vmax.f32 %v3352, %v3353
    %v3355 = vmax.f32 %v3247, %v3250
    %v3356 = vrot.slane %v3355, 4
    %v3357 = vmax.f32 %v3355, %v3356
    %v3358 = vrot.slane %v3357, 2
    %v3359 = vmax.f32 %v3357, %v3358
    %v3360 = vrot.slane %v3359, 1
    %v3361 = vmax.f32 %v3359, %v3360
    %v3362 = vmax.f32 %v3251, %v3254
    %v3363 = vrot.slane %v3362, 4
    %v3364 = vmax.f32 %v3362, %v3363
    %v3365 = vrot.slane %v3364, 2
    %v3366 = vmax.f32 %v3364, %v3365
    %v3367 = vrot.slane %v3366, 1
    %v3368 = vmax.f32 %v3366, %v3367
    %v3369 = vmax.f32 %v3252, %v3255
    %v3370 = vrot.slane %v3369, 4
    %v3371 = vmax.f32 %v3369, %v3370
    %v3372 = vrot.slane %v3371, 2
    %v3373 = vmax.f32 %v3371, %v3372
    %v3374 = vrot.slane %v3373, 1
    %v3375 = vmax.f32 %v3373, %v3374
    %v3376 = vmax.f32 %v3253, %v3256
    %v3377 = vrot.slane %v3376, 4
    %v3378 = vmax.f32 %v3376, %v3377
    %v3379 = vrot.slane %v3378, 2
    %v3380 = vmax.f32 %v3378, %v3379
    %v3381 = vrot.slane %v3380, 1
    %v3382 = vmax.f32 %v3380, %v3381
    %v3383 = vmax.f32 %v3257, %v3260
    %v3384 = vrot.slane %v3383, 4
    %v3385 = vmax.f32 %v3383, %v3384
    %v3386 = vrot.slane %v3385, 2
    %v3387 = vmax.f32 %v3385, %v3386
    %v3388 = vrot.slane %v3387, 1
    %v3389 = vmax.f32 %v3387, %v3388
    %v3390 = vmax.f32 %v3258, %v3261
    %v3391 = vrot.slane %v3390, 4
    %v3392 = vmax.f32 %v3390, %v3391
    %v3393 = vrot.slane %v3392, 2
    %v3394 = vmax.f32 %v3392, %v3393
    %v3395 = vrot.slane %v3394, 1
    %v3396 = vmax.f32 %v3394, %v3395
    %v3397 = vmax.f32 %v3259, %v3262
    %v3398 = vrot.slane %v3397, 4
    %v3399 = vmax.f32 %v3397, %v3398
    %v3400 = vrot.slane %v3399, 2
    %v3401 = vmax.f32 %v3399, %v3400
    %v3402 = vrot.slane %v3401, 1
    %v3403 = vmax.f32 %v3401, %v3402
    %v3404 = vmax.f32 %v3263, %v3266
    %v3405 = vrot.slane %v3404, 4
    %v3406 = vmax.f32 %v3404, %v3405
    %v3407 = vrot.slane %v3406, 2
    %v3408 = vmax.f32 %v3406, %v3407
    %v3409 = vrot.slane %v3408, 1
    %v3410 = vmax.f32 %v3408, %v3409
    %v3411 = vmax.f32 %v3264, %v3267
    %v3412 = vrot.slane %v3411, 4
    %v3413 = vmax.f32 %v3411, %v3412
    %v3414 = vrot.slane %v3413, 2
    %v3415 = vmax.f32 %v3413, %v3414
    %v3416 = vrot.slane %v3415, 1
    %v3417 = vmax.f32 %v3415, %v3416
    %v3418 = vmax.f32 %v3265, %v3268
    %v3419 = vrot.slane %v3418, 4
    %v3420 = vmax.f32 %v3418, %v3419
    %v3421 = vrot.slane %v3420, 2
    %v3422 = vmax.f32 %v3420, %v3421
    %v3423 = vrot.slane %v3422, 1
    %v3424 = vmax.f32 %v3422, %v3423
    %v3425 = vmax.f32 %v3269, %v3272
    %v3426 = vrot.slane %v3425, 4
    %v3427 = vmax.f32 %v3425, %v3426
    %v3428 = vrot.slane %v3427, 2
    %v3429 = vmax.f32 %v3427, %v3428
    %v3430 = vrot.slane %v3429, 1
    %v3431 = vmax.f32 %v3429, %v3430
    %v3432 = vmax.f32 %v3270, %v3273
    %v3433 = vrot.slane %v3432, 4
    %v3434 = vmax.f32 %v3432, %v3433
    %v3435 = vrot.slane %v3434, 2
    %v3436 = vmax.f32 %v3434, %v3435
    %v3437 = vrot.slane %v3436, 1
    %v3438 = vmax.f32 %v3436, %v3437
    %v3439 = vmax.f32 %v3271, %v3274
    %v3440 = vrot.slane %v3439, 4
    %v3441 = vmax.f32 %v3439, %v3440
    %v3442 = vrot.slane %v3441, 2
    %v3443 = vmax.f32 %v3441, %v3442
    %v3444 = vrot.slane %v3443, 1
    %v3445 = vmax.f32 %v3443, %v3444
    %v3446 = vmax.f32 %v3275, %v3278
    %v3447 = vrot.slane %v3446, 4
    %v3448 = vmax.f32 %v3446, %v3447
    %v3449 = vrot.slane %v3448, 2
    %v3450 = vmax.f32 %v3448, %v3449
    %v3451 = vrot.slane %v3450, 1
    %v3452 = vmax.f32 %v3450, %v3451
    %v3453 = vmax.f32 %v3276, %v3279
    %v3454 = vrot.slane %v3453, 4
    %v3455 = vmax.f32 %v3453, %v3454
    %v3456 = vrot.slane %v3455, 2
    %v3457 = vmax.f32 %v3455, %v3456
    %v3458 = vrot.slane %v3457, 1
    %v3459 = vmax.f32 %v3457, %v3458
    %v3460 = vmax.f32 %v3277, %v3280
    %v3461 = vrot.slane %v3460, 4
    %v3462 = vmax.f32 %v3460, %v3461
    %v3463 = vrot.slane %v3462, 2
    %v3464 = vmax.f32 %v3462, %v3463
    %v3465 = vrot.slane %v3464, 1
    %v3466 = vmax.f32 %v3464, %v3465
    %v3467 = vmax.f32 %v3281, %v3284
    %v3468 = vrot.slane %v3467, 4
    %v3469 = vmax.f32 %v3467, %v3468
    %v3470 = vrot.slane %v3469, 2
    %v3471 = vmax.f32 %v3469, %v3470
    %v3472 = vrot.slane %v3471, 1
    %v3473 = vmax.f32 %v3471, %v3472
    %v3474 = vmax.f32 %v3282, %v3285
    %v3475 = vrot.slane %v3474, 4
    %v3476 = vmax.f32 %v3474, %v3475
    %v3477 = vrot.slane %v3476, 2
    %v3478 = vmax.f32 %v3476, %v3477
    %v3479 = vrot.slane %v3478, 1
    %v3480 = vmax.f32 %v3478, %v3479
    %v3481 = vmax.f32 %v3283, %v3286
    %v3482 = vrot.slane %v3481, 4
    %v3483 = vmax.f32 %v3481, %v3482
    %v3484 = vrot.slane %v3483, 2
    %v3485 = vmax.f32 %v3483, %v3484
    %v3486 = vrot.slane %v3485, 1
    %v3487 = vmax.f32 %v3485, %v3486
    %v3488 = vmax.f32 %v3287, %v3290
    %v3489 = vrot.slane %v3488, 4
    %v3490 = vmax.f32 %v3488, %v3489
    %v3491 = vrot.slane %v3490, 2
    %v3492 = vmax.f32 %v3490, %v3491
    %v3493 = vrot.slane %v3492, 1
    %v3494 = vmax.f32 %v3492, %v3493
    %v3495 = vmax.f32 %v3288, %v3291
    %v3496 = vrot.slane %v3495, 4
    %v3497 = vmax.f32 %v3495, %v3496
    %v3498 = vrot.slane %v3497, 2
    %v3499 = vmax.f32 %v3497, %v3498
    %v3500 = vrot.slane %v3499, 1
    %v3501 = vmax.f32 %v3499, %v3500
    %v3502 = vmax.f32 %v3289, %v3292
    %v3503 = vrot.slane %v3502, 4
    %v3504 = vmax.f32 %v3502, %v3503
    %v3505 = vrot.slane %v3504, 2
    %v3506 = vmax.f32 %v3504, %v3505
    %v3507 = vrot.slane %v3506, 1
    %v3508 = vmax.f32 %v3506, %v3507
    %v3509 = vmax.f32 %v3293, %v3296
    %v3510 = vrot.slane %v3509, 4
    %v3511 = vmax.f32 %v3509, %v3510
    %v3512 = vrot.slane %v3511, 2
    %v3513 = vmax.f32 %v3511, %v3512
    %v3514 = vrot.slane %v3513, 1
    %v3515 = vmax.f32 %v3513, %v3514
    %v3516 = vmax.f32 %v3294, %v3297
    %v3517 = vrot.slane %v3516, 4
    %v3518 = vmax.f32 %v3516, %v3517
    %v3519 = vrot.slane %v3518, 2
    %v3520 = vmax.f32 %v3518, %v3519
    %v3521 = vrot.slane %v3520, 1
    %v3522 = vmax.f32 %v3520, %v3521
    %v3523 = vmax.f32 %v3295, %v3298
    %v3524 = vrot.slane %v3523, 4
    %v3525 = vmax.f32 %v3523, %v3524
    %v3526 = vrot.slane %v3525, 2
    %v3527 = vmax.f32 %v3525, %v3526
    %v3528 = vrot.slane %v3527, 1
    %v3529 = vmax.f32 %v3527, %v3528
    %v3530 = vmax.f32 %v3299, %v3302
    %v3531 = vrot.slane %v3530, 4
    %v3532 = vmax.f32 %v3530, %v3531
    %v3533 = vrot.slane %v3532, 2
    %v3534 = vmax.f32 %v3532, %v3533
    %v3535 = vrot.slane %v3534, 1
    %v3536 = vmax.f32 %v3534, %v3535
    %v3537 = vmax.f32 %v3300, %v3303
    %v3538 = vrot.slane %v3537, 4
    %v3539 = vmax.f32 %v3537, %v3538
    %v3540 = vrot.slane %v3539, 2
    %v3541 = vmax.f32 %v3539, %v3540
    %v3542 = vrot.slane %v3541, 1
    %v3543 = vmax.f32 %v3541, %v3542
    %v3544 = vmax.f32 %v3301, %v3304
    %v3545 = vrot.slane %v3544, 4
    %v3546 = vmax.f32 %v3544, %v3545
    %v3547 = vrot.slane %v3546, 2
    %v3548 = vmax.f32 %v3546, %v3547
    %v3549 = vrot.slane %v3548, 1
    %v3550 = vmax.f32 %v3548, %v3549
    %v3551 = vmax.f32 %v3305, %v3308
    %v3552 = vrot.slane %v3551, 4
    %v3553 = vmax.f32 %v3551, %v3552
    %v3554 = vrot.slane %v3553, 2
    %v3555 = vmax.f32 %v3553, %v3554
    %v3556 = vrot.slane %v3555, 1
    %v3557 = vmax.f32 %v3555, %v3556
    %v3558 = vmax.f32 %v3306, %v3309
    %v3559 = vrot.slane %v3558, 4
    %v3560 = vmax.f32 %v3558, %v3559
    %v3561 = vrot.slane %v3560, 2
    %v3562 = vmax.f32 %v3560, %v3561
    %v3563 = vrot.slane %v3562, 1
    %v3564 = vmax.f32 %v3562, %v3563
    %v3565 = vmax.f32 %v3307, %v3310
    %v3566 = vrot.slane %v3565, 4
    %v3567 = vmax.f32 %v3565, %v3566
    %v3568 = vrot.slane %v3567, 2
    %v3569 = vmax.f32 %v3567, %v3568
    %v3570 = vrot.slane %v3569, 1
    %v3571 = vmax.f32 %v3569, %v3570
    %v3572 = vmax.f32 %v3311, %v3314
    %v3573 = vrot.slane %v3572, 4
    %v3574 = vmax.f32 %v3572, %v3573
    %v3575 = vrot.slane %v3574, 2
    %v3576 = vmax.f32 %v3574, %v3575
    %v3577 = vrot.slane %v3576, 1
    %v3578 = vmax.f32 %v3576, %v3577
    %v3579 = vmax.f32 %v3312, %v3315
    %v3580 = vrot.slane %v3579, 4
    %v3581 = vmax.f32 %v3579, %v3580
    %v3582 = vrot.slane %v3581, 2
    %v3583 = vmax.f32 %v3581, %v3582
    %v3584 = vrot.slane %v3583, 1
    %v3585 = vmax.f32 %v3583, %v3584
    %v3586 = vmax.f32 %v3313, %v3316
    %v3587 = vrot.slane %v3586, 4
    %v3588 = vmax.f32 %v3586, %v3587
    %v3589 = vrot.slane %v3588, 2
    %v3590 = vmax.f32 %v3588, %v3589
    %v3591 = vrot.slane %v3590, 1
    %v3592 = vmax.f32 %v3590, %v3591
    %v3593 = vmax.f32 %v3317, %v3320
    %v3594 = vrot.slane %v3593, 4
    %v3595 = vmax.f32 %v3593, %v3594
    %v3596 = vrot.slane %v3595, 2
    %v3597 = vmax.f32 %v3595, %v3596
    %v3598 = vrot.slane %v3597, 1
    %v3599 = vmax.f32 %v3597, %v3598
    %v3600 = vmax.f32 %v3318, %v3321
    %v3601 = vrot.slane %v3600, 4
    %v3602 = vmax.f32 %v3600, %v3601
    %v3603 = vrot.slane %v3602, 2
    %v3604 = vmax.f32 %v3602, %v3603
    %v3605 = vrot.slane %v3604, 1
    %v3606 = vmax.f32 %v3604, %v3605
    %v3607 = vmax.f32 %v3319, %v3322
    %v3608 = vrot.slane %v3607, 4
    %v3609 = vmax.f32 %v3607, %v3608
    %v3610 = vrot.slane %v3609, 2
    %v3611 = vmax.f32 %v3609, %v3610
    %v3612 = vrot.slane %v3611, 1
    %v3613 = vmax.f32 %v3611, %v3612
    %v3614 = vmax.f32 %v3323, %v3326
    %v3615 = vrot.slane %v3614, 4
    %v3616 = vmax.f32 %v3614, %v3615
    %v3617 = vrot.slane %v3616, 2
    %v3618 = vmax.f32 %v3616, %v3617
    %v3619 = vrot.slane %v3618, 1
    %v3620 = vmax.f32 %v3618, %v3619
    %v3621 = vmax.f32 %v3324, %v3327
    %v3622 = vrot.slane %v3621, 4
    %v3623 = vmax.f32 %v3621, %v3622
    %v3624 = vrot.slane %v3623, 2
    %v3625 = vmax.f32 %v3623, %v3624
    %v3626 = vrot.slane %v3625, 1
    %v3627 = vmax.f32 %v3625, %v3626
    %v3628 = vmax.f32 %v3325, %v3328
    %v3629 = vrot.slane %v3628, 4
    %v3630 = vmax.f32 %v3628, %v3629
    %v3631 = vrot.slane %v3630, 2
    %v3632 = vmax.f32 %v3630, %v3631
    %v3633 = vrot.slane %v3632, 1
    %v3634 = vmax.f32 %v3632, %v3633
    %v3635 = vmax.f32 %v3329, %v3332
    %v3636 = vrot.slane %v3635, 4
    %v3637 = vmax.f32 %v3635, %v3636
    %v3638 = vrot.slane %v3637, 2
    %v3639 = vmax.f32 %v3637, %v3638
    %v3640 = vrot.slane %v3639, 1
    %v3641 = vmax.f32 %v3639, %v3640
    %v3642 = vmax.f32 %v3330, %v3333
    %v3643 = vrot.slane %v3642, 4
    %v3644 = vmax.f32 %v3642, %v3643
    %v3645 = vrot.slane %v3644, 2
    %v3646 = vmax.f32 %v3644, %v3645
    %v3647 = vrot.slane %v3646, 1
    %v3648 = vmax.f32 %v3646, %v3647
    %v3649 = vmax.f32 %v3331, %v3334
    %v3650 = vrot.slane %v3649, 4
    %v3651 = vmax.f32 %v3649, %v3650
    %v3652 = vrot.slane %v3651, 2
    %v3653 = vmax.f32 %v3651, %v3652
    %v3654 = vrot.slane %v3653, 1
    %v3655 = vmax.f32 %v3653, %v3654
    %v3656 = vmax.f32 %v3335, %v3338
    %v3657 = vrot.slane %v3656, 4
    %v3658 = vmax.f32 %v3656, %v3657
    %v3659 = vrot.slane %v3658, 2
    %v3660 = vmax.f32 %v3658, %v3659
    %v3661 = vrot.slane %v3660, 1
    %v3662 = vmax.f32 %v3660, %v3661
    %v3663 = vmax.f32 %v3336, %v3339
    %v3664 = vrot.slane %v3663, 4
    %v3665 = vmax.f32 %v3663, %v3664
    %v3666 = vrot.slane %v3665, 2
    %v3667 = vmax.f32 %v3665, %v3666
    %v3668 = vrot.slane %v3667, 1
    %v3669 = vmax.f32 %v3667, %v3668
    %v3670 = vmax.f32 %v3337, %v3340
    %v3671 = vrot.slane %v3670, 4
    %v3672 = vmax.f32 %v3670, %v3671
    %v3673 = vrot.slane %v3672, 2
    %v3674 = vmax.f32 %v3672, %v3673
    %v3675 = vrot.slane %v3674, 1
    %v3676 = vmax.f32 %v3674, %v3675
    %v3677 = vld [vmem:[%s2] sm:$0x7]
    %v3679 = vlaneseq
    %v3680 = vshrl.u32 %v3679, 7
    %v3681 = vsub.s32 0, %v3680
    %v3682 = vrot.slane %v3677, %v3681
    %v3683 = vlaneseq
    %v3684 = vshrl.u32 %v3683, 7
    %v3685 = vsub.s32 1, %v3684
    %v3686 = vrot.slane %v3677, %v3685
    %v3687 = vlaneseq
    %v3688 = vshrl.u32 %v3687, 7
    %v3689 = vsub.s32 2, %v3688
    %v3690 = vrot.slane %v3677, %v3689
    %v3694 = vadd.f32 %v3347, %v3682
    %v3695 = vadd.f32 %v3354, %v3686
    %v3696 = vadd.f32 %v3361, %v3690
    %v3697 = vadd.f32 %v3368, %v3682
    %v3698 = vadd.f32 %v3375, %v3686
    %v3699 = vadd.f32 %v3382, %v3690
    %v3700 = vadd.f32 %v3389, %v3682
    %v3701 = vadd.f32 %v3396, %v3686
    %v3702 = vadd.f32 %v3403, %v3690
    %v3703 = vadd.f32 %v3410, %v3682
    %v3704 = vadd.f32 %v3417, %v3686
    %v3705 = vadd.f32 %v3424, %v3690
    %v3706 = vadd.f32 %v3431, %v3682
    %v3707 = vadd.f32 %v3438, %v3686
    %v3708 = vadd.f32 %v3445, %v3690
    %v3709 = vadd.f32 %v3452, %v3682
    %v3710 = vadd.f32 %v3459, %v3686
    %v3711 = vadd.f32 %v3466, %v3690
    %v3712 = vadd.f32 %v3473, %v3682
    %v3713 = vadd.f32 %v3480, %v3686
    %v3714 = vadd.f32 %v3487, %v3690
    %v3715 = vadd.f32 %v3494, %v3682
    %v3716 = vadd.f32 %v3501, %v3686
    %v3717 = vadd.f32 %v3508, %v3690
    %v3718 = vadd.f32 %v3515, %v3682
    %v3719 = vadd.f32 %v3522, %v3686
    %v3720 = vadd.f32 %v3529, %v3690
    %v3721 = vadd.f32 %v3536, %v3682
    %v3722 = vadd.f32 %v3543, %v3686
    %v3723 = vadd.f32 %v3550, %v3690
    %v3724 = vadd.f32 %v3557, %v3682
    %v3725 = vadd.f32 %v3564, %v3686
    %v3726 = vadd.f32 %v3571, %v3690
    %v3727 = vadd.f32 %v3578, %v3682
    %v3728 = vadd.f32 %v3585, %v3686
    %v3729 = vadd.f32 %v3592, %v3690
    %v3730 = vadd.f32 %v3599, %v3682
    %v3731 = vadd.f32 %v3606, %v3686
    %v3732 = vadd.f32 %v3613, %v3690
    %v3733 = vadd.f32 %v3620, %v3682
    %v3734 = vadd.f32 %v3627, %v3686
    %v3735 = vadd.f32 %v3634, %v3690
    %v3736 = vadd.f32 %v3641, %v3682
    %v3737 = vadd.f32 %v3648, %v3686
    %v3738 = vadd.f32 %v3655, %v3690
    %v3739 = vadd.f32 %v3662, %v3682
    %v3740 = vadd.f32 %v3669, %v3686
    %v3741 = vadd.f32 %v3676, %v3690
    %v3742 = vmax.f32 %v3694, 0.0
    %v3743 = vmax.f32 %v3695, 0.0
    %v3744 = vmax.f32 %v3696, 0.0
    %v3745 = vmax.f32 %v3697, 0.0
    %v3746 = vmax.f32 %v3698, 0.0
    %v3747 = vmax.f32 %v3699, 0.0
    %v3748 = vmax.f32 %v3700, 0.0
    %v3749 = vmax.f32 %v3701, 0.0
    %v3750 = vmax.f32 %v3702, 0.0
    %v3751 = vmax.f32 %v3703, 0.0
    %v3752 = vmax.f32 %v3704, 0.0
    %v3753 = vmax.f32 %v3705, 0.0
    %v3754 = vmax.f32 %v3706, 0.0
    %v3755 = vmax.f32 %v3707, 0.0
    %v3756 = vmax.f32 %v3708, 0.0
    %v3757 = vmax.f32 %v3709, 0.0
    %v3758 = vmax.f32 %v3710, 0.0
    %v3759 = vmax.f32 %v3711, 0.0
    %v3760 = vmax.f32 %v3712, 0.0
    %v3761 = vmax.f32 %v3713, 0.0
    %v3762 = vmax.f32 %v3714, 0.0
    %v3763 = vmax.f32 %v3715, 0.0
    %v3764 = vmax.f32 %v3716, 0.0
    %v3765 = vmax.f32 %v3717, 0.0
    %v3766 = vmax.f32 %v3718, 0.0
    %v3767 = vmax.f32 %v3719, 0.0
    %v3768 = vmax.f32 %v3720, 0.0
    %v3769 = vmax.f32 %v3721, 0.0
    %v3770 = vmax.f32 %v3722, 0.0
    %v3771 = vmax.f32 %v3723, 0.0
    %v3772 = vmax.f32 %v3724, 0.0
    %v3773 = vmax.f32 %v3725, 0.0
    %v3774 = vmax.f32 %v3726, 0.0
    %v3775 = vmax.f32 %v3727, 0.0
    %v3776 = vmax.f32 %v3728, 0.0
    %v3777 = vmax.f32 %v3729, 0.0
    %v3778 = vmax.f32 %v3730, 0.0
    %v3779 = vmax.f32 %v3731, 0.0
    %v3780 = vmax.f32 %v3732, 0.0
    %v3781 = vmax.f32 %v3733, 0.0
    %v3782 = vmax.f32 %v3734, 0.0
    %v3783 = vmax.f32 %v3735, 0.0
    %v3784 = vmax.f32 %v3736, 0.0
    %v3785 = vmax.f32 %v3737, 0.0
    %v3786 = vmax.f32 %v3738, 0.0
    %v3787 = vmax.f32 %v3739, 0.0
    %v3788 = vmax.f32 %v3740, 0.0
    %v3789 = vmax.f32 %v3741, 0.0
    %v3838 = vrot.slane %v3745, 7
    %vm3839 = vcmask 1041409
    %v3840 = vsel %vm3839, %v3838, %v3742
    %v3841 = vrot.slane %v3748, 6
    %vm3842 = vcmask 1042434
    %v3843 = vsel %vm3842, %v3841, %v3840
    %v3844 = vrot.slane %v3751, 5
    %vm3845 = vcmask 1043459
    %v3846 = vsel %vm3845, %v3844, %v3843
    %v3847 = vrot.slane %v3754, 4
    %vm3848 = vcmask 1044484
    %v3849 = vsel %vm3848, %v3847, %v3846
    %v3850 = vrot.slane %v3757, 3
    %vm3851 = vcmask 1045509
    %v3852 = vsel %vm3851, %v3850, %v3849
    %v3853 = vrot.slane %v3760, 2
    %vm3854 = vcmask 1046534
    %v3855 = vsel %vm3854, %v3853, %v3852
    %v3856 = vrot.slane %v3763, 1
    %vm3857 = vcmask 1047559
    %v3858 = vsel %vm3857, %v3856, %v3855
    %v3859 = vrot.slane %v3746, 7
    %v3860 = vsel %vm3839, %v3859, %v3743
    %v3861 = vrot.slane %v3749, 6
    %v3862 = vsel %vm3842, %v3861, %v3860
    %v3863 = vrot.slane %v3752, 5
    %v3864 = vsel %vm3845, %v3863, %v3862
    %v3865 = vrot.slane %v3755, 4
    %v3866 = vsel %vm3848, %v3865, %v3864
    %v3867 = vrot.slane %v3758, 3
    %v3868 = vsel %vm3851, %v3867, %v3866
    %v3869 = vrot.slane %v3761, 2
    %v3870 = vsel %vm3854, %v3869, %v3868
    %v3871 = vrot.slane %v3764, 1
    %v3872 = vsel %vm3857, %v3871, %v3870
    %v3873 = vrot.slane %v3747, 7
    %v3874 = vsel %vm3839, %v3873, %v3744
    %v3875 = vrot.slane %v3750, 6
    %v3876 = vsel %vm3842, %v3875, %v3874
    %v3877 = vrot.slane %v3753, 5
    %v3878 = vsel %vm3845, %v3877, %v3876
    %v3879 = vrot.slane %v3756, 4
    %v3880 = vsel %vm3848, %v3879, %v3878
    %v3881 = vrot.slane %v3759, 3
    %v3882 = vsel %vm3851, %v3881, %v3880
    %v3883 = vrot.slane %v3762, 2
    %v3884 = vsel %vm3854, %v3883, %v3882
    %v3885 = vrot.slane %v3765, 1
    %v3886 = vsel %vm3857, %v3885, %v3884
    %v3887 = vrot.slane %v3769, 7
    %v3888 = vsel %vm3839, %v3887, %v3766
    %v3889 = vrot.slane %v3772, 6
    %v3890 = vsel %vm3842, %v3889, %v3888
    %v3891 = vrot.slane %v3775, 5
    %v3892 = vsel %vm3845, %v3891, %v3890
    %v3893 = vrot.slane %v3778, 4
    %v3894 = vsel %vm3848, %v3893, %v3892
    %v3895 = vrot.slane %v3781, 3
    %v3896 = vsel %vm3851, %v3895, %v3894
    %v3897 = vrot.slane %v3784, 2
    %v3898 = vsel %vm3854, %v3897, %v3896
    %v3899 = vrot.slane %v3787, 1
    %v3900 = vsel %vm3857, %v3899, %v3898
    %v3901 = vrot.slane %v3770, 7
    %v3902 = vsel %vm3839, %v3901, %v3767
    %v3903 = vrot.slane %v3773, 6
    %v3904 = vsel %vm3842, %v3903, %v3902
    %v3905 = vrot.slane %v3776, 5
    %v3906 = vsel %vm3845, %v3905, %v3904
    %v3907 = vrot.slane %v3779, 4
    %v3908 = vsel %vm3848, %v3907, %v3906
    %v3909 = vrot.slane %v3782, 3
    %v3910 = vsel %vm3851, %v3909, %v3908
    %v3911 = vrot.slane %v3785, 2
    %v3912 = vsel %vm3854, %v3911, %v3910
    %v3913 = vrot.slane %v3788, 1
    %v3914 = vsel %vm3857, %v3913, %v3912
    %v3915 = vrot.slane %v3771, 7
    %v3916 = vsel %vm3839, %v3915, %v3768
    %v3917 = vrot.slane %v3774, 6
    %v3918 = vsel %vm3842, %v3917, %v3916
    %v3919 = vrot.slane %v3777, 5
    %v3920 = vsel %vm3845, %v3919, %v3918
    %v3921 = vrot.slane %v3780, 4
    %v3922 = vsel %vm3848, %v3921, %v3920
    %v3923 = vrot.slane %v3783, 3
    %v3924 = vsel %vm3851, %v3923, %v3922
    %v3925 = vrot.slane %v3786, 2
    %v3926 = vsel %vm3854, %v3925, %v3924
    %v3927 = vrot.slane %v3789, 1
    %v3928 = vsel %vm3857, %v3927, %v3926
    %3935 = vst [vmem:[#allocation6] sm:$0xff] %v3858
    %3936 = vst [vmem:[#allocation6 + $0x8] sm:$0xff] %v3872
    %3937 = vst [vmem:[#allocation6 + $0x10] sm:$0xff] %v3886
    %3938 = vst [vmem:[#allocation6 + $0x18] sm:$0xff] %v3900
    %3939 = vst [vmem:[#allocation6 + $0x20] sm:$0xff] %v3914
    %3940 = vst [vmem:[#allocation6 + $0x28] sm:$0xff] %v3928
    // Predicated region
    $region22: #{fwd.1} parent=1 // pred_check
      _
    $region23: #{fwd.1} parent=1 // pred_check_branch
      %3942 = sbr.rel (0) target = $region25
    $region24: #{fwd.1} parent=1 // pred_region
      %s3944 = ssub.s32 768, 768
      %3945 = vsyncadd [#allocation5], %s3944
      %s3946 = sshll.u32 [#allocation6], 4
      %s3947 = int_to_ptr.vmem [resolvable:$true] %s3946
      %3952 = dma.vmem_to_hbm [thread:$0]  %s3947, 768, %s4, [#allocation5], 384, 384, 24
    $region25: #{fwd.1} parent=1 // pred_fallthru
      _
    // Predicated region
    $region26: #{fwd.1} parent=1 // pred_check
      _
    $region27: #{fwd.1} parent=1 // pred_check_branch
      %3954 = sbr.rel (0) target = $region29
    $region28: #{fwd.1} parent=1 // pred_region
      %3955 = dma.done [#allocation5], 768
    $region29: #{fwd.1} parent=1 // pred_fallthru
      _
    %3956 = vsyncpa [#allocation4], 1
    %3957 = vsyncpa [#allocation5], 1

</llo_original>
